<compile_context>
chip_gen: v5e
topology: v5e:2x2
jax: 0.10.0
libtpu: 0.0.40
codegen_flags: <defaults>
</compile_context>

<pallas_src>
import functools
import math

import jax
import jax.numpy as jnp
from jax.experimental import pallas as pl
from jax.experimental.pallas import tpu as pltpu

# ----------------------------- model dims -----------------------------------
B = 2                  # batch
C, H, W = 4, 16, 16    # image channels / spatial (NCHW)
L = 8                  # number of style latents
D = 32                 # latent dim
S = 8                  # reference-set size (s has shape (B, S, D))
ITERS = 3

IMG_FLAT = C * H * W   # 1024
LAT_FLAT = L * D       # 256


# ----------------------- fused Pallas kernel ---------------------------------
def _fused_resetgan_kernel(xy_ref, s_ref, ew_ref, eb_ref, dw_ref, db_ref,
                           avg_ref, y_out_ref, z_out_ref, *, iters, batch):
    """Entire ReSetGAN forward (all refinement iterations) in one kernel.

    VMEM-resident shapes:
      xy_ref  : (2B, IMG_FLAT)        f32   [x ; y0] flattened, batched encode
      s_ref   : (B, S, D)             f32   reference set
      ew_ref  : (IMG_FLAT, LAT_FLAT)  bf16  encoder weight (lane-dense)
      eb_ref  : (1, LAT_FLAT)         f32   encoder bias
      dw_ref  : (LAT_FLAT, IMG_FLAT)  bf16  decoder weight (lane-dense)
      db_ref  : (1, IMG_FLAT)         f32   decoder bias
      avg_ref : (1, LAT_FLAT)         f32   latent_avg, flattened
      y_out_ref : (iters, B, IMG_FLAT) f32  generated images (lane-dense)
      z_out_ref : (iters, B, LAT_FLAT) f32  z_Y latents (lane-dense)
    """
    inv_sqrt_d = 1.0 / math.sqrt(D)

    ew = ew_ref[...]            # (IMG_FLAT, LAT_FLAT) bf16
    eb = eb_ref[...]            # (1, LAT_FLAT)  f32
    dw = dw_ref[...]            # (LAT_FLAT, IMG_FLAT) bf16
    db = db_ref[...]            # (1, IMG_FLAT)  f32
    avg = avg_ref[...]          # (1, LAT_FLAT)  f32
    s = s_ref[...]              # (B, S, D)      f32

    def encode(img_f32):
        # Single fused MXU matmul: (M, 1024) x (1024, 256), bf16 in / f32 acc.
        return jnp.dot(img_f32.astype(jnp.bfloat16), ew,
                       preferred_element_type=jnp.float32) + eb

    def split_slots(flat):
        # (B, L*D) -> (B, L, D) via static lane slices + second-minor stack
        # (avoids a lane-splitting reshape inside the kernel).
        return jnp.stack([flat[:, l * D:(l + 1) * D] for l in range(L)], axis=1)

    def merge_slots(x3d):
        # (B, L, D) -> (B, L*D) via static selects + minor-dim concat.
        return jnp.concatenate([x3d[:, l, :] for l in range(L)], axis=-1)

    # Batched initial encodes: one M=2B matmul for encoder(x) and encoder(y0).
    enc_xy = encode(xy_ref[...])            # (2B, LAT_FLAT)
    enc_x = enc_xy[:batch]                  # (B, LAT_FLAT)   encoder(x)
    enc_prev = enc_xy[batch:]               # (B, LAT_FLAT)   encoder(y0)

    # z_X = latent_avg + encoder(x)
    z_X_flat = avg + enc_x                  # (B, LAT_FLAT)
    z_prev = avg                            # (1, LAT_FLAT) -> broadcasts

    for t in range(iters):
        # z_Y = Z_Y[-1] + encoder(Y[-1])
        z_Y = z_prev + enc_prev             # (B, LAT_FLAT)
        z_out_ref[t] = z_Y                  # one lane-dense (B, 256) store

        # set_model cross-attention: two batched MXU contractions + softmax.
        z_Y_3d = split_slots(z_Y)                                   # (B, L, D)
        scores = jnp.einsum("bld,bsd->bls", z_Y_3d, s,
                            preferred_element_type=jnp.float32) * inv_sqrt_d
        m = jnp.max(scores, axis=-1, keepdims=True)
        e = jnp.exp(scores - m)
        den = jnp.sum(e, axis=-1, keepdims=True)
        p = e * pl.reciprocal(den, approx=True)                     # EUP slot
        attn = jnp.einsum("bls,bsd->bld", p, s,
                          preferred_element_type=jnp.float32)       # (B, L, D)

        # W = attn + z_X, then single fused decoder matmul + tanh.
        w_lat = merge_slots(attn) + z_X_flat                        # (B, LAT_FLAT)
        y = jnp.tanh(jnp.dot(w_lat.astype(jnp.bfloat16), dw,
                             preferred_element_type=jnp.float32) + db)
        y_out_ref[t] = y                    # one lane-dense (B, 1024) store

        if t + 1 < iters:
            enc_prev = encode(y)
            z_prev = z_Y


# ------------------------------ module glue ----------------------------------
def to_images(x):
    # TODO(synk): restyle's `to_images` (resize / channel concat) is not defined
    # in the reference module; treated as identity here.
    return x


def prepare_params(params):
    """One-time weight relayout / bf16 cast (hoisted out of the per-call path)."""
    return {
        "enc_w": params["encoder"]["w"].astype(jnp.bfloat16),        # (1024, 256)
        "enc_b": params["encoder"]["b"].astype(jnp.float32),         # (1, 256)
        "dec_w": params["decoder"]["w"].astype(jnp.bfloat16),        # (256, 1024)
        "dec_b": params["decoder"]["b"].astype(jnp.float32),         # (1, 1024)
        "avg_flat": params["latent_avg"].reshape(1, LAT_FLAT).astype(jnp.float32),
        "latent_avg": params["latent_avg"].astype(jnp.float32),      # (L, D)
    }


@functools.partial(jax.jit, static_argnames=("iters",))
def resetgan_forward(prep, x, s, y0, iters=ITERS):
    """Single-fused-kernel ReSetGAN forward.  Returns (Y, Z_Y) like the module."""
    bsz = x.shape[0]
    x_flat = to_images(x).reshape(bsz, IMG_FLAT)
    y0_flat = to_images(y0).reshape(bsz, IMG_FLAT)
    xy = jnp.concatenate([x_flat, y0_flat], axis=0)                  # (2B, 1024)

    y_out, z_out = pl.pallas_call(
        functools.partial(_fused_resetgan_kernel, iters=iters, batch=bsz),
        out_shape=(
            jax.ShapeDtypeStruct((iters, bsz, IMG_FLAT), jnp.float32),
            jax.ShapeDtypeStruct((iters, bsz, LAT_FLAT), jnp.float32),
        ),
        in_specs=[pl.BlockSpec(memory_space=pltpu.MemorySpace.VMEM)] * 7,
        out_specs=(
            pl.BlockSpec(memory_space=pltpu.MemorySpace.VMEM),
            pl.BlockSpec(memory_space=pltpu.MemorySpace.VMEM),
        ),
    )(xy, s, prep["enc_w"], prep["enc_b"], prep["dec_w"], prep["dec_b"],
      prep["avg_flat"])

    Y = [y0] + [y_out[t].reshape(bsz, C, H, W) for t in range(iters)]
    z0 = jnp.broadcast_to(prep["latent_avg"][None], (bsz, L, D))
    Z_Y = [z0] + [z_out[t].reshape(bsz, L, D) for t in range(iters)]
    return Y, Z_Y


# --------------------------- pure-JAX reference -------------------------------
def _ref_linear(x, w, b, activation=None):
    out = x @ w + b
    return jnp.tanh(out) if activation == "tanh" else out


def _ref_set_model(s, z_Y, z_X):
    scores = jnp.einsum("bld,bsd->bls", z_Y, s) / jnp.sqrt(jnp.float32(D))
    p = jax.nn.softmax(scores, axis=-1)
    return jnp.einsum("bls,bsd->bld", p, s) + z_X


def resetgan_forward_ref(params, x, s, y0, iters=ITERS):
    bsz = x.shape[0]
    Y = [y0]
    z0 = jnp.broadcast_to(params["latent_avg"][None], (bsz, L, D))
    z_X = z0 + _ref_linear(
        x.reshape(bsz, IMG_FLAT), params["encoder"]["w"], params["encoder"]["b"]
    ).reshape(bsz, L, D)
    Z_Y = [z0]
    for _ in range(1, iters + 1):
        z_Y = Z_Y[-1] + _ref_linear(
            Y[-1].reshape(bsz, IMG_FLAT), params["encoder"]["w"], params["encoder"]["b"]
        ).reshape(bsz, L, D)
        Wlat = _ref_set_model(s, z_Y, z_X)
        y = _ref_linear(
            Wlat.reshape(bsz, LAT_FLAT), params["decoder"]["w"], params["decoder"]["b"],
            activation="tanh",
        ).reshape(bsz, C, H, W)
        Y.append(y)
        Z_Y.append(z_Y)
    return Y, Z_Y


# --------------------------------- main ---------------------------------------
if __name__ == "__main__":
    key = jax.random.PRNGKey(0)
    k_ew, k_eb, k_dw, k_db, k_avg, k_x, k_s, k_y0 = jax.random.split(key, 8)

    params = {
        "encoder": {
            "w": 0.02 * jax.random.normal(k_ew, (IMG_FLAT, LAT_FLAT), jnp.float32),
            "b": 0.01 * jax.random.normal(k_eb, (1, LAT_FLAT), jnp.float32),
        },
        "decoder": {
            "w": 0.02 * jax.random.normal(k_dw, (LAT_FLAT, IMG_FLAT), jnp.float32),
            "b": 0.01 * jax.random.normal(k_db, (1, IMG_FLAT), jnp.float32),
        },
        "latent_avg": 0.1 * jax.random.normal(k_avg, (L, D), jnp.float32),
    }

    x = jax.random.normal(k_x, (B, C, H, W), jnp.float32)
    s = jax.random.normal(k_s, (B, S, D), jnp.float32)
    y0 = jax.random.normal(k_y0, (B, C, H, W), jnp.float32)

    prep = prepare_params(params)          # one-time relayout / bf16 cast
    Y, Z_Y = resetgan_forward(prep, x, s, y0, iters=ITERS)
    jax.block_until_ready((Y, Z_Y))

    # correctness check against pure-JAX f32 reference (bf16 weights in-kernel)
    Y_ref, Z_Y_ref = resetgan_forward_ref(params, x, s, y0, iters=ITERS)
    for a, b_ in zip(Y[1:], Y_ref[1:]):
        assert jnp.allclose(a, b_, rtol=5e-2, atol=5e-2)
    for a, b_ in zip(Z_Y[1:], Z_Y_ref[1:]):
        assert jnp.allclose(a, b_, rtol=5e-2, atol=5e-2)

    assert len(Y) == ITERS + 1 and len(Z_Y) == ITERS + 1
    assert Y[-1].shape == (B, C, H, W) and Z_Y[-1].shape == (B, L, D)
    print("KERNEL_OK")
</pallas_src>

<mosaic_0001>
module attributes {stable_mosaic.version = 11 : i64} {
  func.func @_fused_resetgan_kernel(%arg0: memref<4x1024xf32, #tpu.memory_space<vmem>>, %arg1: memref<2x8x32xf32, #tpu.memory_space<vmem>>, %arg2: memref<1024x256xbf16, #tpu.memory_space<vmem>>, %arg3: memref<1x256xf32, #tpu.memory_space<vmem>>, %arg4: memref<256x1024xbf16, #tpu.memory_space<vmem>>, %arg5: memref<1x1024xf32, #tpu.memory_space<vmem>>, %arg6: memref<1x256xf32, #tpu.memory_space<vmem>>, %arg7: memref<3x2x1024xf32, #tpu.memory_space<vmem>>, %arg8: memref<3x2x256xf32, #tpu.memory_space<vmem>>) attributes {dimension_semantics = [], scalar_prefetch = 0 : i64, scratch_operands = 0 : i64, tpu.core_type = #tpu.core_type<tc>} {
    %c0 = arith.constant 0 : index
    %c0_0 = arith.constant 0 : index
    %0 = vector.load %arg2[%c0, %c0_0] : memref<1024x256xbf16, #tpu.memory_space<vmem>>, vector<1024x256xbf16>
    %c0_1 = arith.constant 0 : index
    %c0_2 = arith.constant 0 : index
    %1 = vector.load %arg3[%c0_1, %c0_2] : memref<1x256xf32, #tpu.memory_space<vmem>>, vector<1x256xf32>
    %c0_3 = arith.constant 0 : index
    %c0_4 = arith.constant 0 : index
    %2 = vector.load %arg4[%c0_3, %c0_4] : memref<256x1024xbf16, #tpu.memory_space<vmem>>, vector<256x1024xbf16>
    %c0_5 = arith.constant 0 : index
    %c0_6 = arith.constant 0 : index
    %3 = vector.load %arg5[%c0_5, %c0_6] : memref<1x1024xf32, #tpu.memory_space<vmem>>, vector<1x1024xf32>
    %c0_7 = arith.constant 0 : index
    %c0_8 = arith.constant 0 : index
    %4 = vector.load %arg6[%c0_7, %c0_8] : memref<1x256xf32, #tpu.memory_space<vmem>>, vector<1x256xf32>
    %c0_9 = arith.constant 0 : index
    %c0_10 = arith.constant 0 : index
    %c0_11 = arith.constant 0 : index
    %5 = vector.load %arg1[%c0_9, %c0_10, %c0_11] : memref<2x8x32xf32, #tpu.memory_space<vmem>>, vector<2x8x32xf32>
    %c0_12 = arith.constant 0 : index
    %c0_13 = arith.constant 0 : index
    %6 = vector.load %arg0[%c0_12, %c0_13] : memref<4x1024xf32, #tpu.memory_space<vmem>>, vector<4x1024xf32>
    %7 = arith.truncf %6 : vector<4x1024xf32> to vector<4x1024xbf16>
    %cst = arith.constant dense<0.000000e+00> : vector<4x256xf32>
    %8 = tpu.matmul %7, %0, %cst {dimension_numbers = #tpu.dot_dimension_numbers<[1], [0], [0], [1], [0, 0, 1, 1], [], []>} : vector<4x1024xbf16>, vector<1024x256xbf16>, vector<4x256xf32> -> vector<4x256xf32>
    %9 = vector.broadcast %1 : vector<1x256xf32> to vector<4x256xf32>
    %10 = arith.addf %8, %9 : vector<4x256xf32>
    %11 = vector.extract_strided_slice %10 {offsets = [0, 0], sizes = [2, 256], strides = [1, 1]} : vector<4x256xf32> to vector<2x256xf32>
    %12 = vector.extract_strided_slice %10 {offsets = [2, 0], sizes = [2, 256], strides = [1, 1]} : vector<4x256xf32> to vector<2x256xf32>
    %13 = vector.broadcast %4 : vector<1x256xf32> to vector<2x256xf32>
    %14 = arith.addf %13, %11 : vector<2x256xf32>
    %15 = vector.broadcast %4 : vector<1x256xf32> to vector<2x256xf32>
    %16 = arith.addf %15, %12 : vector<2x256xf32>
    %c0_14 = arith.constant 0 : index
    %c0_15 = arith.constant 0 : index
    %c0_16 = arith.constant 0 : index
    %17 = vector.load %arg8[%c0_14, %c0_15, %c0_16] : memref<3x2x256xf32, #tpu.memory_space<vmem>>, vector<1x2x256xf32>
    %18 = vector.shape_cast %17 : vector<1x2x256xf32> to vector<2x256xf32>
    %19 = vector.shape_cast %16 : vector<2x256xf32> to vector<1x2x256xf32>
    tpu.vector_store %arg8[%c0_14, %c0_15, %c0_16], %19 {strides = array<i32>} : memref<3x2x256xf32, #tpu.memory_space<vmem>>, vector<1x2x256xf32>,
    %20 = vector.extract_strided_slice %16 {offsets = [0, 0], sizes = [2, 32], strides = [1, 1]} : vector<2x256xf32> to vector<2x32xf32>
    %21 = vector.extract_strided_slice %16 {offsets = [0, 32], sizes = [2, 32], strides = [1, 1]} : vector<2x256xf32> to vector<2x32xf32>
    %22 = vector.extract_strided_slice %16 {offsets = [0, 64], sizes = [2, 32], strides = [1, 1]} : vector<2x256xf32> to vector<2x32xf32>
    %23 = vector.extract_strided_slice %16 {offsets = [0, 96], sizes = [2, 32], strides = [1, 1]} : vector<2x256xf32> to vector<2x32xf32>
    %24 = vector.extract_strided_slice %16 {offsets = [0, 128], sizes = [2, 32], strides = [1, 1]} : vector<2x256xf32> to vector<2x32xf32>
    %25 = vector.extract_strided_slice %16 {offsets = [0, 160], sizes = [2, 32], strides = [1, 1]} : vector<2x256xf32> to vector<2x32xf32>
    %26 = vector.extract_strided_slice %16 {offsets = [0, 192], sizes = [2, 32], strides = [1, 1]} : vector<2x256xf32> to vector<2x32xf32>
    %27 = vector.extract_strided_slice %16 {offsets = [0, 224], sizes = [2, 32], strides = [1, 1]} : vector<2x256xf32> to vector<2x32xf32>
    %28 = vector.shape_cast %20 : vector<2x32xf32> to vector<2x1x32xf32>
    %29 = vector.shape_cast %21 : vector<2x32xf32> to vector<2x1x32xf32>
    %30 = vector.shape_cast %22 : vector<2x32xf32> to vector<2x1x32xf32>
    %31 = vector.shape_cast %23 : vector<2x32xf32> to vector<2x1x32xf32>
    %32 = vector.shape_cast %24 : vector<2x32xf32> to vector<2x1x32xf32>
    %33 = vector.shape_cast %25 : vector<2x32xf32> to vector<2x1x32xf32>
    %34 = vector.shape_cast %26 : vector<2x32xf32> to vector<2x1x32xf32>
    %35 = vector.shape_cast %27 : vector<2x32xf32> to vector<2x1x32xf32>
    %36 = tpu.concatenate %28, %29, %30, %31, %32, %33, %34, %35 in 1 : vector<2x1x32xf32>, vector<2x1x32xf32>, vector<2x1x32xf32>, vector<2x1x32xf32>, vector<2x1x32xf32>, vector<2x1x32xf32>, vector<2x1x32xf32>, vector<2x1x32xf32> -> vector<2x8x32xf32>
    "tpu.trace_start"() <{level = 10 : i32, message = "bld,bsd->bls"}> : () -> ()
    %cst_17 = arith.constant dense<0.000000e+00> : vector<2x8x8xf32>
    %37 = tpu.matmul %36, %5, %cst_17 {dimension_numbers = #tpu.dot_dimension_numbers<[2], [2], [1], [1], [0, 0, 0, 1, 1, 1], [0], [0]>} : vector<2x8x32xf32>, vector<2x8x32xf32>, vector<2x8x8xf32> -> vector<2x8x8xf32>
    "tpu.trace_stop"() : () -> ()
    %cst_18 = arith.constant 0.176776692 : f32
    %38 = vector.broadcast %cst_18 : f32 to vector<2x8x8xf32>
    %39 = arith.mulf %37, %38 : vector<2x8x8xf32>
    %cst_19 = arith.constant dense<0xFF800000> : vector<2x8xf32>
    %40 = vector.multi_reduction <maximumf>, %39, %cst_19 [2] : vector<2x8x8xf32> to vector<2x8xf32>
    %41 = vector.shape_cast %40 : vector<2x8xf32> to vector<2x8x1xf32>
    %42 = vector.broadcast %41 : vector<2x8x1xf32> to vector<2x8x8xf32>
    %43 = arith.subf %39, %42 : vector<2x8x8xf32>
    %44 = math.exp %43 : vector<2x8x8xf32>
    %cst_20 = arith.constant dense<0.000000e+00> : vector<2x8xf32>
    %45 = vector.multi_reduction <add>, %44, %cst_20 [2] : vector<2x8x8xf32> to vector<2x8xf32>
    %46 = vector.shape_cast %45 : vector<2x8xf32> to vector<2x8x1xf32>
    %47 = tpu.reciprocal %46 {approx = true} : vector<2x8x1xf32> -> vector<2x8x1xf32>
    %48 = vector.broadcast %47 : vector<2x8x1xf32> to vector<2x8x8xf32>
    %49 = arith.mulf %44, %48 : vector<2x8x8xf32>
    "tpu.trace_start"() <{level = 10 : i32, message = "bls,bsd->bld"}> : () -> ()
    %cst_21 = arith.constant dense<0.000000e+00> : vector<2x8x32xf32>
    %50 = tpu.matmul %49, %5, %cst_21 {dimension_numbers = #tpu.dot_dimension_numbers<[2], [1], [1], [2], [0, 0, 0, 1, 1, 2], [0], [0]>} : vector<2x8x8xf32>, vector<2x8x32xf32>, vector<2x8x32xf32> -> vector<2x8x32xf32>
    "tpu.trace_stop"() : () -> ()
    %51 = vector.extract_strided_slice %50 {offsets = [0, 0, 0], sizes = [2, 1, 32], strides = [1, 1, 1]} : vector<2x8x32xf32> to vector<2x1x32xf32>
    %52 = vector.shape_cast %51 : vector<2x1x32xf32> to vector<2x32xf32>
    %53 = vector.extract_strided_slice %50 {offsets = [0, 1, 0], sizes = [2, 1, 32], strides = [1, 1, 1]} : vector<2x8x32xf32> to vector<2x1x32xf32>
    %54 = vector.shape_cast %53 : vector<2x1x32xf32> to vector<2x32xf32>
    %55 = vector.extract_strided_slice %50 {offsets = [0, 2, 0], sizes = [2, 1, 32], strides = [1, 1, 1]} : vector<2x8x32xf32> to vector<2x1x32xf32>
    %56 = vector.shape_cast %55 : vector<2x1x32xf32> to vector<2x32xf32>
    %57 = vector.extract_strided_slice %50 {offsets = [0, 3, 0], sizes = [2, 1, 32], strides = [1, 1, 1]} : vector<2x8x32xf32> to vector<2x1x32xf32>
    %58 = vector.shape_cast %57 : vector<2x1x32xf32> to vector<2x32xf32>
    %59 = vector.extract_strided_slice %50 {offsets = [0, 4, 0], sizes = [2, 1, 32], strides = [1, 1, 1]} : vector<2x8x32xf32> to vector<2x1x32xf32>
    %60 = vector.shape_cast %59 : vector<2x1x32xf32> to vector<2x32xf32>
    %61 = vector.extract_strided_slice %50 {offsets = [0, 5, 0], sizes = [2, 1, 32], strides = [1, 1, 1]} : vector<2x8x32xf32> to vector<2x1x32xf32>
    %62 = vector.shape_cast %61 : vector<2x1x32xf32> to vector<2x32xf32>
    %63 = vector.extract_strided_slice %50 {offsets = [0, 6, 0], sizes = [2, 1, 32], strides = [1, 1, 1]} : vector<2x8x32xf32> to vector<2x1x32xf32>
    %64 = vector.shape_cast %63 : vector<2x1x32xf32> to vector<2x32xf32>
    %65 = vector.extract_strided_slice %50 {offsets = [0, 7, 0], sizes = [2, 1, 32], strides = [1, 1, 1]} : vector<2x8x32xf32> to vector<2x1x32xf32>
    %66 = vector.shape_cast %65 : vector<2x1x32xf32> to vector<2x32xf32>
    %67 = tpu.concatenate %52, %54, %56, %58, %60, %62, %64, %66 in 1 : vector<2x32xf32>, vector<2x32xf32>, vector<2x32xf32>, vector<2x32xf32>, vector<2x32xf32>, vector<2x32xf32>, vector<2x32xf32>, vector<2x32xf32> -> vector<2x256xf32>
    %68 = arith.addf %67, %14 : vector<2x256xf32>
    %69 = arith.truncf %68 : vector<2x256xf32> to vector<2x256xbf16>
    %cst_22 = arith.constant dense<0.000000e+00> : vector<2x1024xf32>
    %70 = tpu.matmul %69, %2, %cst_22 {dimension_numbers = #tpu.dot_dimension_numbers<[1], [0], [0], [1], [0, 0, 1, 1], [], []>} : vector<2x256xbf16>, vector<256x1024xbf16>, vector<2x1024xf32> -> vector<2x1024xf32>
    %71 = vector.broadcast %3 : vector<1x1024xf32> to vector<2x1024xf32>
    %72 = arith.addf %70, %71 : vector<2x1024xf32>
    %73 = math.tanh %72 : vector<2x1024xf32>
    %c0_23 = arith.constant 0 : index
    %c0_24 = arith.constant 0 : index
    %c0_25 = arith.constant 0 : index
    %74 = vector.load %arg7[%c0_23, %c0_24, %c0_25] : memref<3x2x1024xf32, #tpu.memory_space<vmem>>, vector<1x2x1024xf32>
    %75 = vector.shape_cast %74 : vector<1x2x1024xf32> to vector<2x1024xf32>
    %76 = vector.shape_cast %73 : vector<2x1024xf32> to vector<1x2x1024xf32>
    tpu.vector_store %arg7[%c0_23, %c0_24, %c0_25], %76 {strides = array<i32>} : memref<3x2x1024xf32, #tpu.memory_space<vmem>>, vector<1x2x1024xf32>,
    %77 = arith.truncf %73 : vector<2x1024xf32> to vector<2x1024xbf16>
    %cst_26 = arith.constant dense<0.000000e+00> : vector<2x256xf32>
    %78 = tpu.matmul %77, %0, %cst_26 {dimension_numbers = #tpu.dot_dimension_numbers<[1], [0], [0], [1], [0, 0, 1, 1], [], []>} : vector<2x1024xbf16>, vector<1024x256xbf16>, vector<2x256xf32> -> vector<2x256xf32>
    %79 = vector.broadcast %1 : vector<1x256xf32> to vector<2x256xf32>
    %80 = arith.addf %78, %79 : vector<2x256xf32>
    %81 = arith.addf %16, %80 : vector<2x256xf32>
    %c1 = arith.constant 1 : index
    %c0_27 = arith.constant 0 : index
    %c0_28 = arith.constant 0 : index
    %82 = vector.load %arg8[%c1, %c0_27, %c0_28] : memref<3x2x256xf32, #tpu.memory_space<vmem>>, vector<1x2x256xf32>
    %83 = vector.shape_cast %82 : vector<1x2x256xf32> to vector<2x256xf32>
    %84 = vector.shape_cast %81 : vector<2x256xf32> to vector<1x2x256xf32>
    tpu.vector_store %arg8[%c1, %c0_27, %c0_28], %84 {strides = array<i32>} : memref<3x2x256xf32, #tpu.memory_space<vmem>>, vector<1x2x256xf32>,
    %85 = vector.extract_strided_slice %81 {offsets = [0, 0], sizes = [2, 32], strides = [1, 1]} : vector<2x256xf32> to vector<2x32xf32>
    %86 = vector.extract_strided_slice %81 {offsets = [0, 32], sizes = [2, 32], strides = [1, 1]} : vector<2x256xf32> to vector<2x32xf32>
    %87 = vector.extract_strided_slice %81 {offsets = [0, 64], sizes = [2, 32], strides = [1, 1]} : vector<2x256xf32> to vector<2x32xf32>
    %88 = vector.extract_strided_slice %81 {offsets = [0, 96], sizes = [2, 32], strides = [1, 1]} : vector<2x256xf32> to vector<2x32xf32>
    %89 = vector.extract_strided_slice %81 {offsets = [0, 128], sizes = [2, 32], strides = [1, 1]} : vector<2x256xf32> to vector<2x32xf32>
    %90 = vector.extract_strided_slice %81 {offsets = [0, 160], sizes = [2, 32], strides = [1, 1]} : vector<2x256xf32> to vector<2x32xf32>
    %91 = vector.extract_strided_slice %81 {offsets = [0, 192], sizes = [2, 32], strides = [1, 1]} : vector<2x256xf32> to vector<2x32xf32>
    %92 = vector.extract_strided_slice %81 {offsets = [0, 224], sizes = [2, 32], strides = [1, 1]} : vector<2x256xf32> to vector<2x32xf32>
    %93 = vector.shape_cast %85 : vector<2x32xf32> to vector<2x1x32xf32>
    %94 = vector.shape_cast %86 : vector<2x32xf32> to vector<2x1x32xf32>
    %95 = vector.shape_cast %87 : vector<2x32xf32> to vector<2x1x32xf32>
    %96 = vector.shape_cast %88 : vector<2x32xf32> to vector<2x1x32xf32>
    %97 = vector.shape_cast %89 : vector<2x32xf32> to vector<2x1x32xf32>
    %98 = vector.shape_cast %90 : vector<2x32xf32> to vector<2x1x32xf32>
    %99 = vector.shape_cast %91 : vector<2x32xf32> to vector<2x1x32xf32>
    %100 = vector.shape_cast %92 : vector<2x32xf32> to vector<2x1x32xf32>
    %101 = tpu.concatenate %93, %94, %95, %96, %97, %98, %99, %100 in 1 : vector<2x1x32xf32>, vector<2x1x32xf32>, vector<2x1x32xf32>, vector<2x1x32xf32>, vector<2x1x32xf32>, vector<2x1x32xf32>, vector<2x1x32xf32>, vector<2x1x32xf32> -> vector<2x8x32xf32>
    "tpu.trace_start"() <{level = 10 : i32, message = "bld,bsd->bls"}> : () -> ()
    %cst_29 = arith.constant dense<0.000000e+00> : vector<2x8x8xf32>
    %102 = tpu.matmul %101, %5, %cst_29 {dimension_numbers = #tpu.dot_dimension_numbers<[2], [2], [1], [1], [0, 0, 0, 1, 1, 1], [0], [0]>} : vector<2x8x32xf32>, vector<2x8x32xf32>, vector<2x8x8xf32> -> vector<2x8x8xf32>
    "tpu.trace_stop"() : () -> ()
    %cst_30 = arith.constant 0.176776692 : f32
    %103 = vector.broadcast %cst_30 : f32 to vector<2x8x8xf32>
    %104 = arith.mulf %102, %103 : vector<2x8x8xf32>
    %cst_31 = arith.constant dense<0xFF800000> : vector<2x8xf32>
    %105 = vector.multi_reduction <maximumf>, %104, %cst_31 [2] : vector<2x8x8xf32> to vector<2x8xf32>
    %106 = vector.shape_cast %105 : vector<2x8xf32> to vector<2x8x1xf32>
    %107 = vector.broadcast %106 : vector<2x8x1xf32> to vector<2x8x8xf32>
    %108 = arith.subf %104, %107 : vector<2x8x8xf32>
    %109 = math.exp %108 : vector<2x8x8xf32>
    %cst_32 = arith.constant dense<0.000000e+00> : vector<2x8xf32>
    %110 = vector.multi_reduction <add>, %109, %cst_32 [2] : vector<2x8x8xf32> to vector<2x8xf32>
    %111 = vector.shape_cast %110 : vector<2x8xf32> to vector<2x8x1xf32>
    %112 = tpu.reciprocal %111 {approx = true} : vector<2x8x1xf32> -> vector<2x8x1xf32>
    %113 = vector.broadcast %112 : vector<2x8x1xf32> to vector<2x8x8xf32>
    %114 = arith.mulf %109, %113 : vector<2x8x8xf32>
    "tpu.trace_start"() <{level = 10 : i32, message = "bls,bsd->bld"}> : () -> ()
    %cst_33 = arith.constant dense<0.000000e+00> : vector<2x8x32xf32>
    %115 = tpu.matmul %114, %5, %cst_33 {dimension_numbers = #tpu.dot_dimension_numbers<[2], [1], [1], [2], [0, 0, 0, 1, 1, 2], [0], [0]>} : vector<2x8x8xf32>, vector<2x8x32xf32>, vector<2x8x32xf32> -> vector<2x8x32xf32>
    "tpu.trace_stop"() : () -> ()
    %116 = vector.extract_strided_slice %115 {offsets = [0, 0, 0], sizes = [2, 1, 32], strides = [1, 1, 1]} : vector<2x8x32xf32> to vector<2x1x32xf32>
    %117 = vector.shape_cast %116 : vector<2x1x32xf32> to vector<2x32xf32>
    %118 = vector.extract_strided_slice %115 {offsets = [0, 1, 0], sizes = [2, 1, 32], strides = [1, 1, 1]} : vector<2x8x32xf32> to vector<2x1x32xf32>
    %119 = vector.shape_cast %118 : vector<2x1x32xf32> to vector<2x32xf32>
    %120 = vector.extract_strided_slice %115 {offsets = [0, 2, 0], sizes = [2, 1, 32], strides = [1, 1, 1]} : vector<2x8x32xf32> to vector<2x1x32xf32>
    %121 = vector.shape_cast %120 : vector<2x1x32xf32> to vector<2x32xf32>
    %122 = vector.extract_strided_slice %115 {offsets = [0, 3, 0], sizes = [2, 1, 32], strides = [1, 1, 1]} : vector<2x8x32xf32> to vector<2x1x32xf32>
    %123 = vector.shape_cast %122 : vector<2x1x32xf32> to vector<2x32xf32>
    %124 = vector.extract_strided_slice %115 {offsets = [0, 4, 0], sizes = [2, 1, 32], strides = [1, 1, 1]} : vector<2x8x32xf32> to vector<2x1x32xf32>
    %125 = vector.shape_cast %124 : vector<2x1x32xf32> to vector<2x32xf32>
    %126 = vector.extract_strided_slice %115 {offsets = [0, 5, 0], sizes = [2, 1, 32], strides = [1, 1, 1]} : vector<2x8x32xf32> to vector<2x1x32xf32>
    %127 = vector.shape_cast %126 : vector<2x1x32xf32> to vector<2x32xf32>
    %128 = vector.extract_strided_slice %115 {offsets = [0, 6, 0], sizes = [2, 1, 32], strides = [1, 1, 1]} : vector<2x8x32xf32> to vector<2x1x32xf32>
    %129 = vector.shape_cast %128 : vector<2x1x32xf32> to vector<2x32xf32>
    %130 = vector.extract_strided_slice %115 {offsets = [0, 7, 0], sizes = [2, 1, 32], strides = [1, 1, 1]} : vector<2x8x32xf32> to vector<2x1x32xf32>
    %131 = vector.shape_cast %130 : vector<2x1x32xf32> to vector<2x32xf32>
    %132 = tpu.concatenate %117, %119, %121, %123, %125, %127, %129, %131 in 1 : vector<2x32xf32>, vector<2x32xf32>, vector<2x32xf32>, vector<2x32xf32>, vector<2x32xf32>, vector<2x32xf32>, vector<2x32xf32>, vector<2x32xf32> -> vector<2x256xf32>
    %133 = arith.addf %132, %14 : vector<2x256xf32>
    %134 = arith.truncf %133 : vector<2x256xf32> to vector<2x256xbf16>
    %cst_34 = arith.constant dense<0.000000e+00> : vector<2x1024xf32>
    %135 = tpu.matmul %134, %2, %cst_34 {dimension_numbers = #tpu.dot_dimension_numbers<[1], [0], [0], [1], [0, 0, 1, 1], [], []>} : vector<2x256xbf16>, vector<256x1024xbf16>, vector<2x1024xf32> -> vector<2x1024xf32>
    %136 = vector.broadcast %3 : vector<1x1024xf32> to vector<2x1024xf32>
    %137 = arith.addf %135, %136 : vector<2x1024xf32>
    %138 = math.tanh %137 : vector<2x1024xf32>
    %c1_35 = arith.constant 1 : index
    %c0_36 = arith.constant 0 : index
    %c0_37 = arith.constant 0 : index
    %139 = vector.load %arg7[%c1_35, %c0_36, %c0_37] : memref<3x2x1024xf32, #tpu.memory_space<vmem>>, vector<1x2x1024xf32>
    %140 = vector.shape_cast %139 : vector<1x2x1024xf32> to vector<2x1024xf32>
    %141 = vector.shape_cast %138 : vector<2x1024xf32> to vector<1x2x1024xf32>
    tpu.vector_store %arg7[%c1_35, %c0_36, %c0_37], %141 {strides = array<i32>} : memref<3x2x1024xf32, #tpu.memory_space<vmem>>, vector<1x2x1024xf32>,
    %142 = arith.truncf %138 : vector<2x1024xf32> to vector<2x1024xbf16>
    %cst_38 = arith.constant dense<0.000000e+00> : vector<2x256xf32>
    %143 = tpu.matmul %142, %0, %cst_38 {dimension_numbers = #tpu.dot_dimension_numbers<[1], [0], [0], [1], [0, 0, 1, 1], [], []>} : vector<2x1024xbf16>, vector<1024x256xbf16>, vector<2x256xf32> -> vector<2x256xf32>
    %144 = vector.broadcast %1 : vector<1x256xf32> to vector<2x256xf32>
    %145 = arith.addf %143, %144 : vector<2x256xf32>
    %146 = arith.addf %81, %145 : vector<2x256xf32>
    %c2 = arith.constant 2 : index
    %c0_39 = arith.constant 0 : index
    %c0_40 = arith.constant 0 : index
    %147 = vector.load %arg8[%c2, %c0_39, %c0_40] : memref<3x2x256xf32, #tpu.memory_space<vmem>>, vector<1x2x256xf32>
    %148 = vector.shape_cast %147 : vector<1x2x256xf32> to vector<2x256xf32>
    %149 = vector.shape_cast %146 : vector<2x256xf32> to vector<1x2x256xf32>
    tpu.vector_store %arg8[%c2, %c0_39, %c0_40], %149 {strides = array<i32>} : memref<3x2x256xf32, #tpu.memory_space<vmem>>, vector<1x2x256xf32>,
    %150 = vector.extract_strided_slice %146 {offsets = [0, 0], sizes = [2, 32], strides = [1, 1]} : vector<2x256xf32> to vector<2x32xf32>
    %151 = vector.extract_strided_slice %146 {offsets = [0, 32], sizes = [2, 32], strides = [1, 1]} : vector<2x256xf32> to vector<2x32xf32>
    %152 = vector.extract_strided_slice %146 {offsets = [0, 64], sizes = [2, 32], strides = [1, 1]} : vector<2x256xf32> to vector<2x32xf32>
    %153 = vector.extract_strided_slice %146 {offsets = [0, 96], sizes = [2, 32], strides = [1, 1]} : vector<2x256xf32> to vector<2x32xf32>
    %154 = vector.extract_strided_slice %146 {offsets = [0, 128], sizes = [2, 32], strides = [1, 1]} : vector<2x256xf32> to vector<2x32xf32>
    %155 = vector.extract_strided_slice %146 {offsets = [0, 160], sizes = [2, 32], strides = [1, 1]} : vector<2x256xf32> to vector<2x32xf32>
    %156 = vector.extract_strided_slice %146 {offsets = [0, 192], sizes = [2, 32], strides = [1, 1]} : vector<2x256xf32> to vector<2x32xf32>
    %157 = vector.extract_strided_slice %146 {offsets = [0, 224], sizes = [2, 32], strides = [1, 1]} : vector<2x256xf32> to vector<2x32xf32>
    %158 = vector.shape_cast %150 : vector<2x32xf32> to vector<2x1x32xf32>
    %159 = vector.shape_cast %151 : vector<2x32xf32> to vector<2x1x32xf32>
    %160 = vector.shape_cast %152 : vector<2x32xf32> to vector<2x1x32xf32>
    %161 = vector.shape_cast %153 : vector<2x32xf32> to vector<2x1x32xf32>
    %162 = vector.shape_cast %154 : vector<2x32xf32> to vector<2x1x32xf32>
    %163 = vector.shape_cast %155 : vector<2x32xf32> to vector<2x1x32xf32>
    %164 = vector.shape_cast %156 : vector<2x32xf32> to vector<2x1x32xf32>
    %165 = vector.shape_cast %157 : vector<2x32xf32> to vector<2x1x32xf32>
    %166 = tpu.concatenate %158, %159, %160, %161, %162, %163, %164, %165 in 1 : vector<2x1x32xf32>, vector<2x1x32xf32>, vector<2x1x32xf32>, vector<2x1x32xf32>, vector<2x1x32xf32>, vector<2x1x32xf32>, vector<2x1x32xf32>, vector<2x1x32xf32> -> vector<2x8x32xf32>
    "tpu.trace_start"() <{level = 10 : i32, message = "bld,bsd->bls"}> : () -> ()
    %cst_41 = arith.constant dense<0.000000e+00> : vector<2x8x8xf32>
    %167 = tpu.matmul %166, %5, %cst_41 {dimension_numbers = #tpu.dot_dimension_numbers<[2], [2], [1], [1], [0, 0, 0, 1, 1, 1], [0], [0]>} : vector<2x8x32xf32>, vector<2x8x32xf32>, vector<2x8x8xf32> -> vector<2x8x8xf32>
    "tpu.trace_stop"() : () -> ()
    %cst_42 = arith.constant 0.176776692 : f32
    %168 = vector.broadcast %cst_42 : f32 to vector<2x8x8xf32>
    %169 = arith.mulf %167, %168 : vector<2x8x8xf32>
    %cst_43 = arith.constant dense<0xFF800000> : vector<2x8xf32>
    %170 = vector.multi_reduction <maximumf>, %169, %cst_43 [2] : vector<2x8x8xf32> to vector<2x8xf32>
    %171 = vector.shape_cast %170 : vector<2x8xf32> to vector<2x8x1xf32>
    %172 = vector.broadcast %171 : vector<2x8x1xf32> to vector<2x8x8xf32>
    %173 = arith.subf %169, %172 : vector<2x8x8xf32>
    %174 = math.exp %173 : vector<2x8x8xf32>
    %cst_44 = arith.constant dense<0.000000e+00> : vector<2x8xf32>
    %175 = vector.multi_reduction <add>, %174, %cst_44 [2] : vector<2x8x8xf32> to vector<2x8xf32>
    %176 = vector.shape_cast %175 : vector<2x8xf32> to vector<2x8x1xf32>
    %177 = tpu.reciprocal %176 {approx = true} : vector<2x8x1xf32> -> vector<2x8x1xf32>
    %178 = vector.broadcast %177 : vector<2x8x1xf32> to vector<2x8x8xf32>
    %179 = arith.mulf %174, %178 : vector<2x8x8xf32>
    "tpu.trace_start"() <{level = 10 : i32, message = "bls,bsd->bld"}> : () -> ()
    %cst_45 = arith.constant dense<0.000000e+00> : vector<2x8x32xf32>
    %180 = tpu.matmul %179, %5, %cst_45 {dimension_numbers = #tpu.dot_dimension_numbers<[2], [1], [1], [2], [0, 0, 0, 1, 1, 2], [0], [0]>} : vector<2x8x8xf32>, vector<2x8x32xf32>, vector<2x8x32xf32> -> vector<2x8x32xf32>
    "tpu.trace_stop"() : () -> ()
    %181 = vector.extract_strided_slice %180 {offsets = [0, 0, 0], sizes = [2, 1, 32], strides = [1, 1, 1]} : vector<2x8x32xf32> to vector<2x1x32xf32>
    %182 = vector.shape_cast %181 : vector<2x1x32xf32> to vector<2x32xf32>
    %183 = vector.extract_strided_slice %180 {offsets = [0, 1, 0], sizes = [2, 1, 32], strides = [1, 1, 1]} : vector<2x8x32xf32> to vector<2x1x32xf32>
    %184 = vector.shape_cast %183 : vector<2x1x32xf32> to vector<2x32xf32>
    %185 = vector.extract_strided_slice %180 {offsets = [0, 2, 0], sizes = [2, 1, 32], strides = [1, 1, 1]} : vector<2x8x32xf32> to vector<2x1x32xf32>
    %186 = vector.shape_cast %185 : vector<2x1x32xf32> to vector<2x32xf32>
    %187 = vector.extract_strided_slice %180 {offsets = [0, 3, 0], sizes = [2, 1, 32], strides = [1, 1, 1]} : vector<2x8x32xf32> to vector<2x1x32xf32>
    %188 = vector.shape_cast %187 : vector<2x1x32xf32> to vector<2x32xf32>
    %189 = vector.extract_strided_slice %180 {offsets = [0, 4, 0], sizes = [2, 1, 32], strides = [1, 1, 1]} : vector<2x8x32xf32> to vector<2x1x32xf32>
    %190 = vector.shape_cast %189 : vector<2x1x32xf32> to vector<2x32xf32>
    %191 = vector.extract_strided_slice %180 {offsets = [0, 5, 0], sizes = [2, 1, 32], strides = [1, 1, 1]} : vector<2x8x32xf32> to vector<2x1x32xf32>
    %192 = vector.shape_cast %191 : vector<2x1x32xf32> to vector<2x32xf32>
    %193 = vector.extract_strided_slice %180 {offsets = [0, 6, 0], sizes = [2, 1, 32], strides = [1, 1, 1]} : vector<2x8x32xf32> to vector<2x1x32xf32>
    %194 = vector.shape_cast %193 : vector<2x1x32xf32> to vector<2x32xf32>
    %195 = vector.extract_strided_slice %180 {offsets = [0, 7, 0], sizes = [2, 1, 32], strides = [1, 1, 1]} : vector<2x8x32xf32> to vector<2x1x32xf32>
    %196 = vector.shape_cast %195 : vector<2x1x32xf32> to vector<2x32xf32>
    %197 = tpu.concatenate %182, %184, %186, %188, %190, %192, %194, %196 in 1 : vector<2x32xf32>, vector<2x32xf32>, vector<2x32xf32>, vector<2x32xf32>, vector<2x32xf32>, vector<2x32xf32>, vector<2x32xf32>, vector<2x32xf32> -> vector<2x256xf32>
    %198 = arith.addf %197, %14 : vector<2x256xf32>
    %199 = arith.truncf %198 : vector<2x256xf32> to vector<2x256xbf16>
    %cst_46 = arith.constant dense<0.000000e+00> : vector<2x1024xf32>
    %200 = tpu.matmul %199, %2, %cst_46 {dimension_numbers = #tpu.dot_dimension_numbers<[1], [0], [0], [1], [0, 0, 1, 1], [], []>} : vector<2x256xbf16>, vector<256x1024xbf16>, vector<2x1024xf32> -> vector<2x1024xf32>
    %201 = vector.broadcast %3 : vector<1x1024xf32> to vector<2x1024xf32>
    %202 = arith.addf %200, %201 : vector<2x1024xf32>
    %203 = math.tanh %202 : vector<2x1024xf32>
    %c2_47 = arith.constant 2 : index
    %c0_48 = arith.constant 0 : index
    %c0_49 = arith.constant 0 : index
    %204 = vector.load %arg7[%c2_47, %c0_48, %c0_49] : memref<3x2x1024xf32, #tpu.memory_space<vmem>>, vector<1x2x1024xf32>
    %205 = vector.shape_cast %204 : vector<1x2x1024xf32> to vector<2x1024xf32>
    %206 = vector.shape_cast %203 : vector<2x1024xf32> to vector<1x2x1024xf32>
    tpu.vector_store %arg7[%c2_47, %c0_48, %c0_49], %206 {strides = array<i32>} : memref<3x2x1024xf32, #tpu.memory_space<vmem>>, vector<1x2x1024xf32>,
    return
  }
}

</mosaic_0001>

<llo_original>
// kernel: squeeze.11
$region0: #{squeeze.11}
  %s0 = inlined_call_operand.vmem [shape: f32[1,2,256], index: 0, kind: input, shape index: {}]
  %s1 = inlined_call_operand.hbm [shape: f32[2,8,32], index: 1, kind: output, shape index: {}]
  $region1: #{squeeze.11} parent=0
    #allocation0 [shape = 'u8[8192]{0}', space=vmem, size = 0x2000, scoped, tag = 'operand span for operand 1']
    #allocation1 [shape = 's32[1]{0}', space=sflag, size = 0x4, scoped, tag = 'scoped memory for squeeze.11']
    #allocation2 [shape = 'u8[8192]{0}', space=vmem, size = 0x2000, scoped, tag = 'scoped mem for input reshape']
    %2 = vsyncpa [#allocation1], 0
    %s4 = ssub.s32 4, 1
    %s5 = scalar_lea.vmem %s0, 2
    %v6 = vld [vmem:[%s5] sm:%s4]
    %s7 = scalar_lea.vmem [#allocation2], 8
    %8 = vst [vmem:[%s7] sm:%s4] %v6
    %v9 = vld [vmem:[%s0] sm:%s4]
    %10 = vst [vmem:[#allocation2] sm:%s4] %v9
    %v11 = vld [vmem:[#allocation2] sm:$0x3]
    %vm12 = vcmask 261120
    %13 = vst.msk [vmem:[#allocation0] ss:$8 sm:$0x3] %vm12, %v11
    %s14 = scalar_lea.vmem [#allocation2], 8
    %v15 = vld [vmem:[%s14] sm:$0x3]
    %vm16 = vcmask 261120
    %s17 = scalar_lea.vmem [#allocation0], 4
    %18 = vst.msk [vmem:[%s17] ss:$8 sm:$0x3] %vm16, %v15
    %v19 = vld.sshfl [vmem:[#allocation2] sm:$0xff pattern:$0x99999180]
    %20 = vrot.lane.b32.xlu0 %v19, 96
    %v21 = vpop.permute.xlu0 %20
    %vm22 = vcmask 261120
    %s23 = scalar_lea.vmem [#allocation0], 1
    %24 = vst.msk [vmem:[%s23] ss:$4 sm:$0xf] %vm22, %v21
    %v25 = vld.sshfl [vmem:[#allocation2] sm:$0xff pattern:$0x99999180]
    %26 = vrot.lane.b32.xlu0 %v25, 64
    %v27 = vpop.permute.xlu0 %26
    %vm28 = vcmask 261120
    %s29 = scalar_lea.vmem [#allocation0], 2
    %30 = vst.msk [vmem:[%s29] ss:$4 sm:$0xf] %vm28, %v27
    %v31 = vld.sshfl [vmem:[#allocation2] sm:$0xff pattern:$0x99999180]
    %32 = vrot.lane.b32.xlu0 %v31, 32
    %v33 = vpop.permute.xlu0 %32
    %vm34 = vcmask 261120
    %s35 = scalar_lea.vmem [#allocation0], 3
    %36 = vst.msk [vmem:[%s35] ss:$4 sm:$0xf] %vm34, %v33
    %38 = vsyncadd [#allocation1], 0
    %s40 = sshll.u32 [#allocation0], 4
    %s41 = int_to_ptr.vmem [resolvable:$true] %s40
    %s42 = sshll.u32 %s1, 4
    %s43 = int_to_ptr.hbm [resolvable:$true] %s42
    %45 = dma.vmem_to_hbm [thread:$0]  %s41, 256, %s43, [#allocation1]
    %47 = dma.done [#allocation1], 256
    %48 = vsyncpa [#allocation1], 1

// kernel: squeeze.8
$region0: #{squeeze.8}
  %s0 = inlined_call_operand.vmem [shape: f32[1,2,1024], index: 0, kind: input, shape index: {}]
  %s1 = inlined_call_operand.hbm [shape: f32[2,4,16,16], index: 1, kind: output, shape index: {}]
  $region1: #{squeeze.8} parent=0
    #allocation0 [shape = 'u8[65536]{0}', space=vmem, size = 0x10000, scoped, tag = 'operand span for operand 1']
    #allocation1 [shape = 's32[1]{0}', space=sflag, size = 0x4, scoped, tag = 'scoped memory for squeeze.8']
    #allocation2 [shape = 'u8[32768]{0}', space=vmem, size = 0x8000, scoped, tag = 'scoped mem for input reshape']
    %2 = vsyncpa [#allocation1], 0
    %s4 = ssub.s32 4, 1
    %s5 = scalar_lea.vmem %s0, 14
    %v6 = vld [vmem:[%s5] sm:%s4]
    %s7 = scalar_lea.vmem [#allocation2], 56
    %8 = vst [vmem:[%s7] sm:%s4] %v6
    %s9 = scalar_lea.vmem %s0, 12
    %v10 = vld [vmem:[%s9] sm:%s4]
    %s11 = scalar_lea.vmem [#allocation2], 48
    %12 = vst [vmem:[%s11] sm:%s4] %v10
    %s13 = scalar_lea.vmem %s0, 10
    %v14 = vld [vmem:[%s13] sm:%s4]
    %s15 = scalar_lea.vmem [#allocation2], 40
    %16 = vst [vmem:[%s15] sm:%s4] %v14
    %s17 = scalar_lea.vmem %s0, 8
    %v18 = vld [vmem:[%s17] sm:%s4]
    %s19 = scalar_lea.vmem [#allocation2], 32
    %20 = vst [vmem:[%s19] sm:%s4] %v18
    %s21 = scalar_lea.vmem %s0, 6
    %v22 = vld [vmem:[%s21] sm:%s4]
    %s23 = scalar_lea.vmem [#allocation2], 24
    %24 = vst [vmem:[%s23] sm:%s4] %v22
    %s25 = scalar_lea.vmem %s0, 4
    %v26 = vld [vmem:[%s25] sm:%s4]
    %s27 = scalar_lea.vmem [#allocation2], 16
    %28 = vst [vmem:[%s27] sm:%s4] %v26
    %s29 = scalar_lea.vmem %s0, 2
    %v30 = vld [vmem:[%s29] sm:%s4]
    %s31 = scalar_lea.vmem [#allocation2], 8
    %32 = vst [vmem:[%s31] sm:%s4] %v30
    %v33 = vld [vmem:[%s0] sm:%s4]
    %34 = vst [vmem:[#allocation2] sm:%s4] %v33
    %v35 = vld [vmem:[#allocation2] sm:$0x3]
    %vm36 = vcmask 130048
    %37 = vst.msk [vmem:[#allocation0] sm:$0x1] %vm36, %v35
    %s38 = scalar_lea.vmem [#allocation0], 63
    %39 = vst.msk [vmem:[%s38] sm:$0x2] %vm36, %v35
    %s40 = scalar_lea.vmem [#allocation2], 8
    %v41 = vld [vmem:[%s40] sm:$0x3]
    %vm42 = vcmask 130048
    %s43 = scalar_lea.vmem [#allocation0], 8
    %44 = vst.msk [vmem:[%s43] sm:$0x1] %vm42, %v41
    %s45 = scalar_lea.vmem [#allocation0], 71
    %46 = vst.msk [vmem:[%s45] sm:$0x2] %vm42, %v41
    %s47 = scalar_lea.vmem [#allocation2], 16
    %v48 = vld [vmem:[%s47] sm:$0x3]
    %vm49 = vcmask 130048
    %s50 = scalar_lea.vmem [#allocation0], 16
    %51 = vst.msk [vmem:[%s50] sm:$0x1] %vm49, %v48
    %s52 = scalar_lea.vmem [#allocation0], 79
    %53 = vst.msk [vmem:[%s52] sm:$0x2] %vm49, %v48
    %s54 = scalar_lea.vmem [#allocation2], 24
    %v55 = vld [vmem:[%s54] sm:$0x3]
    %vm56 = vcmask 130048
    %s57 = scalar_lea.vmem [#allocation0], 24
    %58 = vst.msk [vmem:[%s57] sm:$0x1] %vm56, %v55
    %s59 = scalar_lea.vmem [#allocation0], 87
    %60 = vst.msk [vmem:[%s59] sm:$0x2] %vm56, %v55
    %s61 = scalar_lea.vmem [#allocation2], 32
    %v62 = vld [vmem:[%s61] sm:$0x3]
    %vm63 = vcmask 130048
    %s64 = scalar_lea.vmem [#allocation0], 32
    %65 = vst.msk [vmem:[%s64] sm:$0x1] %vm63, %v62
    %s66 = scalar_lea.vmem [#allocation0], 95
    %67 = vst.msk [vmem:[%s66] sm:$0x2] %vm63, %v62
    %s68 = scalar_lea.vmem [#allocation2], 40
    %v69 = vld [vmem:[%s68] sm:$0x3]
    %vm70 = vcmask 130048
    %s71 = scalar_lea.vmem [#allocation0], 40
    %72 = vst.msk [vmem:[%s71] sm:$0x1] %vm70, %v69
    %s73 = scalar_lea.vmem [#allocation0], 103
    %74 = vst.msk [vmem:[%s73] sm:$0x2] %vm70, %v69
    %s75 = scalar_lea.vmem [#allocation2], 48
    %v76 = vld [vmem:[%s75] sm:$0x3]
    %vm77 = vcmask 130048
    %s78 = scalar_lea.vmem [#allocation0], 48
    %79 = vst.msk [vmem:[%s78] sm:$0x1] %vm77, %v76
    %s80 = scalar_lea.vmem [#allocation0], 111
    %81 = vst.msk [vmem:[%s80] sm:$0x2] %vm77, %v76
    %s82 = scalar_lea.vmem [#allocation2], 56
    %v83 = vld [vmem:[%s82] sm:$0x3]
    %vm84 = vcmask 130048
    %s85 = scalar_lea.vmem [#allocation0], 56
    %86 = vst.msk [vmem:[%s85] sm:$0x1] %vm84, %v83
    %s87 = scalar_lea.vmem [#allocation0], 119
    %88 = vst.msk [vmem:[%s87] sm:$0x2] %vm84, %v83
    %v89 = vld [vmem:[#allocation2] ss:$8 sm:$0xf]
    %s90 = scalar_lea.vmem [#allocation2], 4294967265
    %v91 = vld [vmem:[%s90] ss:$8 sm:$0xf0]
    %vm92 = vcmask 1047556
    %v93 = vsel %vm92, %v91, %v89
    %94 = vrot.lane.b32.xlu0 %v93, 112
    %v95 = vpop.permute.xlu0 %94
    %vm96 = vcmask 130048
    %s97 = scalar_lea.vmem [#allocation0], 1
    %98 = vst.msk [vmem:[%s97] ss:$8 sm:$0xf] %vm96, %v95
    %s99 = scalar_lea.vmem [#allocation0], 33
    %100 = vst.msk [vmem:[%s99] ss:$8 sm:$0xf0] %vm96, %v95
    %s101 = scalar_lea.vmem [#allocation2], 32
    %v102 = vld [vmem:[%s101] ss:$8 sm:$0xf]
    %s103 = scalar_lea.vmem [#allocation2], 1
    %v104 = vld [vmem:[%s103] ss:$8 sm:$0xf0]
    %vm105 = vcmask 1047556
    %v106 = vsel %vm105, %v104, %v102
    %107 = vrot.lane.b32.xlu0 %v106, 112
    %v108 = vpop.permute.xlu0 %107
    %vm109 = vcmask 130048
    %s110 = scalar_lea.vmem [#allocation0], 33
    %111 = vst.msk [vmem:[%s110] ss:$8 sm:$0xf] %vm109, %v108
    %s112 = scalar_lea.vmem [#allocation0], 65
    %113 = vst.msk [vmem:[%s112] ss:$8 sm:$0xf0] %vm109, %v108
    %v114 = vld [vmem:[#allocation2] ss:$8 sm:$0xf]
    %s115 = scalar_lea.vmem [#allocation2], 4294967265
    %v116 = vld [vmem:[%s115] ss:$8 sm:$0xf0]
    %vm117 = vcmask 1047556
    %v118 = vsel %vm117, %v116, %v114
    %119 = vrot.lane.b32.xlu0 %v118, 96
    %v120 = vpop.permute.xlu0 %119
    %vm121 = vcmask 130048
    %s122 = scalar_lea.vmem [#allocation0], 2
    %123 = vst.msk [vmem:[%s122] ss:$8 sm:$0xf] %vm121, %v120
    %s124 = scalar_lea.vmem [#allocation0], 34
    %125 = vst.msk [vmem:[%s124] ss:$8 sm:$0xf0] %vm121, %v120
    %s126 = scalar_lea.vmem [#allocation2], 32
    %v127 = vld [vmem:[%s126] ss:$8 sm:$0xf]
    %s128 = scalar_lea.vmem [#allocation2], 1
    %v129 = vld [vmem:[%s128] ss:$8 sm:$0xf0]
    %vm130 = vcmask 1047556
    %v131 = vsel %vm130, %v129, %v127
    %132 = vrot.lane.b32.xlu0 %v131, 96
    %v133 = vpop.permute.xlu0 %132
    %vm134 = vcmask 130048
    %s135 = scalar_lea.vmem [#allocation0], 34
    %136 = vst.msk [vmem:[%s135] ss:$8 sm:$0xf] %vm134, %v133
    %s137 = scalar_lea.vmem [#allocation0], 66
    %138 = vst.msk [vmem:[%s137] ss:$8 sm:$0xf0] %vm134, %v133
    %v139 = vld [vmem:[#allocation2] ss:$8 sm:$0xf]
    %s140 = scalar_lea.vmem [#allocation2], 4294967265
    %v141 = vld [vmem:[%s140] ss:$8 sm:$0xf0]
    %vm142 = vcmask 1047556
    %v143 = vsel %vm142, %v141, %v139
    %144 = vrot.lane.b32.xlu0 %v143, 80
    %v145 = vpop.permute.xlu0 %144
    %vm146 = vcmask 130048
    %s147 = scalar_lea.vmem [#allocation0], 3
    %148 = vst.msk [vmem:[%s147] ss:$8 sm:$0xf] %vm146, %v145
    %s149 = scalar_lea.vmem [#allocation0], 35
    %150 = vst.msk [vmem:[%s149] ss:$8 sm:$0xf0] %vm146, %v145
    %s151 = scalar_lea.vmem [#allocation2], 32
    %v152 = vld [vmem:[%s151] ss:$8 sm:$0xf]
    %s153 = scalar_lea.vmem [#allocation2], 1
    %v154 = vld [vmem:[%s153] ss:$8 sm:$0xf0]
    %vm155 = vcmask 1047556
    %v156 = vsel %vm155, %v154, %v152
    %157 = vrot.lane.b32.xlu0 %v156, 80
    %v158 = vpop.permute.xlu0 %157
    %vm159 = vcmask 130048
    %s160 = scalar_lea.vmem [#allocation0], 35
    %161 = vst.msk [vmem:[%s160] ss:$8 sm:$0xf] %vm159, %v158
    %s162 = scalar_lea.vmem [#allocation0], 67
    %163 = vst.msk [vmem:[%s162] ss:$8 sm:$0xf0] %vm159, %v158
    %v164 = vld [vmem:[#allocation2] ss:$8 sm:$0xf]
    %s165 = scalar_lea.vmem [#allocation2], 4294967265
    %v166 = vld [vmem:[%s165] ss:$8 sm:$0xf0]
    %vm167 = vcmask 1047556
    %v168 = vsel %vm167, %v166, %v164
    %169 = vrot.lane.b32.xlu0 %v168, 64
    %v170 = vpop.permute.xlu0 %169
    %vm171 = vcmask 130048
    %s172 = scalar_lea.vmem [#allocation0], 4
    %173 = vst.msk [vmem:[%s172] ss:$8 sm:$0xf] %vm171, %v170
    %s174 = scalar_lea.vmem [#allocation0], 36
    %175 = vst.msk [vmem:[%s174] ss:$8 sm:$0xf0] %vm171, %v170
    %s176 = scalar_lea.vmem [#allocation2], 32
    %v177 = vld [vmem:[%s176] ss:$8 sm:$0xf]
    %s178 = scalar_lea.vmem [#allocation2], 1
    %v179 = vld [vmem:[%s178] ss:$8 sm:$0xf0]
    %vm180 = vcmask 1047556
    %v181 = vsel %vm180, %v179, %v177
    %182 = vrot.lane.b32.xlu0 %v181, 64
    %v183 = vpop.permute.xlu0 %182
    %vm184 = vcmask 130048
    %s185 = scalar_lea.vmem [#allocation0], 36
    %186 = vst.msk [vmem:[%s185] ss:$8 sm:$0xf] %vm184, %v183
    %s187 = scalar_lea.vmem [#allocation0], 68
    %188 = vst.msk [vmem:[%s187] ss:$8 sm:$0xf0] %vm184, %v183
    %v189 = vld [vmem:[#allocation2] ss:$8 sm:$0xf]
    %s190 = scalar_lea.vmem [#allocation2], 4294967265
    %v191 = vld [vmem:[%s190] ss:$8 sm:$0xf0]
    %vm192 = vcmask 1047556
    %v193 = vsel %vm192, %v191, %v189
    %194 = vrot.lane.b32.xlu0 %v193, 48
    %v195 = vpop.permute.xlu0 %194
    %vm196 = vcmask 130048
    %s197 = scalar_lea.vmem [#allocation0], 5
    %198 = vst.msk [vmem:[%s197] ss:$8 sm:$0xf] %vm196, %v195
    %s199 = scalar_lea.vmem [#allocation0], 37
    %200 = vst.msk [vmem:[%s199] ss:$8 sm:$0xf0] %vm196, %v195
    %s201 = scalar_lea.vmem [#allocation2], 32
    %v202 = vld [vmem:[%s201] ss:$8 sm:$0xf]
    %s203 = scalar_lea.vmem [#allocation2], 1
    %v204 = vld [vmem:[%s203] ss:$8 sm:$0xf0]
    %vm205 = vcmask 1047556
    %v206 = vsel %vm205, %v204, %v202
    %207 = vrot.lane.b32.xlu0 %v206, 48
    %v208 = vpop.permute.xlu0 %207
    %vm209 = vcmask 130048
    %s210 = scalar_lea.vmem [#allocation0], 37
    %211 = vst.msk [vmem:[%s210] ss:$8 sm:$0xf] %vm209, %v208
    %s212 = scalar_lea.vmem [#allocation0], 69
    %213 = vst.msk [vmem:[%s212] ss:$8 sm:$0xf0] %vm209, %v208
    %v214 = vld [vmem:[#allocation2] ss:$8 sm:$0xf]
    %s215 = scalar_lea.vmem [#allocation2], 4294967265
    %v216 = vld [vmem:[%s215] ss:$8 sm:$0xf0]
    %vm217 = vcmask 1047556
    %v218 = vsel %vm217, %v216, %v214
    %219 = vrot.lane.b32.xlu0 %v218, 32
    %v220 = vpop.permute.xlu0 %219
    %vm221 = vcmask 130048
    %s222 = scalar_lea.vmem [#allocation0], 6
    %223 = vst.msk [vmem:[%s222] ss:$8 sm:$0xf] %vm221, %v220
    %s224 = scalar_lea.vmem [#allocation0], 38
    %225 = vst.msk [vmem:[%s224] ss:$8 sm:$0xf0] %vm221, %v220
    %s226 = scalar_lea.vmem [#allocation2], 32
    %v227 = vld [vmem:[%s226] ss:$8 sm:$0xf]
    %s228 = scalar_lea.vmem [#allocation2], 1
    %v229 = vld [vmem:[%s228] ss:$8 sm:$0xf0]
    %vm230 = vcmask 1047556
    %v231 = vsel %vm230, %v229, %v227
    %232 = vrot.lane.b32.xlu0 %v231, 32
    %v233 = vpop.permute.xlu0 %232
    %vm234 = vcmask 130048
    %s235 = scalar_lea.vmem [#allocation0], 38
    %236 = vst.msk [vmem:[%s235] ss:$8 sm:$0xf] %vm234, %v233
    %s237 = scalar_lea.vmem [#allocation0], 70
    %238 = vst.msk [vmem:[%s237] ss:$8 sm:$0xf0] %vm234, %v233
    %v239 = vld [vmem:[#allocation2] ss:$8 sm:$0xf]
    %s240 = scalar_lea.vmem [#allocation2], 4294967265
    %v241 = vld [vmem:[%s240] ss:$8 sm:$0xf0]
    %vm242 = vcmask 1047556
    %v243 = vsel %vm242, %v241, %v239
    %244 = vrot.lane.b32.xlu0 %v243, 16
    %v245 = vpop.permute.xlu0 %244
    %vm246 = vcmask 130048
    %s247 = scalar_lea.vmem [#allocation0], 7
    %248 = vst.msk [vmem:[%s247] ss:$8 sm:$0xf] %vm246, %v245
    %s249 = scalar_lea.vmem [#allocation0], 39
    %250 = vst.msk [vmem:[%s249] ss:$8 sm:$0xf0] %vm246, %v245
    %s251 = scalar_lea.vmem [#allocation2], 32
    %v252 = vld [vmem:[%s251] ss:$8 sm:$0xf]
    %s253 = scalar_lea.vmem [#allocation2], 1
    %v254 = vld [vmem:[%s253] ss:$8 sm:$0xf0]
    %vm255 = vcmask 1047556
    %v256 = vsel %vm255, %v254, %v252
    %257 = vrot.lane.b32.xlu0 %v256, 16
    %v258 = vpop.permute.xlu0 %257
    %vm259 = vcmask 130048
    %s260 = scalar_lea.vmem [#allocation0], 39
    %261 = vst.msk [vmem:[%s260] ss:$8 sm:$0xf] %vm259, %v258
    %s262 = scalar_lea.vmem [#allocation0], 71
    %263 = vst.msk [vmem:[%s262] ss:$8 sm:$0xf0] %vm259, %v258
    %265 = vsyncadd [#allocation1], 0
    %s267 = sshll.u32 [#allocation0], 4
    %s268 = int_to_ptr.vmem [resolvable:$true] %s267
    %s269 = sshll.u32 %s1, 4
    %s270 = int_to_ptr.hbm [resolvable:$true] %s269
    %272 = dma.vmem_to_hbm [thread:$0]  %s268, 2048, %s270, [#allocation1]
    %274 = dma.done [#allocation1], 2048
    %275 = vsyncpa [#allocation1], 1

// kernel: resetgan_forward.1
$region0: #{resetgan_forward.1}
  #allocation0 [shape = 'u32[]', space=smem, size = 0x4, offset = 0x4, fixed_abs, tag = 'smem constant byte address 0x4 - core index']
  #allocation1 [shape = 'u32[72,128]{1,0:T(1,128)}', space=vmem, size = 0x9000, scoped, tag = 'internal scratch']
  %s0 = inlined_call_operand.vmem [shape: f32[4,1024], index: 0, kind: input, shape index: {}]
  %s1 = inlined_call_operand.vmem [shape: f32[2,8,32], index: 1, kind: input, shape index: {}]
  %s2 = inlined_call_operand.hbm [shape: bf16[1024,256], index: 2, kind: input, shape index: {}]
  %s3 = inlined_call_operand.vmem [shape: f32[1,256], index: 3, kind: input, shape index: {}]
  %s4 = inlined_call_operand.hbm [shape: bf16[256,1024], index: 4, kind: input, shape index: {}]
  %s5 = inlined_call_operand.vmem [shape: f32[1,1024], index: 5, kind: input, shape index: {}]
  %s6 = inlined_call_operand.vmem [shape: f32[1,256], index: 6, kind: input, shape index: {}]
  %s7 = inlined_call_operand.vmem [shape: f32[3,2,1024], index: 7, kind: output, shape index: {0}]
  %s8 = inlined_call_operand.vmem [shape: f32[3,2,256], index: 8, kind: output, shape index: {1}]
  %9 = xla_tuple %s7, %s8
  %s10 = sld [smem:[#allocation0]]
  $region54: #{resetgan_forward.1} parent=0
    _
  %s12 = ssub.s32 1, %s10
  %s13 = scalar_select 0, %s12, %s10
  $region1: #{resetgan_forward.1} parent=0
    #allocation2 [shape = 'u8[524288]{0}', space=vmem, size = 0x80000, scoped, tag = 'input window, operand 2, single buffered']
    #allocation3 [shape = 's32[1]{0}', space=sflag, size = 0x4, scoped, tag = 'scoped memory for resetgan_forward.1']
    #allocation4 [shape = 'u8[524288]{0}', space=vmem, size = 0x80000, scoped, tag = 'input window, operand 4, single buffered']
    #allocation5 [shape = 's32[1]{0}', space=sflag, size = 0x4, scoped, tag = 'scoped memory for resetgan_forward.1']
    %14 = vsyncpa [#allocation3], 0
    %15 = vsyncpa [#allocation5], 0
    // Predicated region
    $region2: #{resetgan_forward.1} parent=1 // pred_check
      _
    $region3: #{resetgan_forward.1} parent=1 // pred_check_branch
      %17 = sbr.rel (0) target = $region5
    $region4: #{resetgan_forward.1} parent=1 // pred_region
      _
    $region5: #{resetgan_forward.1} parent=1 // pred_fallthru
      _
    // Predicated region
    $region6: #{resetgan_forward.1} parent=1 // pred_check
      _
    $region7: #{resetgan_forward.1} parent=1 // pred_check_branch
      %19 = sbr.rel (0) target = $region9
    $region8: #{resetgan_forward.1} parent=1 // pred_region
      _
    $region9: #{resetgan_forward.1} parent=1 // pred_fallthru
      _
    // Predicated region
    $region10: #{resetgan_forward.1} parent=1 // pred_check
      _
    $region11: #{resetgan_forward.1} parent=1 // pred_check_branch
      %21 = sbr.rel (0) target = $region13
    $region12: #{resetgan_forward.1} parent=1 // pred_region
      %23 = vsyncadd [#allocation3], 0
      %s24 = sshll.u32 %s2, 4
      %s25 = int_to_ptr.hbm [resolvable:$true] %s24
      %s26 = sshll.u32 [#allocation2], 4
      %s27 = int_to_ptr.vmem [resolvable:$true] %s26
      %32 = dma.hbm_to_vmem [thread:$0]  %s25, 16384, %s27, [#allocation3], 128, 128, 8
    $region13: #{resetgan_forward.1} parent=1 // pred_fallthru
      _
    // Predicated region
    $region14: #{resetgan_forward.1} parent=1 // pred_check
      _
    $region15: #{resetgan_forward.1} parent=1 // pred_check_branch
      %34 = sbr.rel (0) target = $region17
    $region16: #{resetgan_forward.1} parent=1 // pred_region
      _
    $region17: #{resetgan_forward.1} parent=1 // pred_fallthru
      _
    // Predicated region
    $region18: #{resetgan_forward.1} parent=1 // pred_check
      _
    $region19: #{resetgan_forward.1} parent=1 // pred_check_branch
      %36 = sbr.rel (0) target = $region21
    $region20: #{resetgan_forward.1} parent=1 // pred_region
      %38 = vsyncadd [#allocation5], 0
      %s39 = sshll.u32 %s4, 4
      %s40 = int_to_ptr.hbm [resolvable:$true] %s39
      %s41 = sshll.u32 [#allocation4], 4
      %s42 = int_to_ptr.vmem [resolvable:$true] %s41
      %47 = dma.hbm_to_vmem [thread:$0]  %s40, 16384, %s42, [#allocation5], 512, 512, 32
    $region21: #{resetgan_forward.1} parent=1 // pred_fallthru
      _
    // Predicated region
    $region22: #{resetgan_forward.1} parent=1 // pred_check
      _
    $region23: #{resetgan_forward.1} parent=1 // pred_check_branch
      %49 = sbr.rel (0) target = $region25
    $region24: #{resetgan_forward.1} parent=1 // pred_region
      _
    $region25: #{resetgan_forward.1} parent=1 // pred_fallthru
      _
    // Predicated region
    $region26: #{resetgan_forward.1} parent=1 // pred_check
      _
    $region27: #{resetgan_forward.1} parent=1 // pred_check_branch
      %51 = sbr.rel (0) target = $region29
    $region28: #{resetgan_forward.1} parent=1 // pred_region
      _
    $region29: #{resetgan_forward.1} parent=1 // pred_fallthru
      _
    // Predicated region
    $region30: #{resetgan_forward.1} parent=1 // pred_check
      _
    $region31: #{resetgan_forward.1} parent=1 // pred_check_branch
      %53 = sbr.rel (0) target = $region33
    $region32: #{resetgan_forward.1} parent=1 // pred_region
      %55 = dma.done [#allocation3], 16384
    $region33: #{resetgan_forward.1} parent=1 // pred_fallthru
      _
    // Predicated region
    $region34: #{resetgan_forward.1} parent=1 // pred_check
      _
    $region35: #{resetgan_forward.1} parent=1 // pred_check_branch
      %57 = sbr.rel (0) target = $region37
    $region36: #{resetgan_forward.1} parent=1 // pred_region
      %59 = dma.done [#allocation5], 16384
    $region37: #{resetgan_forward.1} parent=1 // pred_fallthru
      _
    %v60 = vld [vmem:[#allocation2] sm:$0xff]
    %v61 = vld [vmem:[#allocation2 + $0x8] sm:$0xff]
    %v62 = vld [vmem:[#allocation2 + $0x10] sm:$0xff]
    %v63 = vld [vmem:[#allocation2 + $0x18] sm:$0xff]
    %v64 = vld [vmem:[#allocation2 + $0x20] sm:$0xff]
    %v65 = vld [vmem:[#allocation2 + $0x28] sm:$0xff]
    %v66 = vld [vmem:[#allocation2 + $0x30] sm:$0xff]
    %v67 = vld [vmem:[#allocation2 + $0x38] sm:$0xff]
    %v68 = vld [vmem:[#allocation2 + $0x40] sm:$0xff]
    %v69 = vld [vmem:[#allocation2 + $0x48] sm:$0xff]
    %v70 = vld [vmem:[#allocation2 + $0x50] sm:$0xff]
    %v71 = vld [vmem:[#allocation2 + $0x58] sm:$0xff]
    %v72 = vld [vmem:[#allocation2 + $0x60] sm:$0xff]
    %v73 = vld [vmem:[#allocation2 + $0x68] sm:$0xff]
    %v74 = vld [vmem:[#allocation2 + $0x70] sm:$0xff]
    %v75 = vld [vmem:[#allocation2 + $0x78] sm:$0xff]
    %v76 = vld [vmem:[#allocation2 + $0x80] sm:$0xff]
    %v77 = vld [vmem:[#allocation2 + $0x88] sm:$0xff]
    %v78 = vld [vmem:[#allocation2 + $0x90] sm:$0xff]
    %v79 = vld [vmem:[#allocation2 + $0x98] sm:$0xff]
    %v80 = vld [vmem:[#allocation2 + $0xa0] sm:$0xff]
    %v81 = vld [vmem:[#allocation2 + $0xa8] sm:$0xff]
    %v82 = vld [vmem:[#allocation2 + $0xb0] sm:$0xff]
    %v83 = vld [vmem:[#allocation2 + $0xb8] sm:$0xff]
    %v84 = vld [vmem:[#allocation2 + $0xc0] sm:$0xff]
    %v85 = vld [vmem:[#allocation2 + $0xc8] sm:$0xff]
    %v86 = vld [vmem:[#allocation2 + $0xd0] sm:$0xff]
    %v87 = vld [vmem:[#allocation2 + $0xd8] sm:$0xff]
    %v88 = vld [vmem:[#allocation2 + $0xe0] sm:$0xff]
    %v89 = vld [vmem:[#allocation2 + $0xe8] sm:$0xff]
    %v90 = vld [vmem:[#allocation2 + $0xf0] sm:$0xff]
    %v91 = vld [vmem:[#allocation2 + $0xf8] sm:$0xff]
    %v92 = vld [vmem:[#allocation2 + $0x100] sm:$0xff]
    %v93 = vld [vmem:[#allocation2 + $0x108] sm:$0xff]
    %v94 = vld [vmem:[#allocation2 + $0x110] sm:$0xff]
    %v95 = vld [vmem:[#allocation2 + $0x118] sm:$0xff]
    %v96 = vld [vmem:[#allocation2 + $0x120] sm:$0xff]
    %v97 = vld [vmem:[#allocation2 + $0x128] sm:$0xff]
    %v98 = vld [vmem:[#allocation2 + $0x130] sm:$0xff]
    %v99 = vld [vmem:[#allocation2 + $0x138] sm:$0xff]
    %v100 = vld [vmem:[#allocation2 + $0x140] sm:$0xff]
    %v101 = vld [vmem:[#allocation2 + $0x148] sm:$0xff]
    %v102 = vld [vmem:[#allocation2 + $0x150] sm:$0xff]
    %v103 = vld [vmem:[#allocation2 + $0x158] sm:$0xff]
    %v104 = vld [vmem:[#allocation2 + $0x160] sm:$0xff]
    %v105 = vld [vmem:[#allocation2 + $0x168] sm:$0xff]
    %v106 = vld [vmem:[#allocation2 + $0x170] sm:$0xff]
    %v107 = vld [vmem:[#allocation2 + $0x178] sm:$0xff]
    %v108 = vld [vmem:[#allocation2 + $0x180] sm:$0xff]
    %v109 = vld [vmem:[#allocation2 + $0x188] sm:$0xff]
    %v110 = vld [vmem:[#allocation2 + $0x190] sm:$0xff]
    %v111 = vld [vmem:[#allocation2 + $0x198] sm:$0xff]
    %v112 = vld [vmem:[#allocation2 + $0x1a0] sm:$0xff]
    %v113 = vld [vmem:[#allocation2 + $0x1a8] sm:$0xff]
    %v114 = vld [vmem:[#allocation2 + $0x1b0] sm:$0xff]
    %v115 = vld [vmem:[#allocation2 + $0x1b8] sm:$0xff]
    %v116 = vld [vmem:[#allocation2 + $0x1c0] sm:$0xff]
    %v117 = vld [vmem:[#allocation2 + $0x1c8] sm:$0xff]
    %v118 = vld [vmem:[#allocation2 + $0x1d0] sm:$0xff]
    %v119 = vld [vmem:[#allocation2 + $0x1d8] sm:$0xff]
    %v120 = vld [vmem:[#allocation2 + $0x1e0] sm:$0xff]
    %v121 = vld [vmem:[#allocation2 + $0x1e8] sm:$0xff]
    %v122 = vld [vmem:[#allocation2 + $0x1f0] sm:$0xff]
    %v123 = vld [vmem:[#allocation2 + $0x1f8] sm:$0xff]
    %v124 = vld [vmem:[#allocation2 + $0x200] sm:$0xff]
    %v125 = vld [vmem:[#allocation2 + $0x208] sm:$0xff]
    %v126 = vld [vmem:[#allocation2 + $0x210] sm:$0xff]
    %v127 = vld [vmem:[#allocation2 + $0x218] sm:$0xff]
    %v128 = vld [vmem:[#allocation2 + $0x220] sm:$0xff]
    %v129 = vld [vmem:[#allocation2 + $0x228] sm:$0xff]
    %v130 = vld [vmem:[#allocation2 + $0x230] sm:$0xff]
    %v131 = vld [vmem:[#allocation2 + $0x238] sm:$0xff]
    %v132 = vld [vmem:[#allocation2 + $0x240] sm:$0xff]
    %v133 = vld [vmem:[#allocation2 + $0x248] sm:$0xff]
    %v134 = vld [vmem:[#allocation2 + $0x250] sm:$0xff]
    %v135 = vld [vmem:[#allocation2 + $0x258] sm:$0xff]
    %v136 = vld [vmem:[#allocation2 + $0x260] sm:$0xff]
    %v137 = vld [vmem:[#allocation2 + $0x268] sm:$0xff]
    %v138 = vld [vmem:[#allocation2 + $0x270] sm:$0xff]
    %v139 = vld [vmem:[#allocation2 + $0x278] sm:$0xff]
    %v140 = vld [vmem:[#allocation2 + $0x280] sm:$0xff]
    %v141 = vld [vmem:[#allocation2 + $0x288] sm:$0xff]
    %v142 = vld [vmem:[#allocation2 + $0x290] sm:$0xff]
    %v143 = vld [vmem:[#allocation2 + $0x298] sm:$0xff]
    %v144 = vld [vmem:[#allocation2 + $0x2a0] sm:$0xff]
    %v145 = vld [vmem:[#allocation2 + $0x2a8] sm:$0xff]
    %v146 = vld [vmem:[#allocation2 + $0x2b0] sm:$0xff]
    %v147 = vld [vmem:[#allocation2 + $0x2b8] sm:$0xff]
    %v148 = vld [vmem:[#allocation2 + $0x2c0] sm:$0xff]
    %v149 = vld [vmem:[#allocation2 + $0x2c8] sm:$0xff]
    %v150 = vld [vmem:[#allocation2 + $0x2d0] sm:$0xff]
    %v151 = vld [vmem:[#allocation2 + $0x2d8] sm:$0xff]
    %v152 = vld [vmem:[#allocation2 + $0x2e0] sm:$0xff]
    %v153 = vld [vmem:[#allocation2 + $0x2e8] sm:$0xff]
    %v154 = vld [vmem:[#allocation2 + $0x2f0] sm:$0xff]
    %v155 = vld [vmem:[#allocation2 + $0x2f8] sm:$0xff]
    %v156 = vld [vmem:[#allocation2 + $0x300] sm:$0xff]
    %v157 = vld [vmem:[#allocation2 + $0x308] sm:$0xff]
    %v158 = vld [vmem:[#allocation2 + $0x310] sm:$0xff]
    %v159 = vld [vmem:[#allocation2 + $0x318] sm:$0xff]
    %v160 = vld [vmem:[#allocation2 + $0x320] sm:$0xff]
    %v161 = vld [vmem:[#allocation2 + $0x328] sm:$0xff]
    %v162 = vld [vmem:[#allocation2 + $0x330] sm:$0xff]
    %v163 = vld [vmem:[#allocation2 + $0x338] sm:$0xff]
    %v164 = vld [vmem:[#allocation2 + $0x340] sm:$0xff]
    %v165 = vld [vmem:[#allocation2 + $0x348] sm:$0xff]
    %v166 = vld [vmem:[#allocation2 + $0x350] sm:$0xff]
    %v167 = vld [vmem:[#allocation2 + $0x358] sm:$0xff]
    %v168 = vld [vmem:[#allocation2 + $0x360] sm:$0xff]
    %v169 = vld [vmem:[#allocation2 + $0x368] sm:$0xff]
    %v170 = vld [vmem:[#allocation2 + $0x370] sm:$0xff]
    %v171 = vld [vmem:[#allocation2 + $0x378] sm:$0xff]
    %v172 = vld [vmem:[#allocation2 + $0x380] sm:$0xff]
    %v173 = vld [vmem:[#allocation2 + $0x388] sm:$0xff]
    %v174 = vld [vmem:[#allocation2 + $0x390] sm:$0xff]
    %v175 = vld [vmem:[#allocation2 + $0x398] sm:$0xff]
    %v176 = vld [vmem:[#allocation2 + $0x3a0] sm:$0xff]
    %v177 = vld [vmem:[#allocation2 + $0x3a8] sm:$0xff]
    %v178 = vld [vmem:[#allocation2 + $0x3b0] sm:$0xff]
    %v179 = vld [vmem:[#allocation2 + $0x3b8] sm:$0xff]
    %v180 = vld [vmem:[#allocation2 + $0x3c0] sm:$0xff]
    %v181 = vld [vmem:[#allocation2 + $0x3c8] sm:$0xff]
    %v182 = vld [vmem:[#allocation2 + $0x3d0] sm:$0xff]
    %v183 = vld [vmem:[#allocation2 + $0x3d8] sm:$0xff]
    %v184 = vld [vmem:[#allocation2 + $0x3e0] sm:$0xff]
    %v185 = vld [vmem:[#allocation2 + $0x3e8] sm:$0xff]
    %v186 = vld [vmem:[#allocation2 + $0x3f0] sm:$0xff]
    %v187 = vld [vmem:[#allocation2 + $0x3f8] sm:$0xff]
    %v188 = vld [vmem:[%s3] sm:$0x3]
    %v189 = vld [vmem:[#allocation4] sm:$0xff]
    %v190 = vld [vmem:[#allocation4 + $0x8] sm:$0xff]
    %v191 = vld [vmem:[#allocation4 + $0x10] sm:$0xff]
    %v192 = vld [vmem:[#allocation4 + $0x18] sm:$0xff]
    %v193 = vld [vmem:[#allocation4 + $0x20] sm:$0xff]
    %v194 = vld [vmem:[#allocation4 + $0x28] sm:$0xff]
    %v195 = vld [vmem:[#allocation4 + $0x30] sm:$0xff]
    %v196 = vld [vmem:[#allocation4 + $0x38] sm:$0xff]
    %v197 = vld [vmem:[#allocation4 + $0x40] sm:$0xff]
    %v198 = vld [vmem:[#allocation4 + $0x48] sm:$0xff]
    %v199 = vld [vmem:[#allocation4 + $0x50] sm:$0xff]
    %v200 = vld [vmem:[#allocation4 + $0x58] sm:$0xff]
    %v201 = vld [vmem:[#allocation4 + $0x60] sm:$0xff]
    %v202 = vld [vmem:[#allocation4 + $0x68] sm:$0xff]
    %v203 = vld [vmem:[#allocation4 + $0x70] sm:$0xff]
    %v204 = vld [vmem:[#allocation4 + $0x78] sm:$0xff]
    %v205 = vld [vmem:[#allocation4 + $0x80] sm:$0xff]
    %v206 = vld [vmem:[#allocation4 + $0x88] sm:$0xff]
    %v207 = vld [vmem:[#allocation4 + $0x90] sm:$0xff]
    %v208 = vld [vmem:[#allocation4 + $0x98] sm:$0xff]
    %v209 = vld [vmem:[#allocation4 + $0xa0] sm:$0xff]
    %v210 = vld [vmem:[#allocation4 + $0xa8] sm:$0xff]
    %v211 = vld [vmem:[#allocation4 + $0xb0] sm:$0xff]
    %v212 = vld [vmem:[#allocation4 + $0xb8] sm:$0xff]
    %v213 = vld [vmem:[#allocation4 + $0xc0] sm:$0xff]
    %v214 = vld [vmem:[#allocation4 + $0xc8] sm:$0xff]
    %v215 = vld [vmem:[#allocation4 + $0xd0] sm:$0xff]
    %v216 = vld [vmem:[#allocation4 + $0xd8] sm:$0xff]
    %v217 = vld [vmem:[#allocation4 + $0xe0] sm:$0xff]
    %v218 = vld [vmem:[#allocation4 + $0xe8] sm:$0xff]
    %v219 = vld [vmem:[#allocation4 + $0xf0] sm:$0xff]
    %v220 = vld [vmem:[#allocation4 + $0xf8] sm:$0xff]
    %v221 = vld [vmem:[#allocation4 + $0x100] sm:$0xff]
    %v222 = vld [vmem:[#allocation4 + $0x108] sm:$0xff]
    %v223 = vld [vmem:[#allocation4 + $0x110] sm:$0xff]
    %v224 = vld [vmem:[#allocation4 + $0x118] sm:$0xff]
    %v225 = vld [vmem:[#allocation4 + $0x120] sm:$0xff]
    %v226 = vld [vmem:[#allocation4 + $0x128] sm:$0xff]
    %v227 = vld [vmem:[#allocation4 + $0x130] sm:$0xff]
    %v228 = vld [vmem:[#allocation4 + $0x138] sm:$0xff]
    %v229 = vld [vmem:[#allocation4 + $0x140] sm:$0xff]
    %v230 = vld [vmem:[#allocation4 + $0x148] sm:$0xff]
    %v231 = vld [vmem:[#allocation4 + $0x150] sm:$0xff]
    %v232 = vld [vmem:[#allocation4 + $0x158] sm:$0xff]
    %v233 = vld [vmem:[#allocation4 + $0x160] sm:$0xff]
    %v234 = vld [vmem:[#allocation4 + $0x168] sm:$0xff]
    %v235 = vld [vmem:[#allocation4 + $0x170] sm:$0xff]
    %v236 = vld [vmem:[#allocation4 + $0x178] sm:$0xff]
    %v237 = vld [vmem:[#allocation4 + $0x180] sm:$0xff]
    %v238 = vld [vmem:[#allocation4 + $0x188] sm:$0xff]
    %v239 = vld [vmem:[#allocation4 + $0x190] sm:$0xff]
    %v240 = vld [vmem:[#allocation4 + $0x198] sm:$0xff]
    %v241 = vld [vmem:[#allocation4 + $0x1a0] sm:$0xff]
    %v242 = vld [vmem:[#allocation4 + $0x1a8] sm:$0xff]
    %v243 = vld [vmem:[#allocation4 + $0x1b0] sm:$0xff]
    %v244 = vld [vmem:[#allocation4 + $0x1b8] sm:$0xff]
    %v245 = vld [vmem:[#allocation4 + $0x1c0] sm:$0xff]
    %v246 = vld [vmem:[#allocation4 + $0x1c8] sm:$0xff]
    %v247 = vld [vmem:[#allocation4 + $0x1d0] sm:$0xff]
    %v248 = vld [vmem:[#allocation4 + $0x1d8] sm:$0xff]
    %v249 = vld [vmem:[#allocation4 + $0x1e0] sm:$0xff]
    %v250 = vld [vmem:[#allocation4 + $0x1e8] sm:$0xff]
    %v251 = vld [vmem:[#allocation4 + $0x1f0] sm:$0xff]
    %v252 = vld [vmem:[#allocation4 + $0x1f8] sm:$0xff]
    %v253 = vld [vmem:[#allocation4 + $0x200] sm:$0xff]
    %v254 = vld [vmem:[#allocation4 + $0x208] sm:$0xff]
    %v255 = vld [vmem:[#allocation4 + $0x210] sm:$0xff]
    %v256 = vld [vmem:[#allocation4 + $0x218] sm:$0xff]
    %v257 = vld [vmem:[#allocation4 + $0x220] sm:$0xff]
    %v258 = vld [vmem:[#allocation4 + $0x228] sm:$0xff]
    %v259 = vld [vmem:[#allocation4 + $0x230] sm:$0xff]
    %v260 = vld [vmem:[#allocation4 + $0x238] sm:$0xff]
    %v261 = vld [vmem:[#allocation4 + $0x240] sm:$0xff]
    %v262 = vld [vmem:[#allocation4 + $0x248] sm:$0xff]
    %v263 = vld [vmem:[#allocation4 + $0x250] sm:$0xff]
    %v264 = vld [vmem:[#allocation4 + $0x258] sm:$0xff]
    %v265 = vld [vmem:[#allocation4 + $0x260] sm:$0xff]
    %v266 = vld [vmem:[#allocation4 + $0x268] sm:$0xff]
    %v267 = vld [vmem:[#allocation4 + $0x270] sm:$0xff]
    %v268 = vld [vmem:[#allocation4 + $0x278] sm:$0xff]
    %v269 = vld [vmem:[#allocation4 + $0x280] sm:$0xff]
    %v270 = vld [vmem:[#allocation4 + $0x288] sm:$0xff]
    %v271 = vld [vmem:[#allocation4 + $0x290] sm:$0xff]
    %v272 = vld [vmem:[#allocation4 + $0x298] sm:$0xff]
    %v273 = vld [vmem:[#allocation4 + $0x2a0] sm:$0xff]
    %v274 = vld [vmem:[#allocation4 + $0x2a8] sm:$0xff]
    %v275 = vld [vmem:[#allocation4 + $0x2b0] sm:$0xff]
    %v276 = vld [vmem:[#allocation4 + $0x2b8] sm:$0xff]
    %v277 = vld [vmem:[#allocation4 + $0x2c0] sm:$0xff]
    %v278 = vld [vmem:[#allocation4 + $0x2c8] sm:$0xff]
    %v279 = vld [vmem:[#allocation4 + $0x2d0] sm:$0xff]
    %v280 = vld [vmem:[#allocation4 + $0x2d8] sm:$0xff]
    %v281 = vld [vmem:[#allocation4 + $0x2e0] sm:$0xff]
    %v282 = vld [vmem:[#allocation4 + $0x2e8] sm:$0xff]
    %v283 = vld [vmem:[#allocation4 + $0x2f0] sm:$0xff]
    %v284 = vld [vmem:[#allocation4 + $0x2f8] sm:$0xff]
    %v285 = vld [vmem:[#allocation4 + $0x300] sm:$0xff]
    %v286 = vld [vmem:[#allocation4 + $0x308] sm:$0xff]
    %v287 = vld [vmem:[#allocation4 + $0x310] sm:$0xff]
    %v288 = vld [vmem:[#allocation4 + $0x318] sm:$0xff]
    %v289 = vld [vmem:[#allocation4 + $0x320] sm:$0xff]
    %v290 = vld [vmem:[#allocation4 + $0x328] sm:$0xff]
    %v291 = vld [vmem:[#allocation4 + $0x330] sm:$0xff]
    %v292 = vld [vmem:[#allocation4 + $0x338] sm:$0xff]
    %v293 = vld [vmem:[#allocation4 + $0x340] sm:$0xff]
    %v294 = vld [vmem:[#allocation4 + $0x348] sm:$0xff]
    %v295 = vld [vmem:[#allocation4 + $0x350] sm:$0xff]
    %v296 = vld [vmem:[#allocation4 + $0x358] sm:$0xff]
    %v297 = vld [vmem:[#allocation4 + $0x360] sm:$0xff]
    %v298 = vld [vmem:[#allocation4 + $0x368] sm:$0xff]
    %v299 = vld [vmem:[#allocation4 + $0x370] sm:$0xff]
    %v300 = vld [vmem:[#allocation4 + $0x378] sm:$0xff]
    %v301 = vld [vmem:[#allocation4 + $0x380] sm:$0xff]
    %v302 = vld [vmem:[#allocation4 + $0x388] sm:$0xff]
    %v303 = vld [vmem:[#allocation4 + $0x390] sm:$0xff]
    %v304 = vld [vmem:[#allocation4 + $0x398] sm:$0xff]
    %v305 = vld [vmem:[#allocation4 + $0x3a0] sm:$0xff]
    %v306 = vld [vmem:[#allocation4 + $0x3a8] sm:$0xff]
    %v307 = vld [vmem:[#allocation4 + $0x3b0] sm:$0xff]
    %v308 = vld [vmem:[#allocation4 + $0x3b8] sm:$0xff]
    %v309 = vld [vmem:[#allocation4 + $0x3c0] sm:$0xff]
    %v310 = vld [vmem:[#allocation4 + $0x3c8] sm:$0xff]
    %v311 = vld [vmem:[#allocation4 + $0x3d0] sm:$0xff]
    %v312 = vld [vmem:[#allocation4 + $0x3d8] sm:$0xff]
    %v313 = vld [vmem:[#allocation4 + $0x3e0] sm:$0xff]
    %v314 = vld [vmem:[#allocation4 + $0x3e8] sm:$0xff]
    %v315 = vld [vmem:[#allocation4 + $0x3f0] sm:$0xff]
    %v316 = vld [vmem:[#allocation4 + $0x3f8] sm:$0xff]
    %v317 = vld [vmem:[%s5] sm:$0xff]
    %v318 = vld [vmem:[%s6] sm:$0x3]
    %v319 = vld [vmem:[%s1] sm:$0xff]
    %v320 = vld [vmem:[%s1 + $0x8] sm:$0xff]
    %v321 = vld [vmem:[%s0] sm:$0xff]
    %v322 = vld [vmem:[%s0 + $0x8] sm:$0xff]
    %v323 = vld [vmem:[%s0 + $0x10] sm:$0xff]
    %v324 = vld [vmem:[%s0 + $0x18] sm:$0xff]
    %329 = vst [vmem:[#allocation1] ss:$2 sm:$0xff] %v321
    %s330 = scalar_lea.vmem [#allocation1], 16
    %331 = vst [vmem:[%s330] ss:$2 sm:$0xff] %v322
    %s332 = scalar_lea.vmem [#allocation1], 32
    %333 = vst [vmem:[%s332] ss:$2 sm:$0xff] %v323
    %s334 = scalar_lea.vmem [#allocation1], 48
    %335 = vst [vmem:[%s334] ss:$2 sm:$0xff] %v324
    %v336 = vld.sshfl [vmem:[#allocation1] sm:$0xff pattern:$0x75316420]
    %v337 = vld.sshfl [vmem:[#allocation1 + $0x8] sm:$0xff pattern:$0x75316420]
    %v338 = vld.sshfl [vmem:[#allocation1 + $0x10] sm:$0xff pattern:$0x75316420]
    %v339 = vld.sshfl [vmem:[#allocation1 + $0x18] sm:$0xff pattern:$0x75316420]
    %v340 = vld.sshfl [vmem:[#allocation1 + $0x20] sm:$0xff pattern:$0x75316420]
    %v341 = vld.sshfl [vmem:[#allocation1 + $0x28] sm:$0xff pattern:$0x75316420]
    %v342 = vld.sshfl [vmem:[#allocation1 + $0x30] sm:$0xff pattern:$0x75316420]
    %v343 = vld.sshfl [vmem:[#allocation1 + $0x38] sm:$0xff pattern:$0x75316420]
    %v352 = vpack.c.bf16 %v336, %v336
    %v353 = vpack.c.bf16 %v337, %v337
    %v354 = vpack.c.bf16 %v338, %v338
    %v355 = vpack.c.bf16 %v339, %v339
    %v356 = vpack.c.bf16 %v340, %v340
    %v357 = vpack.c.bf16 %v341, %v341
    %v358 = vpack.c.bf16 %v342, %v342
    %v359 = vpack.c.bf16 %v343, %v343
    %v361 = vperm.slane %v188, 0
    %v362 = vperm.slane %v188, 1
    %v493 = vunpack.c.l.b16 %v60
    %v494 = vunpack.c.h.b16 %v60
    %v495 = vunpack.c.l.b16 %v61
    %v496 = vunpack.c.h.b16 %v61
    %v497 = vunpack.c.l.b16 %v62
    %v498 = vunpack.c.h.b16 %v62
    %v499 = vunpack.c.l.b16 %v63
    %v500 = vunpack.c.h.b16 %v63
    %v501 = vunpack.c.l.b16 %v64
    %v502 = vunpack.c.h.b16 %v64
    %v503 = vunpack.c.l.b16 %v65
    %v504 = vunpack.c.h.b16 %v65
    %v505 = vunpack.c.l.b16 %v66
    %v506 = vunpack.c.h.b16 %v66
    %v507 = vunpack.c.l.b16 %v67
    %v508 = vunpack.c.h.b16 %v67
    %v509 = vunpack.c.l.b16 %v68
    %v510 = vunpack.c.h.b16 %v68
    %v511 = vunpack.c.l.b16 %v69
    %v512 = vunpack.c.h.b16 %v69
    %v513 = vunpack.c.l.b16 %v70
    %v514 = vunpack.c.h.b16 %v70
    %v515 = vunpack.c.l.b16 %v71
    %v516 = vunpack.c.h.b16 %v71
    %v517 = vunpack.c.l.b16 %v72
    %v518 = vunpack.c.h.b16 %v72
    %v519 = vunpack.c.l.b16 %v73
    %v520 = vunpack.c.h.b16 %v73
    %v521 = vunpack.c.l.b16 %v74
    %v522 = vunpack.c.h.b16 %v74
    %v523 = vunpack.c.l.b16 %v75
    %v524 = vunpack.c.h.b16 %v75
    %v525 = vunpack.c.l.b16 %v76
    %v526 = vunpack.c.h.b16 %v76
    %v527 = vunpack.c.l.b16 %v77
    %v528 = vunpack.c.h.b16 %v77
    %v529 = vunpack.c.l.b16 %v78
    %v530 = vunpack.c.h.b16 %v78
    %v531 = vunpack.c.l.b16 %v79
    %v532 = vunpack.c.h.b16 %v79
    %v533 = vunpack.c.l.b16 %v80
    %v534 = vunpack.c.h.b16 %v80
    %v535 = vunpack.c.l.b16 %v81
    %v536 = vunpack.c.h.b16 %v81
    %v537 = vunpack.c.l.b16 %v82
    %v538 = vunpack.c.h.b16 %v82
    %v539 = vunpack.c.l.b16 %v83
    %v540 = vunpack.c.h.b16 %v83
    %v541 = vunpack.c.l.b16 %v84
    %v542 = vunpack.c.h.b16 %v84
    %v543 = vunpack.c.l.b16 %v85
    %v544 = vunpack.c.h.b16 %v85
    %v545 = vunpack.c.l.b16 %v86
    %v546 = vunpack.c.h.b16 %v86
    %v547 = vunpack.c.l.b16 %v87
    %v548 = vunpack.c.h.b16 %v87
    %v549 = vunpack.c.l.b16 %v88
    %v550 = vunpack.c.h.b16 %v88
    %v551 = vunpack.c.l.b16 %v89
    %v552 = vunpack.c.h.b16 %v89
    %v553 = vunpack.c.l.b16 %v90
    %v554 = vunpack.c.h.b16 %v90
    %v555 = vunpack.c.l.b16 %v91
    %v556 = vunpack.c.h.b16 %v91
    %v557 = vunpack.c.l.b16 %v92
    %v558 = vunpack.c.h.b16 %v92
    %v559 = vunpack.c.l.b16 %v93
    %v560 = vunpack.c.h.b16 %v93
    %v561 = vunpack.c.l.b16 %v94
    %v562 = vunpack.c.h.b16 %v94
    %v563 = vunpack.c.l.b16 %v95
    %v564 = vunpack.c.h.b16 %v95
    %v565 = vunpack.c.l.b16 %v96
    %v566 = vunpack.c.h.b16 %v96
    %v567 = vunpack.c.l.b16 %v97
    %v568 = vunpack.c.h.b16 %v97
    %v569 = vunpack.c.l.b16 %v98
    %v570 = vunpack.c.h.b16 %v98
    %v571 = vunpack.c.l.b16 %v99
    %v572 = vunpack.c.h.b16 %v99
    %v573 = vunpack.c.l.b16 %v100
    %v574 = vunpack.c.h.b16 %v100
    %v575 = vunpack.c.l.b16 %v101
    %v576 = vunpack.c.h.b16 %v101
    %v577 = vunpack.c.l.b16 %v102
    %v578 = vunpack.c.h.b16 %v102
    %v579 = vunpack.c.l.b16 %v103
    %v580 = vunpack.c.h.b16 %v103
    %v581 = vunpack.c.l.b16 %v104
    %v582 = vunpack.c.h.b16 %v104
    %v583 = vunpack.c.l.b16 %v105
    %v584 = vunpack.c.h.b16 %v105
    %v585 = vunpack.c.l.b16 %v106
    %v586 = vunpack.c.h.b16 %v106
    %v587 = vunpack.c.l.b16 %v107
    %v588 = vunpack.c.h.b16 %v107
    %v589 = vunpack.c.l.b16 %v108
    %v590 = vunpack.c.h.b16 %v108
    %v591 = vunpack.c.l.b16 %v109
    %v592 = vunpack.c.h.b16 %v109
    %v593 = vunpack.c.l.b16 %v110
    %v594 = vunpack.c.h.b16 %v110
    %v595 = vunpack.c.l.b16 %v111
    %v596 = vunpack.c.h.b16 %v111
    %v597 = vunpack.c.l.b16 %v112
    %v598 = vunpack.c.h.b16 %v112
    %v599 = vunpack.c.l.b16 %v113
    %v600 = vunpack.c.h.b16 %v113
    %v601 = vunpack.c.l.b16 %v114
    %v602 = vunpack.c.h.b16 %v114
    %v603 = vunpack.c.l.b16 %v115
    %v604 = vunpack.c.h.b16 %v115
    %v605 = vunpack.c.l.b16 %v116
    %v606 = vunpack.c.h.b16 %v116
    %v607 = vunpack.c.l.b16 %v117
    %v608 = vunpack.c.h.b16 %v117
    %v609 = vunpack.c.l.b16 %v118
    %v610 = vunpack.c.h.b16 %v118
    %v611 = vunpack.c.l.b16 %v119
    %v612 = vunpack.c.h.b16 %v119
    %v613 = vunpack.c.l.b16 %v120
    %v614 = vunpack.c.h.b16 %v120
    %v615 = vunpack.c.l.b16 %v121
    %v616 = vunpack.c.h.b16 %v121
    %v617 = vunpack.c.l.b16 %v122
    %v618 = vunpack.c.h.b16 %v122
    %v619 = vunpack.c.l.b16 %v123
    %v620 = vunpack.c.h.b16 %v123
    %v621 = vunpack.c.l.b16 %v124
    %v622 = vunpack.c.h.b16 %v124
    %v623 = vunpack.c.l.b16 %v125
    %v624 = vunpack.c.h.b16 %v125
    %v625 = vunpack.c.l.b16 %v126
    %v626 = vunpack.c.h.b16 %v126
    %v627 = vunpack.c.l.b16 %v127
    %v628 = vunpack.c.h.b16 %v127
    %v629 = vunpack.c.l.b16 %v128
    %v630 = vunpack.c.h.b16 %v128
    %v631 = vunpack.c.l.b16 %v129
    %v632 = vunpack.c.h.b16 %v129
    %v633 = vunpack.c.l.b16 %v130
    %v634 = vunpack.c.h.b16 %v130
    %v635 = vunpack.c.l.b16 %v131
    %v636 = vunpack.c.h.b16 %v131
    %v637 = vunpack.c.l.b16 %v132
    %v638 = vunpack.c.h.b16 %v132
    %v639 = vunpack.c.l.b16 %v133
    %v640 = vunpack.c.h.b16 %v133
    %v641 = vunpack.c.l.b16 %v134
    %v642 = vunpack.c.h.b16 %v134
    %v643 = vunpack.c.l.b16 %v135
    %v644 = vunpack.c.h.b16 %v135
    %v645 = vunpack.c.l.b16 %v136
    %v646 = vunpack.c.h.b16 %v136
    %v647 = vunpack.c.l.b16 %v137
    %v648 = vunpack.c.h.b16 %v137
    %v649 = vunpack.c.l.b16 %v138
    %v650 = vunpack.c.h.b16 %v138
    %v651 = vunpack.c.l.b16 %v139
    %v652 = vunpack.c.h.b16 %v139
    %v653 = vunpack.c.l.b16 %v140
    %v654 = vunpack.c.h.b16 %v140
    %v655 = vunpack.c.l.b16 %v141
    %v656 = vunpack.c.h.b16 %v141
    %v657 = vunpack.c.l.b16 %v142
    %v658 = vunpack.c.h.b16 %v142
    %v659 = vunpack.c.l.b16 %v143
    %v660 = vunpack.c.h.b16 %v143
    %v661 = vunpack.c.l.b16 %v144
    %v662 = vunpack.c.h.b16 %v144
    %v663 = vunpack.c.l.b16 %v145
    %v664 = vunpack.c.h.b16 %v145
    %v665 = vunpack.c.l.b16 %v146
    %v666 = vunpack.c.h.b16 %v146
    %v667 = vunpack.c.l.b16 %v147
    %v668 = vunpack.c.h.b16 %v147
    %v669 = vunpack.c.l.b16 %v148
    %v670 = vunpack.c.h.b16 %v148
    %v671 = vunpack.c.l.b16 %v149
    %v672 = vunpack.c.h.b16 %v149
    %v673 = vunpack.c.l.b16 %v150
    %v674 = vunpack.c.h.b16 %v150
    %v675 = vunpack.c.l.b16 %v151
    %v676 = vunpack.c.h.b16 %v151
    %v677 = vunpack.c.l.b16 %v152
    %v678 = vunpack.c.h.b16 %v152
    %v679 = vunpack.c.l.b16 %v153
    %v680 = vunpack.c.h.b16 %v153
    %v681 = vunpack.c.l.b16 %v154
    %v682 = vunpack.c.h.b16 %v154
    %v683 = vunpack.c.l.b16 %v155
    %v684 = vunpack.c.h.b16 %v155
    %v685 = vunpack.c.l.b16 %v156
    %v686 = vunpack.c.h.b16 %v156
    %v687 = vunpack.c.l.b16 %v157
    %v688 = vunpack.c.h.b16 %v157
    %v689 = vunpack.c.l.b16 %v158
    %v690 = vunpack.c.h.b16 %v158
    %v691 = vunpack.c.l.b16 %v159
    %v692 = vunpack.c.h.b16 %v159
    %v693 = vunpack.c.l.b16 %v160
    %v694 = vunpack.c.h.b16 %v160
    %v695 = vunpack.c.l.b16 %v161
    %v696 = vunpack.c.h.b16 %v161
    %v697 = vunpack.c.l.b16 %v162
    %v698 = vunpack.c.h.b16 %v162
    %v699 = vunpack.c.l.b16 %v163
    %v700 = vunpack.c.h.b16 %v163
    %v701 = vunpack.c.l.b16 %v164
    %v702 = vunpack.c.h.b16 %v164
    %v703 = vunpack.c.l.b16 %v165
    %v704 = vunpack.c.h.b16 %v165
    %v705 = vunpack.c.l.b16 %v166
    %v706 = vunpack.c.h.b16 %v166
    %v707 = vunpack.c.l.b16 %v167
    %v708 = vunpack.c.h.b16 %v167
    %v709 = vunpack.c.l.b16 %v168
    %v710 = vunpack.c.h.b16 %v168
    %v711 = vunpack.c.l.b16 %v169
    %v712 = vunpack.c.h.b16 %v169
    %v713 = vunpack.c.l.b16 %v170
    %v714 = vunpack.c.h.b16 %v170
    %v715 = vunpack.c.l.b16 %v171
    %v716 = vunpack.c.h.b16 %v171
    %v717 = vunpack.c.l.b16 %v172
    %v718 = vunpack.c.h.b16 %v172
    %v719 = vunpack.c.l.b16 %v173
    %v720 = vunpack.c.h.b16 %v173
    %v721 = vunpack.c.l.b16 %v174
    %v722 = vunpack.c.h.b16 %v174
    %v723 = vunpack.c.l.b16 %v175
    %v724 = vunpack.c.h.b16 %v175
    %v725 = vunpack.c.l.b16 %v176
    %v726 = vunpack.c.h.b16 %v176
    %v727 = vunpack.c.l.b16 %v177
    %v728 = vunpack.c.h.b16 %v177
    %v729 = vunpack.c.l.b16 %v178
    %v730 = vunpack.c.h.b16 %v178
    %v731 = vunpack.c.l.b16 %v179
    %v732 = vunpack.c.h.b16 %v179
    %v733 = vunpack.c.l.b16 %v180
    %v734 = vunpack.c.h.b16 %v180
    %v735 = vunpack.c.l.b16 %v181
    %v736 = vunpack.c.h.b16 %v181
    %v737 = vunpack.c.l.b16 %v182
    %v738 = vunpack.c.h.b16 %v182
    %v739 = vunpack.c.l.b16 %v183
    %v740 = vunpack.c.h.b16 %v183
    %v741 = vunpack.c.l.b16 %v184
    %v742 = vunpack.c.h.b16 %v184
    %v743 = vunpack.c.l.b16 %v185
    %v744 = vunpack.c.h.b16 %v185
    %v745 = vunpack.c.l.b16 %v186
    %v746 = vunpack.c.h.b16 %v186
    %v747 = vunpack.c.l.b16 %v187
    %v748 = vunpack.c.h.b16 %v187
    %v749 = vpack.c.b16 %v495, %v493
    %v750 = vpack.c.b16 %v496, %v494
    %v751 = vpack.c.b16 %v499, %v497
    %v752 = vpack.c.b16 %v500, %v498
    %v753 = vpack.c.b16 %v503, %v501
    %v754 = vpack.c.b16 %v504, %v502
    %v755 = vpack.c.b16 %v507, %v505
    %v756 = vpack.c.b16 %v508, %v506
    %v757 = vpack.c.b16 %v511, %v509
    %v758 = vpack.c.b16 %v512, %v510
    %v759 = vpack.c.b16 %v515, %v513
    %v760 = vpack.c.b16 %v516, %v514
    %v761 = vpack.c.b16 %v519, %v517
    %v762 = vpack.c.b16 %v520, %v518
    %v763 = vpack.c.b16 %v523, %v521
    %v764 = vpack.c.b16 %v524, %v522
    %v765 = vpack.c.b16 %v527, %v525
    %v766 = vpack.c.b16 %v528, %v526
    %v767 = vpack.c.b16 %v531, %v529
    %v768 = vpack.c.b16 %v532, %v530
    %v769 = vpack.c.b16 %v535, %v533
    %v770 = vpack.c.b16 %v536, %v534
    %v771 = vpack.c.b16 %v539, %v537
    %v772 = vpack.c.b16 %v540, %v538
    %v773 = vpack.c.b16 %v543, %v541
    %v774 = vpack.c.b16 %v544, %v542
    %v775 = vpack.c.b16 %v547, %v545
    %v776 = vpack.c.b16 %v548, %v546
    %v777 = vpack.c.b16 %v551, %v549
    %v778 = vpack.c.b16 %v552, %v550
    %v779 = vpack.c.b16 %v555, %v553
    %v780 = vpack.c.b16 %v556, %v554
    %v781 = vpack.c.b16 %v559, %v557
    %v782 = vpack.c.b16 %v560, %v558
    %v783 = vpack.c.b16 %v563, %v561
    %v784 = vpack.c.b16 %v564, %v562
    %v785 = vpack.c.b16 %v567, %v565
    %v786 = vpack.c.b16 %v568, %v566
    %v787 = vpack.c.b16 %v571, %v569
    %v788 = vpack.c.b16 %v572, %v570
    %v789 = vpack.c.b16 %v575, %v573
    %v790 = vpack.c.b16 %v576, %v574
    %v791 = vpack.c.b16 %v579, %v577
    %v792 = vpack.c.b16 %v580, %v578
    %v793 = vpack.c.b16 %v583, %v581
    %v794 = vpack.c.b16 %v584, %v582
    %v795 = vpack.c.b16 %v587, %v585
    %v796 = vpack.c.b16 %v588, %v586
    %v797 = vpack.c.b16 %v591, %v589
    %v798 = vpack.c.b16 %v592, %v590
    %v799 = vpack.c.b16 %v595, %v593
    %v800 = vpack.c.b16 %v596, %v594
    %v801 = vpack.c.b16 %v599, %v597
    %v802 = vpack.c.b16 %v600, %v598
    %v803 = vpack.c.b16 %v603, %v601
    %v804 = vpack.c.b16 %v604, %v602
    %v805 = vpack.c.b16 %v607, %v605
    %v806 = vpack.c.b16 %v608, %v606
    %v807 = vpack.c.b16 %v611, %v609
    %v808 = vpack.c.b16 %v612, %v610
    %v809 = vpack.c.b16 %v615, %v613
    %v810 = vpack.c.b16 %v616, %v614
    %v811 = vpack.c.b16 %v619, %v617
    %v812 = vpack.c.b16 %v620, %v618
    %v813 = vpack.c.b16 %v623, %v621
    %v814 = vpack.c.b16 %v624, %v622
    %v815 = vpack.c.b16 %v627, %v625
    %v816 = vpack.c.b16 %v628, %v626
    %v817 = vpack.c.b16 %v631, %v629
    %v818 = vpack.c.b16 %v632, %v630
    %v819 = vpack.c.b16 %v635, %v633
    %v820 = vpack.c.b16 %v636, %v634
    %v821 = vpack.c.b16 %v639, %v637
    %v822 = vpack.c.b16 %v640, %v638
    %v823 = vpack.c.b16 %v643, %v641
    %v824 = vpack.c.b16 %v644, %v642
    %v825 = vpack.c.b16 %v647, %v645
    %v826 = vpack.c.b16 %v648, %v646
    %v827 = vpack.c.b16 %v651, %v649
    %v828 = vpack.c.b16 %v652, %v650
    %v829 = vpack.c.b16 %v655, %v653
    %v830 = vpack.c.b16 %v656, %v654
    %v831 = vpack.c.b16 %v659, %v657
    %v832 = vpack.c.b16 %v660, %v658
    %v833 = vpack.c.b16 %v663, %v661
    %v834 = vpack.c.b16 %v664, %v662
    %v835 = vpack.c.b16 %v667, %v665
    %v836 = vpack.c.b16 %v668, %v666
    %v837 = vpack.c.b16 %v671, %v669
    %v838 = vpack.c.b16 %v672, %v670
    %v839 = vpack.c.b16 %v675, %v673
    %v840 = vpack.c.b16 %v676, %v674
    %v841 = vpack.c.b16 %v679, %v677
    %v842 = vpack.c.b16 %v680, %v678
    %v843 = vpack.c.b16 %v683, %v681
    %v844 = vpack.c.b16 %v684, %v682
    %v845 = vpack.c.b16 %v687, %v685
    %v846 = vpack.c.b16 %v688, %v686
    %v847 = vpack.c.b16 %v691, %v689
    %v848 = vpack.c.b16 %v692, %v690
    %v849 = vpack.c.b16 %v695, %v693
    %v850 = vpack.c.b16 %v696, %v694
    %v851 = vpack.c.b16 %v699, %v697
    %v852 = vpack.c.b16 %v700, %v698
    %v853 = vpack.c.b16 %v703, %v701
    %v854 = vpack.c.b16 %v704, %v702
    %v855 = vpack.c.b16 %v707, %v705
    %v856 = vpack.c.b16 %v708, %v706
    %v857 = vpack.c.b16 %v711, %v709
    %v858 = vpack.c.b16 %v712, %v710
    %v859 = vpack.c.b16 %v715, %v713
    %v860 = vpack.c.b16 %v716, %v714
    %v861 = vpack.c.b16 %v719, %v717
    %v862 = vpack.c.b16 %v720, %v718
    %v863 = vpack.c.b16 %v723, %v721
    %v864 = vpack.c.b16 %v724, %v722
    %v865 = vpack.c.b16 %v727, %v725
    %v866 = vpack.c.b16 %v728, %v726
    %v867 = vpack.c.b16 %v731, %v729
    %v868 = vpack.c.b16 %v732, %v730
    %v869 = vpack.c.b16 %v735, %v733
    %v870 = vpack.c.b16 %v736, %v734
    %v871 = vpack.c.b16 %v739, %v737
    %v872 = vpack.c.b16 %v740, %v738
    %v873 = vpack.c.b16 %v743, %v741
    %v874 = vpack.c.b16 %v744, %v742
    %v875 = vpack.c.b16 %v747, %v745
    %v876 = vpack.c.b16 %v748, %v746
    %1005 = vmatpush.bf16.msra.mxu0 %v763
    %1006 = vmatpush.bf16.msra.mxu0 %v761
    %1007 = vmatpush.bf16.msra.mxu0 %v759
    %1008 = vmatpush.bf16.msra.mxu0 %v757
    %1009 = vmatpush.bf16.msra.mxu0 %v755
    %1010 = vmatpush.bf16.msra.mxu0 %v753
    %1011 = vmatpush.bf16.msra.mxu0 %v751
    %1012 = vmatpush.bf16.msra.mxu0 %v749
    %1013 = vmatmul.bf16.gmra.mxu0 %v352
    %v1014 = vpop.f32.mrf.mxu0
    %v1015 = vadd.f32 %v361, %v1014
    %v1016 = vpop.f32.mrf.mxu0
    %1017 = vdwg.mxu0
    %1018 = vmatpush.bf16.msra.mxu0 %v779
    %1019 = vmatpush.bf16.msra.mxu0 %v777
    %1020 = vmatpush.bf16.msra.mxu0 %v775
    %1021 = vmatpush.bf16.msra.mxu0 %v773
    %1022 = vmatpush.bf16.msra.mxu0 %v771
    %1023 = vmatpush.bf16.msra.mxu0 %v769
    %1024 = vmatpush.bf16.msra.mxu0 %v767
    %1025 = vmatpush.bf16.msra.mxu0 %v765
    %1026 = vmatmul.bf16.gmra.mxu0 %v353
    %v1027 = vpop.f32.mrf.mxu0
    %v1028 = vadd.f32 %v1015, %v1027
    %v1029 = vpop.f32.mrf.mxu0
    %1030 = vdwg.mxu0
    %1031 = vmatpush.bf16.msra.mxu0 %v795
    %1032 = vmatpush.bf16.msra.mxu0 %v793
    %1033 = vmatpush.bf16.msra.mxu0 %v791
    %1034 = vmatpush.bf16.msra.mxu0 %v789
    %1035 = vmatpush.bf16.msra.mxu0 %v787
    %1036 = vmatpush.bf16.msra.mxu0 %v785
    %1037 = vmatpush.bf16.msra.mxu0 %v783
    %1038 = vmatpush.bf16.msra.mxu0 %v781
    %1039 = vmatmul.bf16.gmra.mxu0 %v354
    %v1040 = vpop.f32.mrf.mxu0
    %v1041 = vadd.f32 %v1028, %v1040
    %v1042 = vpop.f32.mrf.mxu0
    %1043 = vdwg.mxu0
    %1044 = vmatpush.bf16.msra.mxu0 %v811
    %1045 = vmatpush.bf16.msra.mxu0 %v809
    %1046 = vmatpush.bf16.msra.mxu0 %v807
    %1047 = vmatpush.bf16.msra.mxu0 %v805
    %1048 = vmatpush.bf16.msra.mxu0 %v803
    %1049 = vmatpush.bf16.msra.mxu0 %v801
    %1050 = vmatpush.bf16.msra.mxu0 %v799
    %1051 = vmatpush.bf16.msra.mxu0 %v797
    %1052 = vmatmul.bf16.gmra.mxu0 %v355
    %v1053 = vpop.f32.mrf.mxu0
    %v1054 = vadd.f32 %v1041, %v1053
    %v1055 = vpop.f32.mrf.mxu0
    %1056 = vdwg.mxu0
    %1057 = vmatpush.bf16.msra.mxu0 %v827
    %1058 = vmatpush.bf16.msra.mxu0 %v825
    %1059 = vmatpush.bf16.msra.mxu0 %v823
    %1060 = vmatpush.bf16.msra.mxu0 %v821
    %1061 = vmatpush.bf16.msra.mxu0 %v819
    %1062 = vmatpush.bf16.msra.mxu0 %v817
    %1063 = vmatpush.bf16.msra.mxu0 %v815
    %1064 = vmatpush.bf16.msra.mxu0 %v813
    %1065 = vmatmul.bf16.gmra.mxu0 %v356
    %v1066 = vpop.f32.mrf.mxu0
    %v1067 = vadd.f32 %v1054, %v1066
    %v1068 = vpop.f32.mrf.mxu0
    %1069 = vdwg.mxu0
    %1070 = vmatpush.bf16.msra.mxu0 %v843
    %1071 = vmatpush.bf16.msra.mxu0 %v841
    %1072 = vmatpush.bf16.msra.mxu0 %v839
    %1073 = vmatpush.bf16.msra.mxu0 %v837
    %1074 = vmatpush.bf16.msra.mxu0 %v835
    %1075 = vmatpush.bf16.msra.mxu0 %v833
    %1076 = vmatpush.bf16.msra.mxu0 %v831
    %1077 = vmatpush.bf16.msra.mxu0 %v829
    %1078 = vmatmul.bf16.gmra.mxu0 %v357
    %v1079 = vpop.f32.mrf.mxu0
    %v1080 = vadd.f32 %v1067, %v1079
    %v1081 = vpop.f32.mrf.mxu0
    %1082 = vdwg.mxu0
    %1083 = vmatpush.bf16.msra.mxu0 %v859
    %1084 = vmatpush.bf16.msra.mxu0 %v857
    %1085 = vmatpush.bf16.msra.mxu0 %v855
    %1086 = vmatpush.bf16.msra.mxu0 %v853
    %1087 = vmatpush.bf16.msra.mxu0 %v851
    %1088 = vmatpush.bf16.msra.mxu0 %v849
    %1089 = vmatpush.bf16.msra.mxu0 %v847
    %1090 = vmatpush.bf16.msra.mxu0 %v845
    %1091 = vmatmul.bf16.gmra.mxu0 %v358
    %v1092 = vpop.f32.mrf.mxu0
    %v1093 = vadd.f32 %v1080, %v1092
    %v1094 = vpop.f32.mrf.mxu0
    %1095 = vdwg.mxu0
    %1096 = vmatpush.bf16.msra.mxu0 %v875
    %1097 = vmatpush.bf16.msra.mxu0 %v873
    %1098 = vmatpush.bf16.msra.mxu0 %v871
    %1099 = vmatpush.bf16.msra.mxu0 %v869
    %1100 = vmatpush.bf16.msra.mxu0 %v867
    %1101 = vmatpush.bf16.msra.mxu0 %v865
    %1102 = vmatpush.bf16.msra.mxu0 %v863
    %1103 = vmatpush.bf16.msra.mxu0 %v861
    %1104 = vmatmul.bf16.gmra.mxu0 %v359
    %v1105 = vpop.f32.mrf.mxu0
    %v1106 = vadd.f32 %v1093, %v1105
    %v1107 = vpop.f32.mrf.mxu0
    %1108 = vdwg.mxu0
    %1109 = vmatpush.bf16.msra.mxu0 %v764
    %1110 = vmatpush.bf16.msra.mxu0 %v762
    %1111 = vmatpush.bf16.msra.mxu0 %v760
    %1112 = vmatpush.bf16.msra.mxu0 %v758
    %1113 = vmatpush.bf16.msra.mxu0 %v756
    %1114 = vmatpush.bf16.msra.mxu0 %v754
    %1115 = vmatpush.bf16.msra.mxu0 %v752
    %1116 = vmatpush.bf16.msra.mxu0 %v750
    %1117 = vmatmul.bf16.gmra.mxu0 %v352
    %v1118 = vpop.f32.mrf.mxu0
    %v1119 = vadd.f32 %v362, %v1118
    %v1120 = vpop.f32.mrf.mxu0
    %1121 = vdwg.mxu0
    %1122 = vmatpush.bf16.msra.mxu0 %v780
    %1123 = vmatpush.bf16.msra.mxu0 %v778
    %1124 = vmatpush.bf16.msra.mxu0 %v776
    %1125 = vmatpush.bf16.msra.mxu0 %v774
    %1126 = vmatpush.bf16.msra.mxu0 %v772
    %1127 = vmatpush.bf16.msra.mxu0 %v770
    %1128 = vmatpush.bf16.msra.mxu0 %v768
    %1129 = vmatpush.bf16.msra.mxu0 %v766
    %1130 = vmatmul.bf16.gmra.mxu0 %v353
    %v1131 = vpop.f32.mrf.mxu0
    %v1132 = vadd.f32 %v1119, %v1131
    %v1133 = vpop.f32.mrf.mxu0
    %1134 = vdwg.mxu0
    %1135 = vmatpush.bf16.msra.mxu0 %v796
    %1136 = vmatpush.bf16.msra.mxu0 %v794
    %1137 = vmatpush.bf16.msra.mxu0 %v792
    %1138 = vmatpush.bf16.msra.mxu0 %v790
    %1139 = vmatpush.bf16.msra.mxu0 %v788
    %1140 = vmatpush.bf16.msra.mxu0 %v786
    %1141 = vmatpush.bf16.msra.mxu0 %v784
    %1142 = vmatpush.bf16.msra.mxu0 %v782
    %1143 = vmatmul.bf16.gmra.mxu0 %v354
    %v1144 = vpop.f32.mrf.mxu0
    %v1145 = vadd.f32 %v1132, %v1144
    %v1146 = vpop.f32.mrf.mxu0
    %1147 = vdwg.mxu0
    %1148 = vmatpush.bf16.msra.mxu0 %v812
    %1149 = vmatpush.bf16.msra.mxu0 %v810
    %1150 = vmatpush.bf16.msra.mxu0 %v808
    %1151 = vmatpush.bf16.msra.mxu0 %v806
    %1152 = vmatpush.bf16.msra.mxu0 %v804
    %1153 = vmatpush.bf16.msra.mxu0 %v802
    %1154 = vmatpush.bf16.msra.mxu0 %v800
    %1155 = vmatpush.bf16.msra.mxu0 %v798
    %1156 = vmatmul.bf16.gmra.mxu0 %v355
    %v1157 = vpop.f32.mrf.mxu0
    %v1158 = vadd.f32 %v1145, %v1157
    %v1159 = vpop.f32.mrf.mxu0
    %1160 = vdwg.mxu0
    %1161 = vmatpush.bf16.msra.mxu0 %v828
    %1162 = vmatpush.bf16.msra.mxu0 %v826
    %1163 = vmatpush.bf16.msra.mxu0 %v824
    %1164 = vmatpush.bf16.msra.mxu0 %v822
    %1165 = vmatpush.bf16.msra.mxu0 %v820
    %1166 = vmatpush.bf16.msra.mxu0 %v818
    %1167 = vmatpush.bf16.msra.mxu0 %v816
    %1168 = vmatpush.bf16.msra.mxu0 %v814
    %1169 = vmatmul.bf16.gmra.mxu0 %v356
    %v1170 = vpop.f32.mrf.mxu0
    %v1171 = vadd.f32 %v1158, %v1170
    %v1172 = vpop.f32.mrf.mxu0
    %1173 = vdwg.mxu0
    %1174 = vmatpush.bf16.msra.mxu0 %v844
    %1175 = vmatpush.bf16.msra.mxu0 %v842
    %1176 = vmatpush.bf16.msra.mxu0 %v840
    %1177 = vmatpush.bf16.msra.mxu0 %v838
    %1178 = vmatpush.bf16.msra.mxu0 %v836
    %1179 = vmatpush.bf16.msra.mxu0 %v834
    %1180 = vmatpush.bf16.msra.mxu0 %v832
    %1181 = vmatpush.bf16.msra.mxu0 %v830
    %1182 = vmatmul.bf16.gmra.mxu0 %v357
    %v1183 = vpop.f32.mrf.mxu0
    %v1184 = vadd.f32 %v1171, %v1183
    %v1185 = vpop.f32.mrf.mxu0
    %1186 = vdwg.mxu0
    %1187 = vmatpush.bf16.msra.mxu0 %v860
    %1188 = vmatpush.bf16.msra.mxu0 %v858
    %1189 = vmatpush.bf16.msra.mxu0 %v856
    %1190 = vmatpush.bf16.msra.mxu0 %v854
    %1191 = vmatpush.bf16.msra.mxu0 %v852
    %1192 = vmatpush.bf16.msra.mxu0 %v850
    %1193 = vmatpush.bf16.msra.mxu0 %v848
    %1194 = vmatpush.bf16.msra.mxu0 %v846
    %1195 = vmatmul.bf16.gmra.mxu0 %v358
    %v1196 = vpop.f32.mrf.mxu0
    %v1197 = vadd.f32 %v1184, %v1196
    %v1198 = vpop.f32.mrf.mxu0
    %1199 = vdwg.mxu0
    %1200 = vmatpush.bf16.msra.mxu0 %v876
    %1201 = vmatpush.bf16.msra.mxu0 %v874
    %1202 = vmatpush.bf16.msra.mxu0 %v872
    %1203 = vmatpush.bf16.msra.mxu0 %v870
    %1204 = vmatpush.bf16.msra.mxu0 %v868
    %1205 = vmatpush.bf16.msra.mxu0 %v866
    %1206 = vmatpush.bf16.msra.mxu0 %v864
    %1207 = vmatpush.bf16.msra.mxu0 %v862
    %1208 = vmatmul.bf16.gmra.mxu0 %v359
    %v1209 = vpop.f32.mrf.mxu0
    %v1210 = vadd.f32 %v1197, %v1209
    %v1211 = vpop.f32.mrf.mxu0
    %1212 = vdwg.mxu0
    %v1214 = vperm.slane %v318, 0
    %v1215 = vperm.slane %v318, 1
    %v1218 = vadd.f32 %v1214, %v1106
    %v1219 = vadd.f32 %v1215, %v1210
    %1222 = vst.sshfl [vmem:[#allocation1] sm:$0xff pattern:$0x73625140] %v1218
    %1223 = vst.sshfl [vmem:[#allocation1 + $0x8] sm:$0xff pattern:$0x73625140] %v1219
    %s1224 = scalar_lea.vmem [#allocation1], 1
    %v1225 = vld [vmem:[%s1224] ss:$4 sm:$0xff]
    %1227 = vst [vmem:[%s8] sm:$0xf] %v1225
    %1228 = vst [vmem:[#allocation1] sm:$0xff] %v1218
    %s1229 = scalar_lea.vmem [#allocation1], 2
    %v1230 = vld [vmem:[%s1229] ss:$9 sm:$0xff]
    %s1231 = scalar_lea.vmem [#allocation1], 3
    %v1232 = vld [vmem:[%s1231] ss:$9 sm:$0xff]
    %1235 = vst [vmem:[#allocation1] sm:$0xff] %v1218
    %s1236 = scalar_lea.vmem [#allocation1], 2
    %v1237 = vld [vmem:[%s1236] ss:$9 sm:$0xff]
    %s1238 = scalar_lea.vmem [#allocation1], 3
    %v1239 = vld [vmem:[%s1238] ss:$9 sm:$0xff]
    %1240 = vst [vmem:[#allocation1] sm:$0xff] %v1218
    %s1241 = scalar_lea.vmem [#allocation1], 2
    %v1242 = vld [vmem:[%s1241] ss:$9 sm:$0xff]
    %s1243 = scalar_lea.vmem [#allocation1], 3
    %v1244 = vld [vmem:[%s1243] ss:$9 sm:$0xff]
    %1245 = vst [vmem:[#allocation1] sm:$0xff] %v1218
    %s1246 = scalar_lea.vmem [#allocation1], 2
    %v1247 = vld [vmem:[%s1246] ss:$9 sm:$0xff]
    %s1248 = scalar_lea.vmem [#allocation1], 3
    %v1249 = vld [vmem:[%s1248] ss:$9 sm:$0xff]
    %1250 = vst [vmem:[#allocation1] sm:$0xff] %v1219
    %s1251 = scalar_lea.vmem [#allocation1], 2
    %v1252 = vld [vmem:[%s1251] ss:$9 sm:$0xff]
    %s1253 = scalar_lea.vmem [#allocation1], 3
    %v1254 = vld [vmem:[%s1253] ss:$9 sm:$0xff]
    %1255 = vst [vmem:[#allocation1] sm:$0xff] %v1219
    %s1256 = scalar_lea.vmem [#allocation1], 2
    %v1257 = vld [vmem:[%s1256] ss:$9 sm:$0xff]
    %s1258 = scalar_lea.vmem [#allocation1], 3
    %v1259 = vld [vmem:[%s1258] ss:$9 sm:$0xff]
    %1260 = vst [vmem:[#allocation1] sm:$0xff] %v1219
    %s1261 = scalar_lea.vmem [#allocation1], 2
    %v1262 = vld [vmem:[%s1261] ss:$9 sm:$0xff]
    %s1263 = scalar_lea.vmem [#allocation1], 3
    %v1264 = vld [vmem:[%s1263] ss:$9 sm:$0xff]
    %1265 = vst [vmem:[#allocation1] sm:$0xff] %v1219
    %s1266 = scalar_lea.vmem [#allocation1], 2
    %v1267 = vld [vmem:[%s1266] ss:$9 sm:$0xff]
    %s1268 = scalar_lea.vmem [#allocation1], 3
    %v1269 = vld [vmem:[%s1268] ss:$9 sm:$0xff]
    %v1270 = vperm.slane %v1237, 0
    %v1271 = vperm.slane %v1239, 0
    %1272 = vrot.lane.b32.xlu0 %v1270, 96
    %v1273 = vpop.permute.xlu0 %1272
    %1274 = vrot.lane.b32.xlu0 %v1271, 96
    %v1275 = vpop.permute.xlu0 %1274
    %v1278 = vperm.slane %v1242, 0
    %v1279 = vperm.slane %v1244, 0
    %1280 = vrot.lane.b32.xlu0 %v1278, 64
    %v1281 = vpop.permute.xlu0 %1280
    %1282 = vrot.lane.b32.xlu0 %v1279, 64
    %v1283 = vpop.permute.xlu0 %1282
    %v1286 = vperm.slane %v1247, 0
    %v1287 = vperm.slane %v1249, 0
    %1288 = vrot.lane.b32.xlu0 %v1286, 32
    %v1289 = vpop.permute.xlu0 %1288
    %1290 = vrot.lane.b32.xlu0 %v1287, 32
    %v1291 = vpop.permute.xlu0 %1290
    %v1294 = vperm.slane %v1252, 0
    %v1295 = vperm.slane %v1254, 0
    %v1298 = vperm.slane %v1257, 0
    %v1299 = vperm.slane %v1259, 0
    %1300 = vrot.lane.b32.xlu0 %v1298, 96
    %v1301 = vpop.permute.xlu0 %1300
    %1302 = vrot.lane.b32.xlu0 %v1299, 96
    %v1303 = vpop.permute.xlu0 %1302
    %v1306 = vperm.slane %v1262, 0
    %v1307 = vperm.slane %v1264, 0
    %1308 = vrot.lane.b32.xlu0 %v1306, 64
    %v1309 = vpop.permute.xlu0 %1308
    %1310 = vrot.lane.b32.xlu0 %v1307, 64
    %v1311 = vpop.permute.xlu0 %1310
    %v1314 = vperm.slane %v1267, 0
    %v1315 = vperm.slane %v1269, 0
    %1316 = vrot.lane.b32.xlu0 %v1314, 32
    %v1317 = vpop.permute.xlu0 %1316
    %1318 = vrot.lane.b32.xlu0 %v1315, 32
    %v1319 = vpop.permute.xlu0 %1318
    %vm1322 = vcmask 1040384
    %v1323 = vsel %vm1322, %v1230, %v1273
    %v1324 = vsel %vm1322, %v1232, %v1275
    %vm1325 = vcmask 1041408
    %v1326 = vsel %vm1325, %v1323, %v1281
    %v1327 = vsel %vm1325, %v1324, %v1283
    %vm1328 = vcmask 1042432
    %v1329 = vsel %vm1328, %v1326, %v1289
    %v1330 = vsel %vm1328, %v1327, %v1291
    %vm1331 = vcmask 1043456
    %v1332 = vsel %vm1331, %v1329, %v1294
    %v1333 = vsel %vm1331, %v1330, %v1295
    %vm1334 = vcmask 1044480
    %v1335 = vsel %vm1334, %v1332, %v1301
    %v1336 = vsel %vm1334, %v1333, %v1303
    %vm1337 = vcmask 1045504
    %v1338 = vsel %vm1337, %v1335, %v1309
    %v1339 = vsel %vm1337, %v1336, %v1311
    %vm1340 = vcmask 1046528
    %v1341 = vsel %vm1340, %v1338, %v1317
    %v1342 = vsel %vm1340, %v1339, %v1319
    %vm1343 = vcmask 261120
    %v1345 = vsel %vm1343, %v1341, 0
    %v1348 = vsel %vm1343, %v319, 0
    %1350 = vmatpush.xpose.msra.mxu0 0.0
    %1351 = vmatpush.xpose.msra.mxu0 0.0
    %1352 = vmatpush.xpose.msra.mxu0 0.0
    %1353 = vmatpush.xpose.msra.mxu0 0.0
    %1354 = vmatpush.xpose.msra.mxu0 0.0
    %1355 = vmatpush.xpose.msra.mxu0 0.0
    %1356 = vmatpush.xpose.msra.mxu0 0.0
    %1357 = vmatpush.xpose.msra.mxu0 0.0
    %1358 = vmatpush.xpose.msra.mxu0 0.0
    %1359 = vmatpush.xpose.msra.mxu0 0.0
    %1360 = vmatpush.xpose.msra.mxu0 0.0
    %1361 = vmatpush.xpose.msra.mxu0 0.0
    %1362 = vmatpush.xpose.msra.mxu0 0.0
    %1363 = vmatpush.xpose.msra.mxu0 0.0
    %1364 = vmatpush.xpose.msra.mxu0 0.0
    %1365 = vmatpush.xpose.msra.mxu0 %v1348
    %1366 = vmatmul.f32.gmra.mxu0 %v1345
    %v1367 = vpop.f32.mrf.mxu0
    %v1368 = vadd.f32 0.0, %v1367
    %1369 = vdwg.mxu0
    %v1371 = vsel %vm1343, %v1342, 0
    %v1374 = vsel %vm1343, %v320, 0
    %1376 = vmatpush.xpose.msra.mxu0 0.0
    %1377 = vmatpush.xpose.msra.mxu0 0.0
    %1378 = vmatpush.xpose.msra.mxu0 0.0
    %1379 = vmatpush.xpose.msra.mxu0 0.0
    %1380 = vmatpush.xpose.msra.mxu0 0.0
    %1381 = vmatpush.xpose.msra.mxu0 0.0
    %1382 = vmatpush.xpose.msra.mxu0 0.0
    %1383 = vmatpush.xpose.msra.mxu0 0.0
    %1384 = vmatpush.xpose.msra.mxu0 0.0
    %1385 = vmatpush.xpose.msra.mxu0 0.0
    %1386 = vmatpush.xpose.msra.mxu0 0.0
    %1387 = vmatpush.xpose.msra.mxu0 0.0
    %1388 = vmatpush.xpose.msra.mxu0 0.0
    %1389 = vmatpush.xpose.msra.mxu0 0.0
    %1390 = vmatpush.xpose.msra.mxu0 0.0
    %1391 = vmatpush.xpose.msra.mxu0 %v1374
    %1392 = vmatmul.f32.gmra.mxu0 %v1371
    %v1393 = vpop.f32.mrf.mxu0
    %v1394 = vadd.f32 0.0, %v1393
    %1395 = vdwg.mxu0
    %v1396 = vmul.f32 %v1368, 0.17677669
    %v1397 = vmul.f32 %v1394, 0.17677669
    %vm1398 = vcmask 64512
    %v1399 = vsel %vm1398, %v1396, -inf
    %1400 = vmax.xlane.f32.xlu0 %v1399
    %v1401 = vpop.xlane.xlu0 %1400
    %v1402 = vsel %vm1398, %v1397, -inf
    %1403 = vmax.xlane.f32.xlu0 %v1402
    %v1404 = vpop.xlane.xlu0 %1403
    %v1405 = vsub.f32 %v1396, %v1401
    %v1406 = vsub.f32 %v1397, %v1404
    %v1407 = vmul.f32 %v1405, 1.442695
    %v1408 = vpow.pop %v1407
    %v1409 = vmul.f32 %v1406, 1.442695
    %v1410 = vpow.pop %v1409
    %v1411 = vsel %vm1398, %v1408, 0.0
    %1412 = vadd.xlane.f32.xlu0 %v1411
    %v1413 = vpop.xlane.xlu0 %1412
    %v1414 = vsel %vm1398, %v1410, 0.0
    %1415 = vadd.xlane.f32.xlu0 %v1414
    %v1416 = vpop.xlane.xlu0 %1415
    %v1417 = vrcp.pop %v1413
    %v1418 = vrcp.pop %v1416
    %v1419 = vmul.f32 %v1408, %v1417
    %v1420 = vmul.f32 %v1410, %v1418
    %v1422 = vsel %vm1398, %v1419, 0
    %1424 = vmatpush.msra.mxu0 0.0
    %1425 = vmatpush.msra.mxu0 0.0
    %1426 = vmatpush.msra.mxu0 0.0
    %1427 = vmatpush.msra.mxu0 0.0
    %1428 = vmatpush.msra.mxu0 0.0
    %1429 = vmatpush.msra.mxu0 0.0
    %1430 = vmatpush.msra.mxu0 0.0
    %1431 = vmatpush.msra.mxu0 0.0
    %1432 = vmatpush.msra.mxu0 0.0
    %1433 = vmatpush.msra.mxu0 0.0
    %1434 = vmatpush.msra.mxu0 0.0
    %1435 = vmatpush.msra.mxu0 0.0
    %1436 = vmatpush.msra.mxu0 0.0
    %1437 = vmatpush.msra.mxu0 0.0
    %1438 = vmatpush.msra.mxu0 0.0
    %1439 = vmatpush.msra.mxu0 %v319
    %1440 = vmatmul.f32.gmra.mxu0 %v1422
    %v1441 = vpop.f32.mrf.mxu0
    %v1442 = vadd.f32 0.0, %v1441
    %1443 = vdwg.mxu0
    %v1445 = vsel %vm1398, %v1420, 0
    %1447 = vmatpush.msra.mxu0 0.0
    %1448 = vmatpush.msra.mxu0 0.0
    %1449 = vmatpush.msra.mxu0 0.0
    %1450 = vmatpush.msra.mxu0 0.0
    %1451 = vmatpush.msra.mxu0 0.0
    %1452 = vmatpush.msra.mxu0 0.0
    %1453 = vmatpush.msra.mxu0 0.0
    %1454 = vmatpush.msra.mxu0 0.0
    %1455 = vmatpush.msra.mxu0 0.0
    %1456 = vmatpush.msra.mxu0 0.0
    %1457 = vmatpush.msra.mxu0 0.0
    %1458 = vmatpush.msra.mxu0 0.0
    %1459 = vmatpush.msra.mxu0 0.0
    %1460 = vmatpush.msra.mxu0 0.0
    %1461 = vmatpush.msra.mxu0 0.0
    %1462 = vmatpush.msra.mxu0 %v320
    %1463 = vmatmul.f32.gmra.mxu0 %v1445
    %v1464 = vpop.f32.mrf.mxu0
    %v1465 = vadd.f32 0.0, %v1464
    %1466 = vdwg.mxu0
    %v1469 = vrot.slane %v1465, 7
    %vm1470 = vcmask 1041409
    %v1471 = vsel %vm1470, %v1469, %v1442
    %v1473 = vrot.slane %v1442, 1
    %v1474 = vsel %vm1470, %v1465, %v1473
    %1475 = vrot.lane.b32.xlu0 %v1474, 32
    %v1476 = vpop.permute.xlu0 %1475
    %v1478 = vrot.slane %v1442, 2
    %v1479 = vrot.slane %v1465, 1
    %v1480 = vsel %vm1470, %v1479, %v1478
    %1481 = vrot.lane.b32.xlu0 %v1480, 64
    %v1482 = vpop.permute.xlu0 %1481
    %v1484 = vrot.slane %v1442, 3
    %v1485 = vrot.slane %v1465, 2
    %v1486 = vsel %vm1470, %v1485, %v1484
    %1487 = vrot.lane.b32.xlu0 %v1486, 96
    %v1488 = vpop.permute.xlu0 %1487
    %v1490 = vrot.slane %v1442, 4
    %v1491 = vrot.slane %v1465, 3
    %v1492 = vsel %vm1470, %v1491, %v1490
    %v1494 = vrot.slane %v1442, 5
    %v1495 = vrot.slane %v1465, 4
    %v1496 = vsel %vm1470, %v1495, %v1494
    %1497 = vrot.lane.b32.xlu0 %v1496, 32
    %v1498 = vpop.permute.xlu0 %1497
    %v1500 = vrot.slane %v1442, 6
    %v1501 = vrot.slane %v1465, 5
    %v1502 = vsel %vm1470, %v1501, %v1500
    %1503 = vrot.lane.b32.xlu0 %v1502, 64
    %v1504 = vpop.permute.xlu0 %1503
    %v1506 = vrot.slane %v1442, 7
    %v1507 = vrot.slane %v1465, 6
    %v1508 = vsel %vm1470, %v1507, %v1506
    %1509 = vrot.lane.b32.xlu0 %v1508, 96
    %v1510 = vpop.permute.xlu0 %1509
    %v1512 = vsel %vm1343, %v1471, %v1476
    %vm1513 = vcmask 523264
    %v1514 = vsel %vm1513, %v1512, %v1482
    %vm1515 = vcmask 785408
    %v1516 = vsel %vm1515, %v1514, %v1488
    %v1517 = vsel %vm1343, %v1492, %v1498
    %v1518 = vsel %vm1513, %v1517, %v1504
    %v1519 = vsel %vm1515, %v1518, %v1510
    %v1520 = vadd.f32 %v1516, %v1218
    %v1521 = vadd.f32 %v1519, %v1219
    %v1522 = vpack.c.bf16 %v1520, %v1520
    %v1523 = vpack.c.bf16 %v1521, %v1521
    %v1525 = vperm.slane %v317, 0
    %v1526 = vperm.slane %v317, 1
    %v1527 = vperm.slane %v317, 2
    %v1528 = vperm.slane %v317, 3
    %v1529 = vperm.slane %v317, 4
    %v1530 = vperm.slane %v317, 5
    %v1531 = vperm.slane %v317, 6
    %v1532 = vperm.slane %v317, 7
    %v1669 = vunpack.c.l.b16 %v189
    %v1670 = vunpack.c.h.b16 %v189
    %v1671 = vunpack.c.l.b16 %v190
    %v1672 = vunpack.c.h.b16 %v190
    %v1673 = vunpack.c.l.b16 %v191
    %v1674 = vunpack.c.h.b16 %v191
    %v1675 = vunpack.c.l.b16 %v192
    %v1676 = vunpack.c.h.b16 %v192
    %v1677 = vunpack.c.l.b16 %v193
    %v1678 = vunpack.c.h.b16 %v193
    %v1679 = vunpack.c.l.b16 %v194
    %v1680 = vunpack.c.h.b16 %v194
    %v1681 = vunpack.c.l.b16 %v195
    %v1682 = vunpack.c.h.b16 %v195
    %v1683 = vunpack.c.l.b16 %v196
    %v1684 = vunpack.c.h.b16 %v196
    %v1685 = vunpack.c.l.b16 %v197
    %v1686 = vunpack.c.h.b16 %v197
    %v1687 = vunpack.c.l.b16 %v198
    %v1688 = vunpack.c.h.b16 %v198
    %v1689 = vunpack.c.l.b16 %v199
    %v1690 = vunpack.c.h.b16 %v199
    %v1691 = vunpack.c.l.b16 %v200
    %v1692 = vunpack.c.h.b16 %v200
    %v1693 = vunpack.c.l.b16 %v201
    %v1694 = vunpack.c.h.b16 %v201
    %v1695 = vunpack.c.l.b16 %v202
    %v1696 = vunpack.c.h.b16 %v202
    %v1697 = vunpack.c.l.b16 %v203
    %v1698 = vunpack.c.h.b16 %v203
    %v1699 = vunpack.c.l.b16 %v204
    %v1700 = vunpack.c.h.b16 %v204
    %v1701 = vunpack.c.l.b16 %v205
    %v1702 = vunpack.c.h.b16 %v205
    %v1703 = vunpack.c.l.b16 %v206
    %v1704 = vunpack.c.h.b16 %v206
    %v1705 = vunpack.c.l.b16 %v207
    %v1706 = vunpack.c.h.b16 %v207
    %v1707 = vunpack.c.l.b16 %v208
    %v1708 = vunpack.c.h.b16 %v208
    %v1709 = vunpack.c.l.b16 %v209
    %v1710 = vunpack.c.h.b16 %v209
    %v1711 = vunpack.c.l.b16 %v210
    %v1712 = vunpack.c.h.b16 %v210
    %v1713 = vunpack.c.l.b16 %v211
    %v1714 = vunpack.c.h.b16 %v211
    %v1715 = vunpack.c.l.b16 %v212
    %v1716 = vunpack.c.h.b16 %v212
    %v1717 = vunpack.c.l.b16 %v213
    %v1718 = vunpack.c.h.b16 %v213
    %v1719 = vunpack.c.l.b16 %v214
    %v1720 = vunpack.c.h.b16 %v214
    %v1721 = vunpack.c.l.b16 %v215
    %v1722 = vunpack.c.h.b16 %v215
    %v1723 = vunpack.c.l.b16 %v216
    %v1724 = vunpack.c.h.b16 %v216
    %v1725 = vunpack.c.l.b16 %v217
    %v1726 = vunpack.c.h.b16 %v217
    %v1727 = vunpack.c.l.b16 %v218
    %v1728 = vunpack.c.h.b16 %v218
    %v1729 = vunpack.c.l.b16 %v219
    %v1730 = vunpack.c.h.b16 %v219
    %v1731 = vunpack.c.l.b16 %v220
    %v1732 = vunpack.c.h.b16 %v220
    %v1733 = vunpack.c.l.b16 %v221
    %v1734 = vunpack.c.h.b16 %v221
    %v1735 = vunpack.c.l.b16 %v222
    %v1736 = vunpack.c.h.b16 %v222
    %v1737 = vunpack.c.l.b16 %v223
    %v1738 = vunpack.c.h.b16 %v223
    %v1739 = vunpack.c.l.b16 %v224
    %v1740 = vunpack.c.h.b16 %v224
    %v1741 = vunpack.c.l.b16 %v225
    %v1742 = vunpack.c.h.b16 %v225
    %v1743 = vunpack.c.l.b16 %v226
    %v1744 = vunpack.c.h.b16 %v226
    %v1745 = vunpack.c.l.b16 %v227
    %v1746 = vunpack.c.h.b16 %v227
    %v1747 = vunpack.c.l.b16 %v228
    %v1748 = vunpack.c.h.b16 %v228
    %v1749 = vunpack.c.l.b16 %v229
    %v1750 = vunpack.c.h.b16 %v229
    %v1751 = vunpack.c.l.b16 %v230
    %v1752 = vunpack.c.h.b16 %v230
    %v1753 = vunpack.c.l.b16 %v231
    %v1754 = vunpack.c.h.b16 %v231
    %v1755 = vunpack.c.l.b16 %v232
    %v1756 = vunpack.c.h.b16 %v232
    %v1757 = vunpack.c.l.b16 %v233
    %v1758 = vunpack.c.h.b16 %v233
    %v1759 = vunpack.c.l.b16 %v234
    %v1760 = vunpack.c.h.b16 %v234
    %v1761 = vunpack.c.l.b16 %v235
    %v1762 = vunpack.c.h.b16 %v235
    %v1763 = vunpack.c.l.b16 %v236
    %v1764 = vunpack.c.h.b16 %v236
    %v1765 = vunpack.c.l.b16 %v237
    %v1766 = vunpack.c.h.b16 %v237
    %v1767 = vunpack.c.l.b16 %v238
    %v1768 = vunpack.c.h.b16 %v238
    %v1769 = vunpack.c.l.b16 %v239
    %v1770 = vunpack.c.h.b16 %v239
    %v1771 = vunpack.c.l.b16 %v240
    %v1772 = vunpack.c.h.b16 %v240
    %v1773 = vunpack.c.l.b16 %v241
    %v1774 = vunpack.c.h.b16 %v241
    %v1775 = vunpack.c.l.b16 %v242
    %v1776 = vunpack.c.h.b16 %v242
    %v1777 = vunpack.c.l.b16 %v243
    %v1778 = vunpack.c.h.b16 %v243
    %v1779 = vunpack.c.l.b16 %v244
    %v1780 = vunpack.c.h.b16 %v244
    %v1781 = vunpack.c.l.b16 %v245
    %v1782 = vunpack.c.h.b16 %v245
    %v1783 = vunpack.c.l.b16 %v246
    %v1784 = vunpack.c.h.b16 %v246
    %v1785 = vunpack.c.l.b16 %v247
    %v1786 = vunpack.c.h.b16 %v247
    %v1787 = vunpack.c.l.b16 %v248
    %v1788 = vunpack.c.h.b16 %v248
    %v1789 = vunpack.c.l.b16 %v249
    %v1790 = vunpack.c.h.b16 %v249
    %v1791 = vunpack.c.l.b16 %v250
    %v1792 = vunpack.c.h.b16 %v250
    %v1793 = vunpack.c.l.b16 %v251
    %v1794 = vunpack.c.h.b16 %v251
    %v1795 = vunpack.c.l.b16 %v252
    %v1796 = vunpack.c.h.b16 %v252
    %v1797 = vunpack.c.l.b16 %v253
    %v1798 = vunpack.c.h.b16 %v253
    %v1799 = vunpack.c.l.b16 %v254
    %v1800 = vunpack.c.h.b16 %v254
    %v1801 = vunpack.c.l.b16 %v255
    %v1802 = vunpack.c.h.b16 %v255
    %v1803 = vunpack.c.l.b16 %v256
    %v1804 = vunpack.c.h.b16 %v256
    %v1805 = vunpack.c.l.b16 %v257
    %v1806 = vunpack.c.h.b16 %v257
    %v1807 = vunpack.c.l.b16 %v258
    %v1808 = vunpack.c.h.b16 %v258
    %v1809 = vunpack.c.l.b16 %v259
    %v1810 = vunpack.c.h.b16 %v259
    %v1811 = vunpack.c.l.b16 %v260
    %v1812 = vunpack.c.h.b16 %v260
    %v1813 = vunpack.c.l.b16 %v261
    %v1814 = vunpack.c.h.b16 %v261
    %v1815 = vunpack.c.l.b16 %v262
    %v1816 = vunpack.c.h.b16 %v262
    %v1817 = vunpack.c.l.b16 %v263
    %v1818 = vunpack.c.h.b16 %v263
    %v1819 = vunpack.c.l.b16 %v264
    %v1820 = vunpack.c.h.b16 %v264
    %v1821 = vunpack.c.l.b16 %v265
    %v1822 = vunpack.c.h.b16 %v265
    %v1823 = vunpack.c.l.b16 %v266
    %v1824 = vunpack.c.h.b16 %v266
    %v1825 = vunpack.c.l.b16 %v267
    %v1826 = vunpack.c.h.b16 %v267
    %v1827 = vunpack.c.l.b16 %v268
    %v1828 = vunpack.c.h.b16 %v268
    %v1829 = vunpack.c.l.b16 %v269
    %v1830 = vunpack.c.h.b16 %v269
    %v1831 = vunpack.c.l.b16 %v270
    %v1832 = vunpack.c.h.b16 %v270
    %v1833 = vunpack.c.l.b16 %v271
    %v1834 = vunpack.c.h.b16 %v271
    %v1835 = vunpack.c.l.b16 %v272
    %v1836 = vunpack.c.h.b16 %v272
    %v1837 = vunpack.c.l.b16 %v273
    %v1838 = vunpack.c.h.b16 %v273
    %v1839 = vunpack.c.l.b16 %v274
    %v1840 = vunpack.c.h.b16 %v274
    %v1841 = vunpack.c.l.b16 %v275
    %v1842 = vunpack.c.h.b16 %v275
    %v1843 = vunpack.c.l.b16 %v276
    %v1844 = vunpack.c.h.b16 %v276
    %v1845 = vunpack.c.l.b16 %v277
    %v1846 = vunpack.c.h.b16 %v277
    %v1847 = vunpack.c.l.b16 %v278
    %v1848 = vunpack.c.h.b16 %v278
    %v1849 = vunpack.c.l.b16 %v279
    %v1850 = vunpack.c.h.b16 %v279
    %v1851 = vunpack.c.l.b16 %v280
    %v1852 = vunpack.c.h.b16 %v280
    %v1853 = vunpack.c.l.b16 %v281
    %v1854 = vunpack.c.h.b16 %v281
    %v1855 = vunpack.c.l.b16 %v282
    %v1856 = vunpack.c.h.b16 %v282
    %v1857 = vunpack.c.l.b16 %v283
    %v1858 = vunpack.c.h.b16 %v283
    %v1859 = vunpack.c.l.b16 %v284
    %v1860 = vunpack.c.h.b16 %v284
    %v1861 = vunpack.c.l.b16 %v285
    %v1862 = vunpack.c.h.b16 %v285
    %v1863 = vunpack.c.l.b16 %v286
    %v1864 = vunpack.c.h.b16 %v286
    %v1865 = vunpack.c.l.b16 %v287
    %v1866 = vunpack.c.h.b16 %v287
    %v1867 = vunpack.c.l.b16 %v288
    %v1868 = vunpack.c.h.b16 %v288
    %v1869 = vunpack.c.l.b16 %v289
    %v1870 = vunpack.c.h.b16 %v289
    %v1871 = vunpack.c.l.b16 %v290
    %v1872 = vunpack.c.h.b16 %v290
    %v1873 = vunpack.c.l.b16 %v291
    %v1874 = vunpack.c.h.b16 %v291
    %v1875 = vunpack.c.l.b16 %v292
    %v1876 = vunpack.c.h.b16 %v292
    %v1877 = vunpack.c.l.b16 %v293
    %v1878 = vunpack.c.h.b16 %v293
    %v1879 = vunpack.c.l.b16 %v294
    %v1880 = vunpack.c.h.b16 %v294
    %v1881 = vunpack.c.l.b16 %v295
    %v1882 = vunpack.c.h.b16 %v295
    %v1883 = vunpack.c.l.b16 %v296
    %v1884 = vunpack.c.h.b16 %v296
    %v1885 = vunpack.c.l.b16 %v297
    %v1886 = vunpack.c.h.b16 %v297
    %v1887 = vunpack.c.l.b16 %v298
    %v1888 = vunpack.c.h.b16 %v298
    %v1889 = vunpack.c.l.b16 %v299
    %v1890 = vunpack.c.h.b16 %v299
    %v1891 = vunpack.c.l.b16 %v300
    %v1892 = vunpack.c.h.b16 %v300
    %v1893 = vunpack.c.l.b16 %v301
    %v1894 = vunpack.c.h.b16 %v301
    %v1895 = vunpack.c.l.b16 %v302
    %v1896 = vunpack.c.h.b16 %v302
    %v1897 = vunpack.c.l.b16 %v303
    %v1898 = vunpack.c.h.b16 %v303
    %v1899 = vunpack.c.l.b16 %v304
    %v1900 = vunpack.c.h.b16 %v304
    %v1901 = vunpack.c.l.b16 %v305
    %v1902 = vunpack.c.h.b16 %v305
    %v1903 = vunpack.c.l.b16 %v306
    %v1904 = vunpack.c.h.b16 %v306
    %v1905 = vunpack.c.l.b16 %v307
    %v1906 = vunpack.c.h.b16 %v307
    %v1907 = vunpack.c.l.b16 %v308
    %v1908 = vunpack.c.h.b16 %v308
    %v1909 = vunpack.c.l.b16 %v309
    %v1910 = vunpack.c.h.b16 %v309
    %v1911 = vunpack.c.l.b16 %v310
    %v1912 = vunpack.c.h.b16 %v310
    %v1913 = vunpack.c.l.b16 %v311
    %v1914 = vunpack.c.h.b16 %v311
    %v1915 = vunpack.c.l.b16 %v312
    %v1916 = vunpack.c.h.b16 %v312
    %v1917 = vunpack.c.l.b16 %v313
    %v1918 = vunpack.c.h.b16 %v313
    %v1919 = vunpack.c.l.b16 %v314
    %v1920 = vunpack.c.h.b16 %v314
    %v1921 = vunpack.c.l.b16 %v315
    %v1922 = vunpack.c.h.b16 %v315
    %v1923 = vunpack.c.l.b16 %v316
    %v1924 = vunpack.c.h.b16 %v316
    %v1925 = vpack.c.b16 %v1677, %v1669
    %v1926 = vpack.c.b16 %v1678, %v1670
    %v1927 = vpack.c.b16 %v1679, %v1671
    %v1928 = vpack.c.b16 %v1680, %v1672
    %v1929 = vpack.c.b16 %v1681, %v1673
    %v1930 = vpack.c.b16 %v1682, %v1674
    %v1931 = vpack.c.b16 %v1683, %v1675
    %v1932 = vpack.c.b16 %v1684, %v1676
    %v1933 = vpack.c.b16 %v1693, %v1685
    %v1934 = vpack.c.b16 %v1694, %v1686
    %v1935 = vpack.c.b16 %v1695, %v1687
    %v1936 = vpack.c.b16 %v1696, %v1688
    %v1937 = vpack.c.b16 %v1697, %v1689
    %v1938 = vpack.c.b16 %v1698, %v1690
    %v1939 = vpack.c.b16 %v1699, %v1691
    %v1940 = vpack.c.b16 %v1700, %v1692
    %v1941 = vpack.c.b16 %v1709, %v1701
    %v1942 = vpack.c.b16 %v1710, %v1702
    %v1943 = vpack.c.b16 %v1711, %v1703
    %v1944 = vpack.c.b16 %v1712, %v1704
    %v1945 = vpack.c.b16 %v1713, %v1705
    %v1946 = vpack.c.b16 %v1714, %v1706
    %v1947 = vpack.c.b16 %v1715, %v1707
    %v1948 = vpack.c.b16 %v1716, %v1708
    %v1949 = vpack.c.b16 %v1725, %v1717
    %v1950 = vpack.c.b16 %v1726, %v1718
    %v1951 = vpack.c.b16 %v1727, %v1719
    %v1952 = vpack.c.b16 %v1728, %v1720
    %v1953 = vpack.c.b16 %v1729, %v1721
    %v1954 = vpack.c.b16 %v1730, %v1722
    %v1955 = vpack.c.b16 %v1731, %v1723
    %v1956 = vpack.c.b16 %v1732, %v1724
    %v1957 = vpack.c.b16 %v1741, %v1733
    %v1958 = vpack.c.b16 %v1742, %v1734
    %v1959 = vpack.c.b16 %v1743, %v1735
    %v1960 = vpack.c.b16 %v1744, %v1736
    %v1961 = vpack.c.b16 %v1745, %v1737
    %v1962 = vpack.c.b16 %v1746, %v1738
    %v1963 = vpack.c.b16 %v1747, %v1739
    %v1964 = vpack.c.b16 %v1748, %v1740
    %v1965 = vpack.c.b16 %v1757, %v1749
    %v1966 = vpack.c.b16 %v1758, %v1750
    %v1967 = vpack.c.b16 %v1759, %v1751
    %v1968 = vpack.c.b16 %v1760, %v1752
    %v1969 = vpack.c.b16 %v1761, %v1753
    %v1970 = vpack.c.b16 %v1762, %v1754
    %v1971 = vpack.c.b16 %v1763, %v1755
    %v1972 = vpack.c.b16 %v1764, %v1756
    %v1973 = vpack.c.b16 %v1773, %v1765
    %v1974 = vpack.c.b16 %v1774, %v1766
    %v1975 = vpack.c.b16 %v1775, %v1767
    %v1976 = vpack.c.b16 %v1776, %v1768
    %v1977 = vpack.c.b16 %v1777, %v1769
    %v1978 = vpack.c.b16 %v1778, %v1770
    %v1979 = vpack.c.b16 %v1779, %v1771
    %v1980 = vpack.c.b16 %v1780, %v1772
    %v1981 = vpack.c.b16 %v1789, %v1781
    %v1982 = vpack.c.b16 %v1790, %v1782
    %v1983 = vpack.c.b16 %v1791, %v1783
    %v1984 = vpack.c.b16 %v1792, %v1784
    %v1985 = vpack.c.b16 %v1793, %v1785
    %v1986 = vpack.c.b16 %v1794, %v1786
    %v1987 = vpack.c.b16 %v1795, %v1787
    %v1988 = vpack.c.b16 %v1796, %v1788
    %v1989 = vpack.c.b16 %v1805, %v1797
    %v1990 = vpack.c.b16 %v1806, %v1798
    %v1991 = vpack.c.b16 %v1807, %v1799
    %v1992 = vpack.c.b16 %v1808, %v1800
    %v1993 = vpack.c.b16 %v1809, %v1801
    %v1994 = vpack.c.b16 %v1810, %v1802
    %v1995 = vpack.c.b16 %v1811, %v1803
    %v1996 = vpack.c.b16 %v1812, %v1804
    %v1997 = vpack.c.b16 %v1821, %v1813
    %v1998 = vpack.c.b16 %v1822, %v1814
    %v1999 = vpack.c.b16 %v1823, %v1815
    %v2000 = vpack.c.b16 %v1824, %v1816
    %v2001 = vpack.c.b16 %v1825, %v1817
    %v2002 = vpack.c.b16 %v1826, %v1818
    %v2003 = vpack.c.b16 %v1827, %v1819
    %v2004 = vpack.c.b16 %v1828, %v1820
    %v2005 = vpack.c.b16 %v1837, %v1829
    %v2006 = vpack.c.b16 %v1838, %v1830
    %v2007 = vpack.c.b16 %v1839, %v1831
    %v2008 = vpack.c.b16 %v1840, %v1832
    %v2009 = vpack.c.b16 %v1841, %v1833
    %v2010 = vpack.c.b16 %v1842, %v1834
    %v2011 = vpack.c.b16 %v1843, %v1835
    %v2012 = vpack.c.b16 %v1844, %v1836
    %v2013 = vpack.c.b16 %v1853, %v1845
    %v2014 = vpack.c.b16 %v1854, %v1846
    %v2015 = vpack.c.b16 %v1855, %v1847
    %v2016 = vpack.c.b16 %v1856, %v1848
    %v2017 = vpack.c.b16 %v1857, %v1849
    %v2018 = vpack.c.b16 %v1858, %v1850
    %v2019 = vpack.c.b16 %v1859, %v1851
    %v2020 = vpack.c.b16 %v1860, %v1852
    %v2021 = vpack.c.b16 %v1869, %v1861
    %v2022 = vpack.c.b16 %v1870, %v1862
    %v2023 = vpack.c.b16 %v1871, %v1863
    %v2024 = vpack.c.b16 %v1872, %v1864
    %v2025 = vpack.c.b16 %v1873, %v1865
    %v2026 = vpack.c.b16 %v1874, %v1866
    %v2027 = vpack.c.b16 %v1875, %v1867
    %v2028 = vpack.c.b16 %v1876, %v1868
    %v2029 = vpack.c.b16 %v1885, %v1877
    %v2030 = vpack.c.b16 %v1886, %v1878
    %v2031 = vpack.c.b16 %v1887, %v1879
    %v2032 = vpack.c.b16 %v1888, %v1880
    %v2033 = vpack.c.b16 %v1889, %v1881
    %v2034 = vpack.c.b16 %v1890, %v1882
    %v2035 = vpack.c.b16 %v1891, %v1883
    %v2036 = vpack.c.b16 %v1892, %v1884
    %v2037 = vpack.c.b16 %v1901, %v1893
    %v2038 = vpack.c.b16 %v1902, %v1894
    %v2039 = vpack.c.b16 %v1903, %v1895
    %v2040 = vpack.c.b16 %v1904, %v1896
    %v2041 = vpack.c.b16 %v1905, %v1897
    %v2042 = vpack.c.b16 %v1906, %v1898
    %v2043 = vpack.c.b16 %v1907, %v1899
    %v2044 = vpack.c.b16 %v1908, %v1900
    %v2045 = vpack.c.b16 %v1917, %v1909
    %v2046 = vpack.c.b16 %v1918, %v1910
    %v2047 = vpack.c.b16 %v1919, %v1911
    %v2048 = vpack.c.b16 %v1920, %v1912
    %v2049 = vpack.c.b16 %v1921, %v1913
    %v2050 = vpack.c.b16 %v1922, %v1914
    %v2051 = vpack.c.b16 %v1923, %v1915
    %v2052 = vpack.c.b16 %v1924, %v1916
    %2181 = vmatpush.bf16.msra.mxu0 %v1981
    %2182 = vmatpush.bf16.msra.mxu0 %v1973
    %2183 = vmatpush.bf16.msra.mxu0 %v1965
    %2184 = vmatpush.bf16.msra.mxu0 %v1957
    %2185 = vmatpush.bf16.msra.mxu0 %v1949
    %2186 = vmatpush.bf16.msra.mxu0 %v1941
    %2187 = vmatpush.bf16.msra.mxu0 %v1933
    %2188 = vmatpush.bf16.msra.mxu0 %v1925
    %2189 = vmatmul.bf16.gmra.mxu0 %v1522
    %v2190 = vpop.f32.mrf.mxu0
    %v2191 = vadd.f32 %v1525, %v2190
    %v2192 = vpop.f32.mrf.mxu0
    %2193 = vdwg.mxu0
    %2194 = vmatpush.bf16.msra.mxu0 %v2045
    %2195 = vmatpush.bf16.msra.mxu0 %v2037
    %2196 = vmatpush.bf16.msra.mxu0 %v2029
    %2197 = vmatpush.bf16.msra.mxu0 %v2021
    %2198 = vmatpush.bf16.msra.mxu0 %v2013
    %2199 = vmatpush.bf16.msra.mxu0 %v2005
    %2200 = vmatpush.bf16.msra.mxu0 %v1997
    %2201 = vmatpush.bf16.msra.mxu0 %v1989
    %2202 = vmatmul.bf16.gmra.mxu0 %v1523
    %v2203 = vpop.f32.mrf.mxu0
    %v2204 = vadd.f32 %v2191, %v2203
    %v2205 = vpop.f32.mrf.mxu0
    %2206 = vdwg.mxu0
    %2207 = vmatpush.bf16.msra.mxu0 %v1982
    %2208 = vmatpush.bf16.msra.mxu0 %v1974
    %2209 = vmatpush.bf16.msra.mxu0 %v1966
    %2210 = vmatpush.bf16.msra.mxu0 %v1958
    %2211 = vmatpush.bf16.msra.mxu0 %v1950
    %2212 = vmatpush.bf16.msra.mxu0 %v1942
    %2213 = vmatpush.bf16.msra.mxu0 %v1934
    %2214 = vmatpush.bf16.msra.mxu0 %v1926
    %2215 = vmatmul.bf16.gmra.mxu0 %v1522
    %v2216 = vpop.f32.mrf.mxu0
    %v2217 = vadd.f32 %v1526, %v2216
    %v2218 = vpop.f32.mrf.mxu0
    %2219 = vdwg.mxu0
    %2220 = vmatpush.bf16.msra.mxu0 %v2046
    %2221 = vmatpush.bf16.msra.mxu0 %v2038
    %2222 = vmatpush.bf16.msra.mxu0 %v2030
    %2223 = vmatpush.bf16.msra.mxu0 %v2022
    %2224 = vmatpush.bf16.msra.mxu0 %v2014
    %2225 = vmatpush.bf16.msra.mxu0 %v2006
    %2226 = vmatpush.bf16.msra.mxu0 %v1998
    %2227 = vmatpush.bf16.msra.mxu0 %v1990
    %2228 = vmatmul.bf16.gmra.mxu0 %v1523
    %v2229 = vpop.f32.mrf.mxu0
    %v2230 = vadd.f32 %v2217, %v2229
    %v2231 = vpop.f32.mrf.mxu0
    %2232 = vdwg.mxu0
    %2233 = vmatpush.bf16.msra.mxu0 %v1983
    %2234 = vmatpush.bf16.msra.mxu0 %v1975
    %2235 = vmatpush.bf16.msra.mxu0 %v1967
    %2236 = vmatpush.bf16.msra.mxu0 %v1959
    %2237 = vmatpush.bf16.msra.mxu0 %v1951
    %2238 = vmatpush.bf16.msra.mxu0 %v1943
    %2239 = vmatpush.bf16.msra.mxu0 %v1935
    %2240 = vmatpush.bf16.msra.mxu0 %v1927
    %2241 = vmatmul.bf16.gmra.mxu0 %v1522
    %v2242 = vpop.f32.mrf.mxu0
    %v2243 = vadd.f32 %v1527, %v2242
    %v2244 = vpop.f32.mrf.mxu0
    %2245 = vdwg.mxu0
    %2246 = vmatpush.bf16.msra.mxu0 %v2047
    %2247 = vmatpush.bf16.msra.mxu0 %v2039
    %2248 = vmatpush.bf16.msra.mxu0 %v2031
    %2249 = vmatpush.bf16.msra.mxu0 %v2023
    %2250 = vmatpush.bf16.msra.mxu0 %v2015
    %2251 = vmatpush.bf16.msra.mxu0 %v2007
    %2252 = vmatpush.bf16.msra.mxu0 %v1999
    %2253 = vmatpush.bf16.msra.mxu0 %v1991
    %2254 = vmatmul.bf16.gmra.mxu0 %v1523
    %v2255 = vpop.f32.mrf.mxu0
    %v2256 = vadd.f32 %v2243, %v2255
    %v2257 = vpop.f32.mrf.mxu0
    %2258 = vdwg.mxu0
    %2259 = vmatpush.bf16.msra.mxu0 %v1984
    %2260 = vmatpush.bf16.msra.mxu0 %v1976
    %2261 = vmatpush.bf16.msra.mxu0 %v1968
    %2262 = vmatpush.bf16.msra.mxu0 %v1960
    %2263 = vmatpush.bf16.msra.mxu0 %v1952
    %2264 = vmatpush.bf16.msra.mxu0 %v1944
    %2265 = vmatpush.bf16.msra.mxu0 %v1936
    %2266 = vmatpush.bf16.msra.mxu0 %v1928
    %2267 = vmatmul.bf16.gmra.mxu0 %v1522
    %v2268 = vpop.f32.mrf.mxu0
    %v2269 = vadd.f32 %v1528, %v2268
    %v2270 = vpop.f32.mrf.mxu0
    %2271 = vdwg.mxu0
    %2272 = vmatpush.bf16.msra.mxu0 %v2048
    %2273 = vmatpush.bf16.msra.mxu0 %v2040
    %2274 = vmatpush.bf16.msra.mxu0 %v2032
    %2275 = vmatpush.bf16.msra.mxu0 %v2024
    %2276 = vmatpush.bf16.msra.mxu0 %v2016
    %2277 = vmatpush.bf16.msra.mxu0 %v2008
    %2278 = vmatpush.bf16.msra.mxu0 %v2000
    %2279 = vmatpush.bf16.msra.mxu0 %v1992
    %2280 = vmatmul.bf16.gmra.mxu0 %v1523
    %v2281 = vpop.f32.mrf.mxu0
    %v2282 = vadd.f32 %v2269, %v2281
    %v2283 = vpop.f32.mrf.mxu0
    %2284 = vdwg.mxu0
    %2285 = vmatpush.bf16.msra.mxu0 %v1985
    %2286 = vmatpush.bf16.msra.mxu0 %v1977
    %2287 = vmatpush.bf16.msra.mxu0 %v1969
    %2288 = vmatpush.bf16.msra.mxu0 %v1961
    %2289 = vmatpush.bf16.msra.mxu0 %v1953
    %2290 = vmatpush.bf16.msra.mxu0 %v1945
    %2291 = vmatpush.bf16.msra.mxu0 %v1937
    %2292 = vmatpush.bf16.msra.mxu0 %v1929
    %2293 = vmatmul.bf16.gmra.mxu0 %v1522
    %v2294 = vpop.f32.mrf.mxu0
    %v2295 = vadd.f32 %v1529, %v2294
    %v2296 = vpop.f32.mrf.mxu0
    %2297 = vdwg.mxu0
    %2298 = vmatpush.bf16.msra.mxu0 %v2049
    %2299 = vmatpush.bf16.msra.mxu0 %v2041
    %2300 = vmatpush.bf16.msra.mxu0 %v2033
    %2301 = vmatpush.bf16.msra.mxu0 %v2025
    %2302 = vmatpush.bf16.msra.mxu0 %v2017
    %2303 = vmatpush.bf16.msra.mxu0 %v2009
    %2304 = vmatpush.bf16.msra.mxu0 %v2001
    %2305 = vmatpush.bf16.msra.mxu0 %v1993
    %2306 = vmatmul.bf16.gmra.mxu0 %v1523
    %v2307 = vpop.f32.mrf.mxu0
    %v2308 = vadd.f32 %v2295, %v2307
    %v2309 = vpop.f32.mrf.mxu0
    %2310 = vdwg.mxu0
    %2311 = vmatpush.bf16.msra.mxu0 %v1986
    %2312 = vmatpush.bf16.msra.mxu0 %v1978
    %2313 = vmatpush.bf16.msra.mxu0 %v1970
    %2314 = vmatpush.bf16.msra.mxu0 %v1962
    %2315 = vmatpush.bf16.msra.mxu0 %v1954
    %2316 = vmatpush.bf16.msra.mxu0 %v1946
    %2317 = vmatpush.bf16.msra.mxu0 %v1938
    %2318 = vmatpush.bf16.msra.mxu0 %v1930
    %2319 = vmatmul.bf16.gmra.mxu0 %v1522
    %v2320 = vpop.f32.mrf.mxu0
    %v2321 = vadd.f32 %v1530, %v2320
    %v2322 = vpop.f32.mrf.mxu0
    %2323 = vdwg.mxu0
    %2324 = vmatpush.bf16.msra.mxu0 %v2050
    %2325 = vmatpush.bf16.msra.mxu0 %v2042
    %2326 = vmatpush.bf16.msra.mxu0 %v2034
    %2327 = vmatpush.bf16.msra.mxu0 %v2026
    %2328 = vmatpush.bf16.msra.mxu0 %v2018
    %2329 = vmatpush.bf16.msra.mxu0 %v2010
    %2330 = vmatpush.bf16.msra.mxu0 %v2002
    %2331 = vmatpush.bf16.msra.mxu0 %v1994
    %2332 = vmatmul.bf16.gmra.mxu0 %v1523
    %v2333 = vpop.f32.mrf.mxu0
    %v2334 = vadd.f32 %v2321, %v2333
    %v2335 = vpop.f32.mrf.mxu0
    %2336 = vdwg.mxu0
    %2337 = vmatpush.bf16.msra.mxu0 %v1987
    %2338 = vmatpush.bf16.msra.mxu0 %v1979
    %2339 = vmatpush.bf16.msra.mxu0 %v1971
    %2340 = vmatpush.bf16.msra.mxu0 %v1963
    %2341 = vmatpush.bf16.msra.mxu0 %v1955
    %2342 = vmatpush.bf16.msra.mxu0 %v1947
    %2343 = vmatpush.bf16.msra.mxu0 %v1939
    %2344 = vmatpush.bf16.msra.mxu0 %v1931
    %2345 = vmatmul.bf16.gmra.mxu0 %v1522
    %v2346 = vpop.f32.mrf.mxu0
    %v2347 = vadd.f32 %v1531, %v2346
    %v2348 = vpop.f32.mrf.mxu0
    %2349 = vdwg.mxu0
    %2350 = vmatpush.bf16.msra.mxu0 %v2051
    %2351 = vmatpush.bf16.msra.mxu0 %v2043
    %2352 = vmatpush.bf16.msra.mxu0 %v2035
    %2353 = vmatpush.bf16.msra.mxu0 %v2027
    %2354 = vmatpush.bf16.msra.mxu0 %v2019
    %2355 = vmatpush.bf16.msra.mxu0 %v2011
    %2356 = vmatpush.bf16.msra.mxu0 %v2003
    %2357 = vmatpush.bf16.msra.mxu0 %v1995
    %2358 = vmatmul.bf16.gmra.mxu0 %v1523
    %v2359 = vpop.f32.mrf.mxu0
    %v2360 = vadd.f32 %v2347, %v2359
    %v2361 = vpop.f32.mrf.mxu0
    %2362 = vdwg.mxu0
    %2363 = vmatpush.bf16.msra.mxu0 %v1988
    %2364 = vmatpush.bf16.msra.mxu0 %v1980
    %2365 = vmatpush.bf16.msra.mxu0 %v1972
    %2366 = vmatpush.bf16.msra.mxu0 %v1964
    %2367 = vmatpush.bf16.msra.mxu0 %v1956
    %2368 = vmatpush.bf16.msra.mxu0 %v1948
    %2369 = vmatpush.bf16.msra.mxu0 %v1940
    %2370 = vmatpush.bf16.msra.mxu0 %v1932
    %2371 = vmatmul.bf16.gmra.mxu0 %v1522
    %v2372 = vpop.f32.mrf.mxu0
    %v2373 = vadd.f32 %v1532, %v2372
    %v2374 = vpop.f32.mrf.mxu0
    %2375 = vdwg.mxu0
    %2376 = vmatpush.bf16.msra.mxu0 %v2052
    %2377 = vmatpush.bf16.msra.mxu0 %v2044
    %2378 = vmatpush.bf16.msra.mxu0 %v2036
    %2379 = vmatpush.bf16.msra.mxu0 %v2028
    %2380 = vmatpush.bf16.msra.mxu0 %v2020
    %2381 = vmatpush.bf16.msra.mxu0 %v2012
    %2382 = vmatpush.bf16.msra.mxu0 %v2004
    %2383 = vmatpush.bf16.msra.mxu0 %v1996
    %2384 = vmatmul.bf16.gmra.mxu0 %v1523
    %v2385 = vpop.f32.mrf.mxu0
    %v2386 = vadd.f32 %v2373, %v2385
    %v2387 = vpop.f32.mrf.mxu0
    %2388 = vdwg.mxu0
    %v2389 = vtanh.pop %v2204
    %v2390 = vtanh.pop %v2230
    %v2391 = vtanh.pop %v2256
    %v2392 = vtanh.pop %v2282
    %v2393 = vtanh.pop %v2308
    %v2394 = vtanh.pop %v2334
    %v2395 = vtanh.pop %v2360
    %v2396 = vtanh.pop %v2386
    %v2405 = vrot.slane %v2390, 6
    %v2406 = vrot.slane %v2391, 4
    %v2407 = vrot.slane %v2392, 2
    %v2408 = vrot.slane %v2394, 6
    %v2409 = vrot.slane %v2395, 4
    %v2410 = vrot.slane %v2396, 2
    %v2411 = vsel %vm1325, %v2389, %v2405
    %vm2412 = vcmask 1045508
    %v2413 = vsel %vm2412, %v2406, %v2407
    %v2414 = vsel %vm1331, %v2411, %v2413
    %v2415 = vsel %vm1325, %v2393, %v2408
    %v2416 = vsel %vm2412, %v2409, %v2410
    %v2417 = vsel %vm1331, %v2415, %v2416
    %2420 = vst [vmem:[%s7] sm:$0xff] %v2414
    %2421 = vst [vmem:[%s7 + $0x8] sm:$0xff] %v2417
    %v2422 = vpack.c.bf16 %v2389, %v2389
    %v2423 = vpack.c.bf16 %v2390, %v2390
    %v2424 = vpack.c.bf16 %v2391, %v2391
    %v2425 = vpack.c.bf16 %v2392, %v2392
    %v2426 = vpack.c.bf16 %v2393, %v2393
    %v2427 = vpack.c.bf16 %v2394, %v2394
    %v2428 = vpack.c.bf16 %v2395, %v2395
    %v2429 = vpack.c.bf16 %v2396, %v2396
    %2430 = vmatpush.bf16.msra.mxu0 %v763
    %2431 = vmatpush.bf16.msra.mxu0 %v761
    %2432 = vmatpush.bf16.msra.mxu0 %v759
    %2433 = vmatpush.bf16.msra.mxu0 %v757
    %2434 = vmatpush.bf16.msra.mxu0 %v755
    %2435 = vmatpush.bf16.msra.mxu0 %v753
    %2436 = vmatpush.bf16.msra.mxu0 %v751
    %2437 = vmatpush.bf16.msra.mxu0 %v749
    %2438 = vmatmul.bf16.gmra.mxu0 %v2422
    %v2439 = vpop.f32.mrf.mxu0
    %v2440 = vadd.f32 %v361, %v2439
    %v2441 = vpop.f32.mrf.mxu0
    %2442 = vdwg.mxu0
    %2443 = vmatpush.bf16.msra.mxu0 %v779
    %2444 = vmatpush.bf16.msra.mxu0 %v777
    %2445 = vmatpush.bf16.msra.mxu0 %v775
    %2446 = vmatpush.bf16.msra.mxu0 %v773
    %2447 = vmatpush.bf16.msra.mxu0 %v771
    %2448 = vmatpush.bf16.msra.mxu0 %v769
    %2449 = vmatpush.bf16.msra.mxu0 %v767
    %2450 = vmatpush.bf16.msra.mxu0 %v765
    %2451 = vmatmul.bf16.gmra.mxu0 %v2423
    %v2452 = vpop.f32.mrf.mxu0
    %v2453 = vadd.f32 %v2440, %v2452
    %v2454 = vpop.f32.mrf.mxu0
    %2455 = vdwg.mxu0
    %2456 = vmatpush.bf16.msra.mxu0 %v795
    %2457 = vmatpush.bf16.msra.mxu0 %v793
    %2458 = vmatpush.bf16.msra.mxu0 %v791
    %2459 = vmatpush.bf16.msra.mxu0 %v789
    %2460 = vmatpush.bf16.msra.mxu0 %v787
    %2461 = vmatpush.bf16.msra.mxu0 %v785
    %2462 = vmatpush.bf16.msra.mxu0 %v783
    %2463 = vmatpush.bf16.msra.mxu0 %v781
    %2464 = vmatmul.bf16.gmra.mxu0 %v2424
    %v2465 = vpop.f32.mrf.mxu0
    %v2466 = vadd.f32 %v2453, %v2465
    %v2467 = vpop.f32.mrf.mxu0
    %2468 = vdwg.mxu0
    %2469 = vmatpush.bf16.msra.mxu0 %v811
    %2470 = vmatpush.bf16.msra.mxu0 %v809
    %2471 = vmatpush.bf16.msra.mxu0 %v807
    %2472 = vmatpush.bf16.msra.mxu0 %v805
    %2473 = vmatpush.bf16.msra.mxu0 %v803
    %2474 = vmatpush.bf16.msra.mxu0 %v801
    %2475 = vmatpush.bf16.msra.mxu0 %v799
    %2476 = vmatpush.bf16.msra.mxu0 %v797
    %2477 = vmatmul.bf16.gmra.mxu0 %v2425
    %v2478 = vpop.f32.mrf.mxu0
    %v2479 = vadd.f32 %v2466, %v2478
    %v2480 = vpop.f32.mrf.mxu0
    %2481 = vdwg.mxu0
    %2482 = vmatpush.bf16.msra.mxu0 %v827
    %2483 = vmatpush.bf16.msra.mxu0 %v825
    %2484 = vmatpush.bf16.msra.mxu0 %v823
    %2485 = vmatpush.bf16.msra.mxu0 %v821
    %2486 = vmatpush.bf16.msra.mxu0 %v819
    %2487 = vmatpush.bf16.msra.mxu0 %v817
    %2488 = vmatpush.bf16.msra.mxu0 %v815
    %2489 = vmatpush.bf16.msra.mxu0 %v813
    %2490 = vmatmul.bf16.gmra.mxu0 %v2426
    %v2491 = vpop.f32.mrf.mxu0
    %v2492 = vadd.f32 %v2479, %v2491
    %v2493 = vpop.f32.mrf.mxu0
    %2494 = vdwg.mxu0
    %2495 = vmatpush.bf16.msra.mxu0 %v843
    %2496 = vmatpush.bf16.msra.mxu0 %v841
    %2497 = vmatpush.bf16.msra.mxu0 %v839
    %2498 = vmatpush.bf16.msra.mxu0 %v837
    %2499 = vmatpush.bf16.msra.mxu0 %v835
    %2500 = vmatpush.bf16.msra.mxu0 %v833
    %2501 = vmatpush.bf16.msra.mxu0 %v831
    %2502 = vmatpush.bf16.msra.mxu0 %v829
    %2503 = vmatmul.bf16.gmra.mxu0 %v2427
    %v2504 = vpop.f32.mrf.mxu0
    %v2505 = vadd.f32 %v2492, %v2504
    %v2506 = vpop.f32.mrf.mxu0
    %2507 = vdwg.mxu0
    %2508 = vmatpush.bf16.msra.mxu0 %v859
    %2509 = vmatpush.bf16.msra.mxu0 %v857
    %2510 = vmatpush.bf16.msra.mxu0 %v855
    %2511 = vmatpush.bf16.msra.mxu0 %v853
    %2512 = vmatpush.bf16.msra.mxu0 %v851
    %2513 = vmatpush.bf16.msra.mxu0 %v849
    %2514 = vmatpush.bf16.msra.mxu0 %v847
    %2515 = vmatpush.bf16.msra.mxu0 %v845
    %2516 = vmatmul.bf16.gmra.mxu0 %v2428
    %v2517 = vpop.f32.mrf.mxu0
    %v2518 = vadd.f32 %v2505, %v2517
    %v2519 = vpop.f32.mrf.mxu0
    %2520 = vdwg.mxu0
    %2521 = vmatpush.bf16.msra.mxu0 %v875
    %2522 = vmatpush.bf16.msra.mxu0 %v873
    %2523 = vmatpush.bf16.msra.mxu0 %v871
    %2524 = vmatpush.bf16.msra.mxu0 %v869
    %2525 = vmatpush.bf16.msra.mxu0 %v867
    %2526 = vmatpush.bf16.msra.mxu0 %v865
    %2527 = vmatpush.bf16.msra.mxu0 %v863
    %2528 = vmatpush.bf16.msra.mxu0 %v861
    %2529 = vmatmul.bf16.gmra.mxu0 %v2429
    %v2530 = vpop.f32.mrf.mxu0
    %v2531 = vadd.f32 %v2518, %v2530
    %v2532 = vpop.f32.mrf.mxu0
    %2533 = vdwg.mxu0
    %2534 = vmatpush.bf16.msra.mxu0 %v764
    %2535 = vmatpush.bf16.msra.mxu0 %v762
    %2536 = vmatpush.bf16.msra.mxu0 %v760
    %2537 = vmatpush.bf16.msra.mxu0 %v758
    %2538 = vmatpush.bf16.msra.mxu0 %v756
    %2539 = vmatpush.bf16.msra.mxu0 %v754
    %2540 = vmatpush.bf16.msra.mxu0 %v752
    %2541 = vmatpush.bf16.msra.mxu0 %v750
    %2542 = vmatmul.bf16.gmra.mxu0 %v2422
    %v2543 = vpop.f32.mrf.mxu0
    %v2544 = vadd.f32 %v362, %v2543
    %v2545 = vpop.f32.mrf.mxu0
    %2546 = vdwg.mxu0
    %2547 = vmatpush.bf16.msra.mxu0 %v780
    %2548 = vmatpush.bf16.msra.mxu0 %v778
    %2549 = vmatpush.bf16.msra.mxu0 %v776
    %2550 = vmatpush.bf16.msra.mxu0 %v774
    %2551 = vmatpush.bf16.msra.mxu0 %v772
    %2552 = vmatpush.bf16.msra.mxu0 %v770
    %2553 = vmatpush.bf16.msra.mxu0 %v768
    %2554 = vmatpush.bf16.msra.mxu0 %v766
    %2555 = vmatmul.bf16.gmra.mxu0 %v2423
    %v2556 = vpop.f32.mrf.mxu0
    %v2557 = vadd.f32 %v2544, %v2556
    %v2558 = vpop.f32.mrf.mxu0
    %2559 = vdwg.mxu0
    %2560 = vmatpush.bf16.msra.mxu0 %v796
    %2561 = vmatpush.bf16.msra.mxu0 %v794
    %2562 = vmatpush.bf16.msra.mxu0 %v792
    %2563 = vmatpush.bf16.msra.mxu0 %v790
    %2564 = vmatpush.bf16.msra.mxu0 %v788
    %2565 = vmatpush.bf16.msra.mxu0 %v786
    %2566 = vmatpush.bf16.msra.mxu0 %v784
    %2567 = vmatpush.bf16.msra.mxu0 %v782
    %2568 = vmatmul.bf16.gmra.mxu0 %v2424
    %v2569 = vpop.f32.mrf.mxu0
    %v2570 = vadd.f32 %v2557, %v2569
    %v2571 = vpop.f32.mrf.mxu0
    %2572 = vdwg.mxu0
    %2573 = vmatpush.bf16.msra.mxu0 %v812
    %2574 = vmatpush.bf16.msra.mxu0 %v810
    %2575 = vmatpush.bf16.msra.mxu0 %v808
    %2576 = vmatpush.bf16.msra.mxu0 %v806
    %2577 = vmatpush.bf16.msra.mxu0 %v804
    %2578 = vmatpush.bf16.msra.mxu0 %v802
    %2579 = vmatpush.bf16.msra.mxu0 %v800
    %2580 = vmatpush.bf16.msra.mxu0 %v798
    %2581 = vmatmul.bf16.gmra.mxu0 %v2425
    %v2582 = vpop.f32.mrf.mxu0
    %v2583 = vadd.f32 %v2570, %v2582
    %v2584 = vpop.f32.mrf.mxu0
    %2585 = vdwg.mxu0
    %2586 = vmatpush.bf16.msra.mxu0 %v828
    %2587 = vmatpush.bf16.msra.mxu0 %v826
    %2588 = vmatpush.bf16.msra.mxu0 %v824
    %2589 = vmatpush.bf16.msra.mxu0 %v822
    %2590 = vmatpush.bf16.msra.mxu0 %v820
    %2591 = vmatpush.bf16.msra.mxu0 %v818
    %2592 = vmatpush.bf16.msra.mxu0 %v816
    %2593 = vmatpush.bf16.msra.mxu0 %v814
    %2594 = vmatmul.bf16.gmra.mxu0 %v2426
    %v2595 = vpop.f32.mrf.mxu0
    %v2596 = vadd.f32 %v2583, %v2595
    %v2597 = vpop.f32.mrf.mxu0
    %2598 = vdwg.mxu0
    %2599 = vmatpush.bf16.msra.mxu0 %v844
    %2600 = vmatpush.bf16.msra.mxu0 %v842
    %2601 = vmatpush.bf16.msra.mxu0 %v840
    %2602 = vmatpush.bf16.msra.mxu0 %v838
    %2603 = vmatpush.bf16.msra.mxu0 %v836
    %2604 = vmatpush.bf16.msra.mxu0 %v834
    %2605 = vmatpush.bf16.msra.mxu0 %v832
    %2606 = vmatpush.bf16.msra.mxu0 %v830
    %2607 = vmatmul.bf16.gmra.mxu0 %v2427
    %v2608 = vpop.f32.mrf.mxu0
    %v2609 = vadd.f32 %v2596, %v2608
    %v2610 = vpop.f32.mrf.mxu0
    %2611 = vdwg.mxu0
    %2612 = vmatpush.bf16.msra.mxu0 %v860
    %2613 = vmatpush.bf16.msra.mxu0 %v858
    %2614 = vmatpush.bf16.msra.mxu0 %v856
    %2615 = vmatpush.bf16.msra.mxu0 %v854
    %2616 = vmatpush.bf16.msra.mxu0 %v852
    %2617 = vmatpush.bf16.msra.mxu0 %v850
    %2618 = vmatpush.bf16.msra.mxu0 %v848
    %2619 = vmatpush.bf16.msra.mxu0 %v846
    %2620 = vmatmul.bf16.gmra.mxu0 %v2428
    %v2621 = vpop.f32.mrf.mxu0
    %v2622 = vadd.f32 %v2609, %v2621
    %v2623 = vpop.f32.mrf.mxu0
    %2624 = vdwg.mxu0
    %2625 = vmatpush.bf16.msra.mxu0 %v876
    %2626 = vmatpush.bf16.msra.mxu0 %v874
    %2627 = vmatpush.bf16.msra.mxu0 %v872
    %2628 = vmatpush.bf16.msra.mxu0 %v870
    %2629 = vmatpush.bf16.msra.mxu0 %v868
    %2630 = vmatpush.bf16.msra.mxu0 %v866
    %2631 = vmatpush.bf16.msra.mxu0 %v864
    %2632 = vmatpush.bf16.msra.mxu0 %v862
    %2633 = vmatmul.bf16.gmra.mxu0 %v2429
    %v2634 = vpop.f32.mrf.mxu0
    %v2635 = vadd.f32 %v2622, %v2634
    %v2636 = vpop.f32.mrf.mxu0
    %2637 = vdwg.mxu0
    %v2640 = vrot.slane %v2531, 6
    %v2641 = vrot.slane %v2635, 6
    %v2644 = vadd.f32 %v1218, %v2640
    %v2645 = vadd.f32 %v1219, %v2641
    %2648 = vst.sshfl [vmem:[#allocation1] sm:$0xff pattern:$0x73625140] %v2644
    %2649 = vst.sshfl [vmem:[#allocation1 + $0x8] sm:$0xff pattern:$0x73625140] %v2645
    %s2650 = scalar_lea.vmem [#allocation1], 1
    %v2651 = vld [vmem:[%s2650] ss:$4 sm:$0xff]
    %s2653 = scalar_lea.vmem %s8, 4
    %2654 = vst [vmem:[%s2653] sm:$0xf] %v2651
    %2655 = vst [vmem:[#allocation1] sm:$0xff] %v2644
    %s2656 = scalar_lea.vmem [#allocation1], 2
    %v2657 = vld [vmem:[%s2656] ss:$9 sm:$0xff]
    %s2658 = scalar_lea.vmem [#allocation1], 3
    %v2659 = vld [vmem:[%s2658] ss:$9 sm:$0xff]
    %2662 = vst [vmem:[#allocation1] sm:$0xff] %v2644
    %s2663 = scalar_lea.vmem [#allocation1], 2
    %v2664 = vld [vmem:[%s2663] ss:$9 sm:$0xff]
    %s2665 = scalar_lea.vmem [#allocation1], 3
    %v2666 = vld [vmem:[%s2665] ss:$9 sm:$0xff]
    %2667 = vst [vmem:[#allocation1] sm:$0xff] %v2644
    %s2668 = scalar_lea.vmem [#allocation1], 2
    %v2669 = vld [vmem:[%s2668] ss:$9 sm:$0xff]
    %s2670 = scalar_lea.vmem [#allocation1], 3
    %v2671 = vld [vmem:[%s2670] ss:$9 sm:$0xff]
    %2672 = vst [vmem:[#allocation1] sm:$0xff] %v2644
    %s2673 = scalar_lea.vmem [#allocation1], 2
    %v2674 = vld [vmem:[%s2673] ss:$9 sm:$0xff]
    %s2675 = scalar_lea.vmem [#allocation1], 3
    %v2676 = vld [vmem:[%s2675] ss:$9 sm:$0xff]
    %2677 = vst [vmem:[#allocation1] sm:$0xff] %v2645
    %s2678 = scalar_lea.vmem [#allocation1], 2
    %v2679 = vld [vmem:[%s2678] ss:$9 sm:$0xff]
    %s2680 = scalar_lea.vmem [#allocation1], 3
    %v2681 = vld [vmem:[%s2680] ss:$9 sm:$0xff]
    %2682 = vst [vmem:[#allocation1] sm:$0xff] %v2645
    %s2683 = scalar_lea.vmem [#allocation1], 2
    %v2684 = vld [vmem:[%s2683] ss:$9 sm:$0xff]
    %s2685 = scalar_lea.vmem [#allocation1], 3
    %v2686 = vld [vmem:[%s2685] ss:$9 sm:$0xff]
    %2687 = vst [vmem:[#allocation1] sm:$0xff] %v2645
    %s2688 = scalar_lea.vmem [#allocation1], 2
    %v2689 = vld [vmem:[%s2688] ss:$9 sm:$0xff]
    %s2690 = scalar_lea.vmem [#allocation1], 3
    %v2691 = vld [vmem:[%s2690] ss:$9 sm:$0xff]
    %2692 = vst [vmem:[#allocation1] sm:$0xff] %v2645
    %s2693 = scalar_lea.vmem [#allocation1], 2
    %v2694 = vld [vmem:[%s2693] ss:$9 sm:$0xff]
    %s2695 = scalar_lea.vmem [#allocation1], 3
    %v2696 = vld [vmem:[%s2695] ss:$9 sm:$0xff]
    %v2697 = vperm.slane %v2664, 0
    %v2698 = vperm.slane %v2666, 0
    %2699 = vrot.lane.b32.xlu0 %v2697, 96
    %v2700 = vpop.permute.xlu0 %2699
    %2701 = vrot.lane.b32.xlu0 %v2698, 96
    %v2702 = vpop.permute.xlu0 %2701
    %v2705 = vperm.slane %v2669, 0
    %v2706 = vperm.slane %v2671, 0
    %2707 = vrot.lane.b32.xlu0 %v2705, 64
    %v2708 = vpop.permute.xlu0 %2707
    %2709 = vrot.lane.b32.xlu0 %v2706, 64
    %v2710 = vpop.permute.xlu0 %2709
    %v2713 = vperm.slane %v2674, 0
    %v2714 = vperm.slane %v2676, 0
    %2715 = vrot.lane.b32.xlu0 %v2713, 32
    %v2716 = vpop.permute.xlu0 %2715
    %2717 = vrot.lane.b32.xlu0 %v2714, 32
    %v2718 = vpop.permute.xlu0 %2717
    %v2721 = vperm.slane %v2679, 0
    %v2722 = vperm.slane %v2681, 0
    %v2725 = vperm.slane %v2684, 0
    %v2726 = vperm.slane %v2686, 0
    %2727 = vrot.lane.b32.xlu0 %v2725, 96
    %v2728 = vpop.permute.xlu0 %2727
    %2729 = vrot.lane.b32.xlu0 %v2726, 96
    %v2730 = vpop.permute.xlu0 %2729
    %v2733 = vperm.slane %v2689, 0
    %v2734 = vperm.slane %v2691, 0
    %2735 = vrot.lane.b32.xlu0 %v2733, 64
    %v2736 = vpop.permute.xlu0 %2735
    %2737 = vrot.lane.b32.xlu0 %v2734, 64
    %v2738 = vpop.permute.xlu0 %2737
    %v2741 = vperm.slane %v2694, 0
    %v2742 = vperm.slane %v2696, 0
    %2743 = vrot.lane.b32.xlu0 %v2741, 32
    %v2744 = vpop.permute.xlu0 %2743
    %2745 = vrot.lane.b32.xlu0 %v2742, 32
    %v2746 = vpop.permute.xlu0 %2745
    %v2749 = vsel %vm1322, %v2657, %v2700
    %v2750 = vsel %vm1322, %v2659, %v2702
    %v2751 = vsel %vm1325, %v2749, %v2708
    %v2752 = vsel %vm1325, %v2750, %v2710
    %v2753 = vsel %vm1328, %v2751, %v2716
    %v2754 = vsel %vm1328, %v2752, %v2718
    %v2755 = vsel %vm1331, %v2753, %v2721
    %v2756 = vsel %vm1331, %v2754, %v2722
    %v2757 = vsel %vm1334, %v2755, %v2728
    %v2758 = vsel %vm1334, %v2756, %v2730
    %v2759 = vsel %vm1337, %v2757, %v2736
    %v2760 = vsel %vm1337, %v2758, %v2738
    %v2761 = vsel %vm1340, %v2759, %v2744
    %v2762 = vsel %vm1340, %v2760, %v2746
    %v2764 = vsel %vm1343, %v2761, 0
    %2766 = vmatpush.xpose.msra.mxu0 0.0
    %2767 = vmatpush.xpose.msra.mxu0 0.0
    %2768 = vmatpush.xpose.msra.mxu0 0.0
    %2769 = vmatpush.xpose.msra.mxu0 0.0
    %2770 = vmatpush.xpose.msra.mxu0 0.0
    %2771 = vmatpush.xpose.msra.mxu0 0.0
    %2772 = vmatpush.xpose.msra.mxu0 0.0
    %2773 = vmatpush.xpose.msra.mxu0 0.0
    %2774 = vmatpush.xpose.msra.mxu0 0.0
    %2775 = vmatpush.xpose.msra.mxu0 0.0
    %2776 = vmatpush.xpose.msra.mxu0 0.0
    %2777 = vmatpush.xpose.msra.mxu0 0.0
    %2778 = vmatpush.xpose.msra.mxu0 0.0
    %2779 = vmatpush.xpose.msra.mxu0 0.0
    %2780 = vmatpush.xpose.msra.mxu0 0.0
    %2781 = vmatpush.xpose.msra.mxu0 %v1348
    %2782 = vmatmul.f32.gmra.mxu0 %v2764
    %v2783 = vpop.f32.mrf.mxu0
    %v2784 = vadd.f32 0.0, %v2783
    %2785 = vdwg.mxu0
    %v2787 = vsel %vm1343, %v2762, 0
    %2789 = vmatpush.xpose.msra.mxu0 0.0
    %2790 = vmatpush.xpose.msra.mxu0 0.0
    %2791 = vmatpush.xpose.msra.mxu0 0.0
    %2792 = vmatpush.xpose.msra.mxu0 0.0
    %2793 = vmatpush.xpose.msra.mxu0 0.0
    %2794 = vmatpush.xpose.msra.mxu0 0.0
    %2795 = vmatpush.xpose.msra.mxu0 0.0
    %2796 = vmatpush.xpose.msra.mxu0 0.0
    %2797 = vmatpush.xpose.msra.mxu0 0.0
    %2798 = vmatpush.xpose.msra.mxu0 0.0
    %2799 = vmatpush.xpose.msra.mxu0 0.0
    %2800 = vmatpush.xpose.msra.mxu0 0.0
    %2801 = vmatpush.xpose.msra.mxu0 0.0
    %2802 = vmatpush.xpose.msra.mxu0 0.0
    %2803 = vmatpush.xpose.msra.mxu0 0.0
    %2804 = vmatpush.xpose.msra.mxu0 %v1374
    %2805 = vmatmul.f32.gmra.mxu0 %v2787
    %v2806 = vpop.f32.mrf.mxu0
    %v2807 = vadd.f32 0.0, %v2806
    %2808 = vdwg.mxu0
    %v2809 = vmul.f32 %v2784, 0.17677669
    %v2810 = vmul.f32 %v2807, 0.17677669
    %v2811 = vsel %vm1398, %v2809, -inf
    %2812 = vmax.xlane.f32.xlu0 %v2811
    %v2813 = vpop.xlane.xlu0 %2812
    %v2814 = vsel %vm1398, %v2810, -inf
    %2815 = vmax.xlane.f32.xlu0 %v2814
    %v2816 = vpop.xlane.xlu0 %2815
    %v2817 = vsub.f32 %v2809, %v2813
    %v2818 = vsub.f32 %v2810, %v2816
    %v2819 = vmul.f32 %v2817, 1.442695
    %v2820 = vpow.pop %v2819
    %v2821 = vmul.f32 %v2818, 1.442695
    %v2822 = vpow.pop %v2821
    %v2823 = vsel %vm1398, %v2820, 0.0
    %2824 = vadd.xlane.f32.xlu0 %v2823
    %v2825 = vpop.xlane.xlu0 %2824
    %v2826 = vsel %vm1398, %v2822, 0.0
    %2827 = vadd.xlane.f32.xlu0 %v2826
    %v2828 = vpop.xlane.xlu0 %2827
    %v2829 = vrcp.pop %v2825
    %v2830 = vrcp.pop %v2828
    %v2831 = vmul.f32 %v2820, %v2829
    %v2832 = vmul.f32 %v2822, %v2830
    %v2834 = vsel %vm1398, %v2831, 0
    %2836 = vmatpush.msra.mxu0 0.0
    %2837 = vmatpush.msra.mxu0 0.0
    %2838 = vmatpush.msra.mxu0 0.0
    %2839 = vmatpush.msra.mxu0 0.0
    %2840 = vmatpush.msra.mxu0 0.0
    %2841 = vmatpush.msra.mxu0 0.0
    %2842 = vmatpush.msra.mxu0 0.0
    %2843 = vmatpush.msra.mxu0 0.0
    %2844 = vmatpush.msra.mxu0 0.0
    %2845 = vmatpush.msra.mxu0 0.0
    %2846 = vmatpush.msra.mxu0 0.0
    %2847 = vmatpush.msra.mxu0 0.0
    %2848 = vmatpush.msra.mxu0 0.0
    %2849 = vmatpush.msra.mxu0 0.0
    %2850 = vmatpush.msra.mxu0 0.0
    %2851 = vmatpush.msra.mxu0 %v319
    %2852 = vmatmul.f32.gmra.mxu0 %v2834
    %v2853 = vpop.f32.mrf.mxu0
    %v2854 = vadd.f32 0.0, %v2853
    %2855 = vdwg.mxu0
    %v2857 = vsel %vm1398, %v2832, 0
    %2859 = vmatpush.msra.mxu0 0.0
    %2860 = vmatpush.msra.mxu0 0.0
    %2861 = vmatpush.msra.mxu0 0.0
    %2862 = vmatpush.msra.mxu0 0.0
    %2863 = vmatpush.msra.mxu0 0.0
    %2864 = vmatpush.msra.mxu0 0.0
    %2865 = vmatpush.msra.mxu0 0.0
    %2866 = vmatpush.msra.mxu0 0.0
    %2867 = vmatpush.msra.mxu0 0.0
    %2868 = vmatpush.msra.mxu0 0.0
    %2869 = vmatpush.msra.mxu0 0.0
    %2870 = vmatpush.msra.mxu0 0.0
    %2871 = vmatpush.msra.mxu0 0.0
    %2872 = vmatpush.msra.mxu0 0.0
    %2873 = vmatpush.msra.mxu0 0.0
    %2874 = vmatpush.msra.mxu0 %v320
    %2875 = vmatmul.f32.gmra.mxu0 %v2857
    %v2876 = vpop.f32.mrf.mxu0
    %v2877 = vadd.f32 0.0, %v2876
    %2878 = vdwg.mxu0
    %v2881 = vrot.slane %v2877, 7
    %v2882 = vsel %vm1470, %v2881, %v2854
    %v2884 = vrot.slane %v2854, 1
    %v2885 = vsel %vm1470, %v2877, %v2884
    %2886 = vrot.lane.b32.xlu0 %v2885, 32
    %v2887 = vpop.permute.xlu0 %2886
    %v2889 = vrot.slane %v2854, 2
    %v2890 = vrot.slane %v2877, 1
    %v2891 = vsel %vm1470, %v2890, %v2889
    %2892 = vrot.lane.b32.xlu0 %v2891, 64
    %v2893 = vpop.permute.xlu0 %2892
    %v2895 = vrot.slane %v2854, 3
    %v2896 = vrot.slane %v2877, 2
    %v2897 = vsel %vm1470, %v2896, %v2895
    %2898 = vrot.lane.b32.xlu0 %v2897, 96
    %v2899 = vpop.permute.xlu0 %2898
    %v2901 = vrot.slane %v2854, 4
    %v2902 = vrot.slane %v2877, 3
    %v2903 = vsel %vm1470, %v2902, %v2901
    %v2905 = vrot.slane %v2854, 5
    %v2906 = vrot.slane %v2877, 4
    %v2907 = vsel %vm1470, %v2906, %v2905
    %2908 = vrot.lane.b32.xlu0 %v2907, 32
    %v2909 = vpop.permute.xlu0 %2908
    %v2911 = vrot.slane %v2854, 6
    %v2912 = vrot.slane %v2877, 5
    %v2913 = vsel %vm1470, %v2912, %v2911
    %2914 = vrot.lane.b32.xlu0 %v2913, 64
    %v2915 = vpop.permute.xlu0 %2914
    %v2917 = vrot.slane %v2854, 7
    %v2918 = vrot.slane %v2877, 6
    %v2919 = vsel %vm1470, %v2918, %v2917
    %2920 = vrot.lane.b32.xlu0 %v2919, 96
    %v2921 = vpop.permute.xlu0 %2920
    %v2923 = vsel %vm1343, %v2882, %v2887
    %v2924 = vsel %vm1513, %v2923, %v2893
    %v2925 = vsel %vm1515, %v2924, %v2899
    %v2926 = vsel %vm1343, %v2903, %v2909
    %v2927 = vsel %vm1513, %v2926, %v2915
    %v2928 = vsel %vm1515, %v2927, %v2921
    %v2929 = vadd.f32 %v2925, %v1218
    %v2930 = vadd.f32 %v2928, %v1219
    %v2931 = vpack.c.bf16 %v2929, %v2929
    %v2932 = vpack.c.bf16 %v2930, %v2930
    %2933 = vmatpush.bf16.msra.mxu0 %v1981
    %2934 = vmatpush.bf16.msra.mxu0 %v1973
    %2935 = vmatpush.bf16.msra.mxu0 %v1965
    %2936 = vmatpush.bf16.msra.mxu0 %v1957
    %2937 = vmatpush.bf16.msra.mxu0 %v1949
    %2938 = vmatpush.bf16.msra.mxu0 %v1941
    %2939 = vmatpush.bf16.msra.mxu0 %v1933
    %2940 = vmatpush.bf16.msra.mxu0 %v1925
    %2941 = vmatmul.bf16.gmra.mxu0 %v2931
    %v2942 = vpop.f32.mrf.mxu0
    %v2943 = vadd.f32 %v1525, %v2942
    %v2944 = vpop.f32.mrf.mxu0
    %2945 = vdwg.mxu0
    %2946 = vmatpush.bf16.msra.mxu0 %v2045
    %2947 = vmatpush.bf16.msra.mxu0 %v2037
    %2948 = vmatpush.bf16.msra.mxu0 %v2029
    %2949 = vmatpush.bf16.msra.mxu0 %v2021
    %2950 = vmatpush.bf16.msra.mxu0 %v2013
    %2951 = vmatpush.bf16.msra.mxu0 %v2005
    %2952 = vmatpush.bf16.msra.mxu0 %v1997
    %2953 = vmatpush.bf16.msra.mxu0 %v1989
    %2954 = vmatmul.bf16.gmra.mxu0 %v2932
    %v2955 = vpop.f32.mrf.mxu0
    %v2956 = vadd.f32 %v2943, %v2955
    %v2957 = vpop.f32.mrf.mxu0
    %2958 = vdwg.mxu0
    %2959 = vmatpush.bf16.msra.mxu0 %v1982
    %2960 = vmatpush.bf16.msra.mxu0 %v1974
    %2961 = vmatpush.bf16.msra.mxu0 %v1966
    %2962 = vmatpush.bf16.msra.mxu0 %v1958
    %2963 = vmatpush.bf16.msra.mxu0 %v1950
    %2964 = vmatpush.bf16.msra.mxu0 %v1942
    %2965 = vmatpush.bf16.msra.mxu0 %v1934
    %2966 = vmatpush.bf16.msra.mxu0 %v1926
    %2967 = vmatmul.bf16.gmra.mxu0 %v2931
    %v2968 = vpop.f32.mrf.mxu0
    %v2969 = vadd.f32 %v1526, %v2968
    %v2970 = vpop.f32.mrf.mxu0
    %2971 = vdwg.mxu0
    %2972 = vmatpush.bf16.msra.mxu0 %v2046
    %2973 = vmatpush.bf16.msra.mxu0 %v2038
    %2974 = vmatpush.bf16.msra.mxu0 %v2030
    %2975 = vmatpush.bf16.msra.mxu0 %v2022
    %2976 = vmatpush.bf16.msra.mxu0 %v2014
    %2977 = vmatpush.bf16.msra.mxu0 %v2006
    %2978 = vmatpush.bf16.msra.mxu0 %v1998
    %2979 = vmatpush.bf16.msra.mxu0 %v1990
    %2980 = vmatmul.bf16.gmra.mxu0 %v2932
    %v2981 = vpop.f32.mrf.mxu0
    %v2982 = vadd.f32 %v2969, %v2981
    %v2983 = vpop.f32.mrf.mxu0
    %2984 = vdwg.mxu0
    %2985 = vmatpush.bf16.msra.mxu0 %v1983
    %2986 = vmatpush.bf16.msra.mxu0 %v1975
    %2987 = vmatpush.bf16.msra.mxu0 %v1967
    %2988 = vmatpush.bf16.msra.mxu0 %v1959
    %2989 = vmatpush.bf16.msra.mxu0 %v1951
    %2990 = vmatpush.bf16.msra.mxu0 %v1943
    %2991 = vmatpush.bf16.msra.mxu0 %v1935
    %2992 = vmatpush.bf16.msra.mxu0 %v1927
    %2993 = vmatmul.bf16.gmra.mxu0 %v2931
    %v2994 = vpop.f32.mrf.mxu0
    %v2995 = vadd.f32 %v1527, %v2994
    %v2996 = vpop.f32.mrf.mxu0
    %2997 = vdwg.mxu0
    %2998 = vmatpush.bf16.msra.mxu0 %v2047
    %2999 = vmatpush.bf16.msra.mxu0 %v2039
    %3000 = vmatpush.bf16.msra.mxu0 %v2031
    %3001 = vmatpush.bf16.msra.mxu0 %v2023
    %3002 = vmatpush.bf16.msra.mxu0 %v2015
    %3003 = vmatpush.bf16.msra.mxu0 %v2007
    %3004 = vmatpush.bf16.msra.mxu0 %v1999
    %3005 = vmatpush.bf16.msra.mxu0 %v1991
    %3006 = vmatmul.bf16.gmra.mxu0 %v2932
    %v3007 = vpop.f32.mrf.mxu0
    %v3008 = vadd.f32 %v2995, %v3007
    %v3009 = vpop.f32.mrf.mxu0
    %3010 = vdwg.mxu0
    %3011 = vmatpush.bf16.msra.mxu0 %v1984
    %3012 = vmatpush.bf16.msra.mxu0 %v1976
    %3013 = vmatpush.bf16.msra.mxu0 %v1968
    %3014 = vmatpush.bf16.msra.mxu0 %v1960
    %3015 = vmatpush.bf16.msra.mxu0 %v1952
    %3016 = vmatpush.bf16.msra.mxu0 %v1944
    %3017 = vmatpush.bf16.msra.mxu0 %v1936
    %3018 = vmatpush.bf16.msra.mxu0 %v1928
    %3019 = vmatmul.bf16.gmra.mxu0 %v2931
    %v3020 = vpop.f32.mrf.mxu0
    %v3021 = vadd.f32 %v1528, %v3020
    %v3022 = vpop.f32.mrf.mxu0
    %3023 = vdwg.mxu0
    %3024 = vmatpush.bf16.msra.mxu0 %v2048
    %3025 = vmatpush.bf16.msra.mxu0 %v2040
    %3026 = vmatpush.bf16.msra.mxu0 %v2032
    %3027 = vmatpush.bf16.msra.mxu0 %v2024
    %3028 = vmatpush.bf16.msra.mxu0 %v2016
    %3029 = vmatpush.bf16.msra.mxu0 %v2008
    %3030 = vmatpush.bf16.msra.mxu0 %v2000
    %3031 = vmatpush.bf16.msra.mxu0 %v1992
    %3032 = vmatmul.bf16.gmra.mxu0 %v2932
    %v3033 = vpop.f32.mrf.mxu0
    %v3034 = vadd.f32 %v3021, %v3033
    %v3035 = vpop.f32.mrf.mxu0
    %3036 = vdwg.mxu0
    %3037 = vmatpush.bf16.msra.mxu0 %v1985
    %3038 = vmatpush.bf16.msra.mxu0 %v1977
    %3039 = vmatpush.bf16.msra.mxu0 %v1969
    %3040 = vmatpush.bf16.msra.mxu0 %v1961
    %3041 = vmatpush.bf16.msra.mxu0 %v1953
    %3042 = vmatpush.bf16.msra.mxu0 %v1945
    %3043 = vmatpush.bf16.msra.mxu0 %v1937
    %3044 = vmatpush.bf16.msra.mxu0 %v1929
    %3045 = vmatmul.bf16.gmra.mxu0 %v2931
    %v3046 = vpop.f32.mrf.mxu0
    %v3047 = vadd.f32 %v1529, %v3046
    %v3048 = vpop.f32.mrf.mxu0
    %3049 = vdwg.mxu0
    %3050 = vmatpush.bf16.msra.mxu0 %v2049
    %3051 = vmatpush.bf16.msra.mxu0 %v2041
    %3052 = vmatpush.bf16.msra.mxu0 %v2033
    %3053 = vmatpush.bf16.msra.mxu0 %v2025
    %3054 = vmatpush.bf16.msra.mxu0 %v2017
    %3055 = vmatpush.bf16.msra.mxu0 %v2009
    %3056 = vmatpush.bf16.msra.mxu0 %v2001
    %3057 = vmatpush.bf16.msra.mxu0 %v1993
    %3058 = vmatmul.bf16.gmra.mxu0 %v2932
    %v3059 = vpop.f32.mrf.mxu0
    %v3060 = vadd.f32 %v3047, %v3059
    %v3061 = vpop.f32.mrf.mxu0
    %3062 = vdwg.mxu0
    %3063 = vmatpush.bf16.msra.mxu0 %v1986
    %3064 = vmatpush.bf16.msra.mxu0 %v1978
    %3065 = vmatpush.bf16.msra.mxu0 %v1970
    %3066 = vmatpush.bf16.msra.mxu0 %v1962
    %3067 = vmatpush.bf16.msra.mxu0 %v1954
    %3068 = vmatpush.bf16.msra.mxu0 %v1946
    %3069 = vmatpush.bf16.msra.mxu0 %v1938
    %3070 = vmatpush.bf16.msra.mxu0 %v1930
    %3071 = vmatmul.bf16.gmra.mxu0 %v2931
    %v3072 = vpop.f32.mrf.mxu0
    %v3073 = vadd.f32 %v1530, %v3072
    %v3074 = vpop.f32.mrf.mxu0
    %3075 = vdwg.mxu0
    %3076 = vmatpush.bf16.msra.mxu0 %v2050
    %3077 = vmatpush.bf16.msra.mxu0 %v2042
    %3078 = vmatpush.bf16.msra.mxu0 %v2034
    %3079 = vmatpush.bf16.msra.mxu0 %v2026
    %3080 = vmatpush.bf16.msra.mxu0 %v2018
    %3081 = vmatpush.bf16.msra.mxu0 %v2010
    %3082 = vmatpush.bf16.msra.mxu0 %v2002
    %3083 = vmatpush.bf16.msra.mxu0 %v1994
    %3084 = vmatmul.bf16.gmra.mxu0 %v2932
    %v3085 = vpop.f32.mrf.mxu0
    %v3086 = vadd.f32 %v3073, %v3085
    %v3087 = vpop.f32.mrf.mxu0
    %3088 = vdwg.mxu0
    %3089 = vmatpush.bf16.msra.mxu0 %v1987
    %3090 = vmatpush.bf16.msra.mxu0 %v1979
    %3091 = vmatpush.bf16.msra.mxu0 %v1971
    %3092 = vmatpush.bf16.msra.mxu0 %v1963
    %3093 = vmatpush.bf16.msra.mxu0 %v1955
    %3094 = vmatpush.bf16.msra.mxu0 %v1947
    %3095 = vmatpush.bf16.msra.mxu0 %v1939
    %3096 = vmatpush.bf16.msra.mxu0 %v1931
    %3097 = vmatmul.bf16.gmra.mxu0 %v2931
    %v3098 = vpop.f32.mrf.mxu0
    %v3099 = vadd.f32 %v1531, %v3098
    %v3100 = vpop.f32.mrf.mxu0
    %3101 = vdwg.mxu0
    %3102 = vmatpush.bf16.msra.mxu0 %v2051
    %3103 = vmatpush.bf16.msra.mxu0 %v2043
    %3104 = vmatpush.bf16.msra.mxu0 %v2035
    %3105 = vmatpush.bf16.msra.mxu0 %v2027
    %3106 = vmatpush.bf16.msra.mxu0 %v2019
    %3107 = vmatpush.bf16.msra.mxu0 %v2011
    %3108 = vmatpush.bf16.msra.mxu0 %v2003
    %3109 = vmatpush.bf16.msra.mxu0 %v1995
    %3110 = vmatmul.bf16.gmra.mxu0 %v2932
    %v3111 = vpop.f32.mrf.mxu0
    %v3112 = vadd.f32 %v3099, %v3111
    %v3113 = vpop.f32.mrf.mxu0
    %3114 = vdwg.mxu0
    %3115 = vmatpush.bf16.msra.mxu0 %v1988
    %3116 = vmatpush.bf16.msra.mxu0 %v1980
    %3117 = vmatpush.bf16.msra.mxu0 %v1972
    %3118 = vmatpush.bf16.msra.mxu0 %v1964
    %3119 = vmatpush.bf16.msra.mxu0 %v1956
    %3120 = vmatpush.bf16.msra.mxu0 %v1948
    %3121 = vmatpush.bf16.msra.mxu0 %v1940
    %3122 = vmatpush.bf16.msra.mxu0 %v1932
    %3123 = vmatmul.bf16.gmra.mxu0 %v2931
    %v3124 = vpop.f32.mrf.mxu0
    %v3125 = vadd.f32 %v1532, %v3124
    %v3126 = vpop.f32.mrf.mxu0
    %3127 = vdwg.mxu0
    %3128 = vmatpush.bf16.msra.mxu0 %v2052
    %3129 = vmatpush.bf16.msra.mxu0 %v2044
    %3130 = vmatpush.bf16.msra.mxu0 %v2036
    %3131 = vmatpush.bf16.msra.mxu0 %v2028
    %3132 = vmatpush.bf16.msra.mxu0 %v2020
    %3133 = vmatpush.bf16.msra.mxu0 %v2012
    %3134 = vmatpush.bf16.msra.mxu0 %v2004
    %3135 = vmatpush.bf16.msra.mxu0 %v1996
    %3136 = vmatmul.bf16.gmra.mxu0 %v2932
    %v3137 = vpop.f32.mrf.mxu0
    %v3138 = vadd.f32 %v3125, %v3137
    %v3139 = vpop.f32.mrf.mxu0
    %3140 = vdwg.mxu0
    %v3141 = vtanh.pop %v2956
    %v3142 = vtanh.pop %v2982
    %v3143 = vtanh.pop %v3008
    %v3144 = vtanh.pop %v3034
    %v3145 = vtanh.pop %v3060
    %v3146 = vtanh.pop %v3086
    %v3147 = vtanh.pop %v3112
    %v3148 = vtanh.pop %v3138
    %v3157 = vrot.slane %v3142, 6
    %v3158 = vrot.slane %v3143, 4
    %v3159 = vrot.slane %v3144, 2
    %v3160 = vrot.slane %v3146, 6
    %v3161 = vrot.slane %v3147, 4
    %v3162 = vrot.slane %v3148, 2
    %v3163 = vsel %vm1325, %v3141, %v3157
    %v3164 = vsel %vm2412, %v3158, %v3159
    %v3165 = vsel %vm1331, %v3163, %v3164
    %v3166 = vsel %vm1325, %v3145, %v3160
    %v3167 = vsel %vm2412, %v3161, %v3162
    %v3168 = vsel %vm1331, %v3166, %v3167
    %s3171 = scalar_lea.vmem %s7, 16
    %3172 = vst [vmem:[%s3171] sm:$0xff] %v3165
    %3173 = vst [vmem:[%s3171 + $0x8] sm:$0xff] %v3168
    %v3174 = vpack.c.bf16 %v3141, %v3141
    %v3175 = vpack.c.bf16 %v3142, %v3142
    %v3176 = vpack.c.bf16 %v3143, %v3143
    %v3177 = vpack.c.bf16 %v3144, %v3144
    %v3178 = vpack.c.bf16 %v3145, %v3145
    %v3179 = vpack.c.bf16 %v3146, %v3146
    %v3180 = vpack.c.bf16 %v3147, %v3147
    %v3181 = vpack.c.bf16 %v3148, %v3148
    %3182 = vmatpush.bf16.msra.mxu0 %v763
    %3183 = vmatpush.bf16.msra.mxu0 %v761
    %3184 = vmatpush.bf16.msra.mxu0 %v759
    %3185 = vmatpush.bf16.msra.mxu0 %v757
    %3186 = vmatpush.bf16.msra.mxu0 %v755
    %3187 = vmatpush.bf16.msra.mxu0 %v753
    %3188 = vmatpush.bf16.msra.mxu0 %v751
    %3189 = vmatpush.bf16.msra.mxu0 %v749
    %3190 = vmatmul.bf16.gmra.mxu0 %v3174
    %v3191 = vpop.f32.mrf.mxu0
    %v3192 = vadd.f32 %v361, %v3191
    %v3193 = vpop.f32.mrf.mxu0
    %3194 = vdwg.mxu0
    %3195 = vmatpush.bf16.msra.mxu0 %v779
    %3196 = vmatpush.bf16.msra.mxu0 %v777
    %3197 = vmatpush.bf16.msra.mxu0 %v775
    %3198 = vmatpush.bf16.msra.mxu0 %v773
    %3199 = vmatpush.bf16.msra.mxu0 %v771
    %3200 = vmatpush.bf16.msra.mxu0 %v769
    %3201 = vmatpush.bf16.msra.mxu0 %v767
    %3202 = vmatpush.bf16.msra.mxu0 %v765
    %3203 = vmatmul.bf16.gmra.mxu0 %v3175
    %v3204 = vpop.f32.mrf.mxu0
    %v3205 = vadd.f32 %v3192, %v3204
    %v3206 = vpop.f32.mrf.mxu0
    %3207 = vdwg.mxu0
    %3208 = vmatpush.bf16.msra.mxu0 %v795
    %3209 = vmatpush.bf16.msra.mxu0 %v793
    %3210 = vmatpush.bf16.msra.mxu0 %v791
    %3211 = vmatpush.bf16.msra.mxu0 %v789
    %3212 = vmatpush.bf16.msra.mxu0 %v787
    %3213 = vmatpush.bf16.msra.mxu0 %v785
    %3214 = vmatpush.bf16.msra.mxu0 %v783
    %3215 = vmatpush.bf16.msra.mxu0 %v781
    %3216 = vmatmul.bf16.gmra.mxu0 %v3176
    %v3217 = vpop.f32.mrf.mxu0
    %v3218 = vadd.f32 %v3205, %v3217
    %v3219 = vpop.f32.mrf.mxu0
    %3220 = vdwg.mxu0
    %3221 = vmatpush.bf16.msra.mxu0 %v811
    %3222 = vmatpush.bf16.msra.mxu0 %v809
    %3223 = vmatpush.bf16.msra.mxu0 %v807
    %3224 = vmatpush.bf16.msra.mxu0 %v805
    %3225 = vmatpush.bf16.msra.mxu0 %v803
    %3226 = vmatpush.bf16.msra.mxu0 %v801
    %3227 = vmatpush.bf16.msra.mxu0 %v799
    %3228 = vmatpush.bf16.msra.mxu0 %v797
    %3229 = vmatmul.bf16.gmra.mxu0 %v3177
    %v3230 = vpop.f32.mrf.mxu0
    %v3231 = vadd.f32 %v3218, %v3230
    %v3232 = vpop.f32.mrf.mxu0
    %3233 = vdwg.mxu0
    %3234 = vmatpush.bf16.msra.mxu0 %v827
    %3235 = vmatpush.bf16.msra.mxu0 %v825
    %3236 = vmatpush.bf16.msra.mxu0 %v823
    %3237 = vmatpush.bf16.msra.mxu0 %v821
    %3238 = vmatpush.bf16.msra.mxu0 %v819
    %3239 = vmatpush.bf16.msra.mxu0 %v817
    %3240 = vmatpush.bf16.msra.mxu0 %v815
    %3241 = vmatpush.bf16.msra.mxu0 %v813
    %3242 = vmatmul.bf16.gmra.mxu0 %v3178
    %v3243 = vpop.f32.mrf.mxu0
    %v3244 = vadd.f32 %v3231, %v3243
    %v3245 = vpop.f32.mrf.mxu0
    %3246 = vdwg.mxu0
    %3247 = vmatpush.bf16.msra.mxu0 %v843
    %3248 = vmatpush.bf16.msra.mxu0 %v841
    %3249 = vmatpush.bf16.msra.mxu0 %v839
    %3250 = vmatpush.bf16.msra.mxu0 %v837
    %3251 = vmatpush.bf16.msra.mxu0 %v835
    %3252 = vmatpush.bf16.msra.mxu0 %v833
    %3253 = vmatpush.bf16.msra.mxu0 %v831
    %3254 = vmatpush.bf16.msra.mxu0 %v829
    %3255 = vmatmul.bf16.gmra.mxu0 %v3179
    %v3256 = vpop.f32.mrf.mxu0
    %v3257 = vadd.f32 %v3244, %v3256
    %v3258 = vpop.f32.mrf.mxu0
    %3259 = vdwg.mxu0
    %3260 = vmatpush.bf16.msra.mxu0 %v859
    %3261 = vmatpush.bf16.msra.mxu0 %v857
    %3262 = vmatpush.bf16.msra.mxu0 %v855
    %3263 = vmatpush.bf16.msra.mxu0 %v853
    %3264 = vmatpush.bf16.msra.mxu0 %v851
    %3265 = vmatpush.bf16.msra.mxu0 %v849
    %3266 = vmatpush.bf16.msra.mxu0 %v847
    %3267 = vmatpush.bf16.msra.mxu0 %v845
    %3268 = vmatmul.bf16.gmra.mxu0 %v3180
    %v3269 = vpop.f32.mrf.mxu0
    %v3270 = vadd.f32 %v3257, %v3269
    %v3271 = vpop.f32.mrf.mxu0
    %3272 = vdwg.mxu0
    %3273 = vmatpush.bf16.msra.mxu0 %v875
    %3274 = vmatpush.bf16.msra.mxu0 %v873
    %3275 = vmatpush.bf16.msra.mxu0 %v871
    %3276 = vmatpush.bf16.msra.mxu0 %v869
    %3277 = vmatpush.bf16.msra.mxu0 %v867
    %3278 = vmatpush.bf16.msra.mxu0 %v865
    %3279 = vmatpush.bf16.msra.mxu0 %v863
    %3280 = vmatpush.bf16.msra.mxu0 %v861
    %3281 = vmatmul.bf16.gmra.mxu0 %v3181
    %v3282 = vpop.f32.mrf.mxu0
    %v3283 = vadd.f32 %v3270, %v3282
    %v3284 = vpop.f32.mrf.mxu0
    %3285 = vdwg.mxu0
    %3286 = vmatpush.bf16.msra.mxu0 %v764
    %3287 = vmatpush.bf16.msra.mxu0 %v762
    %3288 = vmatpush.bf16.msra.mxu0 %v760
    %3289 = vmatpush.bf16.msra.mxu0 %v758
    %3290 = vmatpush.bf16.msra.mxu0 %v756
    %3291 = vmatpush.bf16.msra.mxu0 %v754
    %3292 = vmatpush.bf16.msra.mxu0 %v752
    %3293 = vmatpush.bf16.msra.mxu0 %v750
    %3294 = vmatmul.bf16.gmra.mxu0 %v3174
    %v3295 = vpop.f32.mrf.mxu0
    %v3296 = vadd.f32 %v362, %v3295
    %v3297 = vpop.f32.mrf.mxu0
    %3298 = vdwg.mxu0
    %3299 = vmatpush.bf16.msra.mxu0 %v780
    %3300 = vmatpush.bf16.msra.mxu0 %v778
    %3301 = vmatpush.bf16.msra.mxu0 %v776
    %3302 = vmatpush.bf16.msra.mxu0 %v774
    %3303 = vmatpush.bf16.msra.mxu0 %v772
    %3304 = vmatpush.bf16.msra.mxu0 %v770
    %3305 = vmatpush.bf16.msra.mxu0 %v768
    %3306 = vmatpush.bf16.msra.mxu0 %v766
    %3307 = vmatmul.bf16.gmra.mxu0 %v3175
    %v3308 = vpop.f32.mrf.mxu0
    %v3309 = vadd.f32 %v3296, %v3308
    %v3310 = vpop.f32.mrf.mxu0
    %3311 = vdwg.mxu0
    %3312 = vmatpush.bf16.msra.mxu0 %v796
    %3313 = vmatpush.bf16.msra.mxu0 %v794
    %3314 = vmatpush.bf16.msra.mxu0 %v792
    %3315 = vmatpush.bf16.msra.mxu0 %v790
    %3316 = vmatpush.bf16.msra.mxu0 %v788
    %3317 = vmatpush.bf16.msra.mxu0 %v786
    %3318 = vmatpush.bf16.msra.mxu0 %v784
    %3319 = vmatpush.bf16.msra.mxu0 %v782
    %3320 = vmatmul.bf16.gmra.mxu0 %v3176
    %v3321 = vpop.f32.mrf.mxu0
    %v3322 = vadd.f32 %v3309, %v3321
    %v3323 = vpop.f32.mrf.mxu0
    %3324 = vdwg.mxu0
    %3325 = vmatpush.bf16.msra.mxu0 %v812
    %3326 = vmatpush.bf16.msra.mxu0 %v810
    %3327 = vmatpush.bf16.msra.mxu0 %v808
    %3328 = vmatpush.bf16.msra.mxu0 %v806
    %3329 = vmatpush.bf16.msra.mxu0 %v804
    %3330 = vmatpush.bf16.msra.mxu0 %v802
    %3331 = vmatpush.bf16.msra.mxu0 %v800
    %3332 = vmatpush.bf16.msra.mxu0 %v798
    %3333 = vmatmul.bf16.gmra.mxu0 %v3177
    %v3334 = vpop.f32.mrf.mxu0
    %v3335 = vadd.f32 %v3322, %v3334
    %v3336 = vpop.f32.mrf.mxu0
    %3337 = vdwg.mxu0
    %3338 = vmatpush.bf16.msra.mxu0 %v828
    %3339 = vmatpush.bf16.msra.mxu0 %v826
    %3340 = vmatpush.bf16.msra.mxu0 %v824
    %3341 = vmatpush.bf16.msra.mxu0 %v822
    %3342 = vmatpush.bf16.msra.mxu0 %v820
    %3343 = vmatpush.bf16.msra.mxu0 %v818
    %3344 = vmatpush.bf16.msra.mxu0 %v816
    %3345 = vmatpush.bf16.msra.mxu0 %v814
    %3346 = vmatmul.bf16.gmra.mxu0 %v3178
    %v3347 = vpop.f32.mrf.mxu0
    %v3348 = vadd.f32 %v3335, %v3347
    %v3349 = vpop.f32.mrf.mxu0
    %3350 = vdwg.mxu0
    %3351 = vmatpush.bf16.msra.mxu0 %v844
    %3352 = vmatpush.bf16.msra.mxu0 %v842
    %3353 = vmatpush.bf16.msra.mxu0 %v840
    %3354 = vmatpush.bf16.msra.mxu0 %v838
    %3355 = vmatpush.bf16.msra.mxu0 %v836
    %3356 = vmatpush.bf16.msra.mxu0 %v834
    %3357 = vmatpush.bf16.msra.mxu0 %v832
    %3358 = vmatpush.bf16.msra.mxu0 %v830
    %3359 = vmatmul.bf16.gmra.mxu0 %v3179
    %v3360 = vpop.f32.mrf.mxu0
    %v3361 = vadd.f32 %v3348, %v3360
    %v3362 = vpop.f32.mrf.mxu0
    %3363 = vdwg.mxu0
    %3364 = vmatpush.bf16.msra.mxu0 %v860
    %3365 = vmatpush.bf16.msra.mxu0 %v858
    %3366 = vmatpush.bf16.msra.mxu0 %v856
    %3367 = vmatpush.bf16.msra.mxu0 %v854
    %3368 = vmatpush.bf16.msra.mxu0 %v852
    %3369 = vmatpush.bf16.msra.mxu0 %v850
    %3370 = vmatpush.bf16.msra.mxu0 %v848
    %3371 = vmatpush.bf16.msra.mxu0 %v846
    %3372 = vmatmul.bf16.gmra.mxu0 %v3180
    %v3373 = vpop.f32.mrf.mxu0
    %v3374 = vadd.f32 %v3361, %v3373
    %v3375 = vpop.f32.mrf.mxu0
    %3376 = vdwg.mxu0
    %3377 = vmatpush.bf16.msra.mxu0 %v876
    %3378 = vmatpush.bf16.msra.mxu0 %v874
    %3379 = vmatpush.bf16.msra.mxu0 %v872
    %3380 = vmatpush.bf16.msra.mxu0 %v870
    %3381 = vmatpush.bf16.msra.mxu0 %v868
    %3382 = vmatpush.bf16.msra.mxu0 %v866
    %3383 = vmatpush.bf16.msra.mxu0 %v864
    %3384 = vmatpush.bf16.msra.mxu0 %v862
    %3385 = vmatmul.bf16.gmra.mxu0 %v3181
    %v3386 = vpop.f32.mrf.mxu0
    %v3387 = vadd.f32 %v3374, %v3386
    %v3388 = vpop.f32.mrf.mxu0
    %3389 = vdwg.mxu0
    %v3392 = vrot.slane %v3283, 6
    %v3393 = vrot.slane %v3387, 6
    %v3396 = vadd.f32 %v2644, %v3392
    %v3397 = vadd.f32 %v2645, %v3393
    %3400 = vst.sshfl [vmem:[#allocation1] sm:$0xff pattern:$0x73625140] %v3396
    %3401 = vst.sshfl [vmem:[#allocation1 + $0x8] sm:$0xff pattern:$0x73625140] %v3397
    %s3402 = scalar_lea.vmem [#allocation1], 1
    %v3403 = vld [vmem:[%s3402] ss:$4 sm:$0xff]
    %s3405 = scalar_lea.vmem %s8, 8
    %3406 = vst [vmem:[%s3405] sm:$0xf] %v3403
    %3407 = vst [vmem:[#allocation1] sm:$0xff] %v3396
    %s3408 = scalar_lea.vmem [#allocation1], 2
    %v3409 = vld [vmem:[%s3408] ss:$9 sm:$0xff]
    %s3410 = scalar_lea.vmem [#allocation1], 3
    %v3411 = vld [vmem:[%s3410] ss:$9 sm:$0xff]
    %3414 = vst [vmem:[#allocation1] sm:$0xff] %v3396
    %s3415 = scalar_lea.vmem [#allocation1], 2
    %v3416 = vld [vmem:[%s3415] ss:$9 sm:$0xff]
    %s3417 = scalar_lea.vmem [#allocation1], 3
    %v3418 = vld [vmem:[%s3417] ss:$9 sm:$0xff]
    %3419 = vst [vmem:[#allocation1] sm:$0xff] %v3396
    %s3420 = scalar_lea.vmem [#allocation1], 2
    %v3421 = vld [vmem:[%s3420] ss:$9 sm:$0xff]
    %s3422 = scalar_lea.vmem [#allocation1], 3
    %v3423 = vld [vmem:[%s3422] ss:$9 sm:$0xff]
    %3424 = vst [vmem:[#allocation1] sm:$0xff] %v3396
    %s3425 = scalar_lea.vmem [#allocation1], 2
    %v3426 = vld [vmem:[%s3425] ss:$9 sm:$0xff]
    %s3427 = scalar_lea.vmem [#allocation1], 3
    %v3428 = vld [vmem:[%s3427] ss:$9 sm:$0xff]
    %3429 = vst [vmem:[#allocation1] sm:$0xff] %v3397
    %s3430 = scalar_lea.vmem [#allocation1], 2
    %v3431 = vld [vmem:[%s3430] ss:$9 sm:$0xff]
    %s3432 = scalar_lea.vmem [#allocation1], 3
    %v3433 = vld [vmem:[%s3432] ss:$9 sm:$0xff]
    %3434 = vst [vmem:[#allocation1] sm:$0xff] %v3397
    %s3435 = scalar_lea.vmem [#allocation1], 2
    %v3436 = vld [vmem:[%s3435] ss:$9 sm:$0xff]
    %s3437 = scalar_lea.vmem [#allocation1], 3
    %v3438 = vld [vmem:[%s3437] ss:$9 sm:$0xff]
    %3439 = vst [vmem:[#allocation1] sm:$0xff] %v3397
    %s3440 = scalar_lea.vmem [#allocation1], 2
    %v3441 = vld [vmem:[%s3440] ss:$9 sm:$0xff]
    %s3442 = scalar_lea.vmem [#allocation1], 3
    %v3443 = vld [vmem:[%s3442] ss:$9 sm:$0xff]
    %3444 = vst [vmem:[#allocation1] sm:$0xff] %v3397
    %s3445 = scalar_lea.vmem [#allocation1], 2
    %v3446 = vld [vmem:[%s3445] ss:$9 sm:$0xff]
    %s3447 = scalar_lea.vmem [#allocation1], 3
    %v3448 = vld [vmem:[%s3447] ss:$9 sm:$0xff]
    %v3449 = vperm.slane %v3416, 0
    %v3450 = vperm.slane %v3418, 0
    %3451 = vrot.lane.b32.xlu0 %v3449, 96
    %v3452 = vpop.permute.xlu0 %3451
    %3453 = vrot.lane.b32.xlu0 %v3450, 96
    %v3454 = vpop.permute.xlu0 %3453
    %v3457 = vperm.slane %v3421, 0
    %v3458 = vperm.slane %v3423, 0
    %3459 = vrot.lane.b32.xlu0 %v3457, 64
    %v3460 = vpop.permute.xlu0 %3459
    %3461 = vrot.lane.b32.xlu0 %v3458, 64
    %v3462 = vpop.permute.xlu0 %3461
    %v3465 = vperm.slane %v3426, 0
    %v3466 = vperm.slane %v3428, 0
    %3467 = vrot.lane.b32.xlu0 %v3465, 32
    %v3468 = vpop.permute.xlu0 %3467
    %3469 = vrot.lane.b32.xlu0 %v3466, 32
    %v3470 = vpop.permute.xlu0 %3469
    %v3473 = vperm.slane %v3431, 0
    %v3474 = vperm.slane %v3433, 0
    %v3477 = vperm.slane %v3436, 0
    %v3478 = vperm.slane %v3438, 0
    %3479 = vrot.lane.b32.xlu0 %v3477, 96
    %v3480 = vpop.permute.xlu0 %3479
    %3481 = vrot.lane.b32.xlu0 %v3478, 96
    %v3482 = vpop.permute.xlu0 %3481
    %v3485 = vperm.slane %v3441, 0
    %v3486 = vperm.slane %v3443, 0
    %3487 = vrot.lane.b32.xlu0 %v3485, 64
    %v3488 = vpop.permute.xlu0 %3487
    %3489 = vrot.lane.b32.xlu0 %v3486, 64
    %v3490 = vpop.permute.xlu0 %3489
    %v3493 = vperm.slane %v3446, 0
    %v3494 = vperm.slane %v3448, 0
    %3495 = vrot.lane.b32.xlu0 %v3493, 32
    %v3496 = vpop.permute.xlu0 %3495
    %3497 = vrot.lane.b32.xlu0 %v3494, 32
    %v3498 = vpop.permute.xlu0 %3497
    %v3501 = vsel %vm1322, %v3409, %v3452
    %v3502 = vsel %vm1322, %v3411, %v3454
    %v3503 = vsel %vm1325, %v3501, %v3460
    %v3504 = vsel %vm1325, %v3502, %v3462
    %v3505 = vsel %vm1328, %v3503, %v3468
    %v3506 = vsel %vm1328, %v3504, %v3470
    %v3507 = vsel %vm1331, %v3505, %v3473
    %v3508 = vsel %vm1331, %v3506, %v3474
    %v3509 = vsel %vm1334, %v3507, %v3480
    %v3510 = vsel %vm1334, %v3508, %v3482
    %v3511 = vsel %vm1337, %v3509, %v3488
    %v3512 = vsel %vm1337, %v3510, %v3490
    %v3513 = vsel %vm1340, %v3511, %v3496
    %v3514 = vsel %vm1340, %v3512, %v3498
    %v3516 = vsel %vm1343, %v3513, 0
    %3518 = vmatpush.xpose.msra.mxu0 0.0
    %3519 = vmatpush.xpose.msra.mxu0 0.0
    %3520 = vmatpush.xpose.msra.mxu0 0.0
    %3521 = vmatpush.xpose.msra.mxu0 0.0
    %3522 = vmatpush.xpose.msra.mxu0 0.0
    %3523 = vmatpush.xpose.msra.mxu0 0.0
    %3524 = vmatpush.xpose.msra.mxu0 0.0
    %3525 = vmatpush.xpose.msra.mxu0 0.0
    %3526 = vmatpush.xpose.msra.mxu0 0.0
    %3527 = vmatpush.xpose.msra.mxu0 0.0
    %3528 = vmatpush.xpose.msra.mxu0 0.0
    %3529 = vmatpush.xpose.msra.mxu0 0.0
    %3530 = vmatpush.xpose.msra.mxu0 0.0
    %3531 = vmatpush.xpose.msra.mxu0 0.0
    %3532 = vmatpush.xpose.msra.mxu0 0.0
    %3533 = vmatpush.xpose.msra.mxu0 %v1348
    %3534 = vmatmul.f32.gmra.mxu0 %v3516
    %v3535 = vpop.f32.mrf.mxu0
    %v3536 = vadd.f32 0.0, %v3535
    %3537 = vdwg.mxu0
    %v3539 = vsel %vm1343, %v3514, 0
    %3541 = vmatpush.xpose.msra.mxu0 0.0
    %3542 = vmatpush.xpose.msra.mxu0 0.0
    %3543 = vmatpush.xpose.msra.mxu0 0.0
    %3544 = vmatpush.xpose.msra.mxu0 0.0
    %3545 = vmatpush.xpose.msra.mxu0 0.0
    %3546 = vmatpush.xpose.msra.mxu0 0.0
    %3547 = vmatpush.xpose.msra.mxu0 0.0
    %3548 = vmatpush.xpose.msra.mxu0 0.0
    %3549 = vmatpush.xpose.msra.mxu0 0.0
    %3550 = vmatpush.xpose.msra.mxu0 0.0
    %3551 = vmatpush.xpose.msra.mxu0 0.0
    %3552 = vmatpush.xpose.msra.mxu0 0.0
    %3553 = vmatpush.xpose.msra.mxu0 0.0
    %3554 = vmatpush.xpose.msra.mxu0 0.0
    %3555 = vmatpush.xpose.msra.mxu0 0.0
    %3556 = vmatpush.xpose.msra.mxu0 %v1374
    %3557 = vmatmul.f32.gmra.mxu0 %v3539
    %v3558 = vpop.f32.mrf.mxu0
    %v3559 = vadd.f32 0.0, %v3558
    %3560 = vdwg.mxu0
    %v3561 = vmul.f32 %v3536, 0.17677669
    %v3562 = vmul.f32 %v3559, 0.17677669
    %v3563 = vsel %vm1398, %v3561, -inf
    %3564 = vmax.xlane.f32.xlu0 %v3563
    %v3565 = vpop.xlane.xlu0 %3564
    %v3566 = vsel %vm1398, %v3562, -inf
    %3567 = vmax.xlane.f32.xlu0 %v3566
    %v3568 = vpop.xlane.xlu0 %3567
    %v3569 = vsub.f32 %v3561, %v3565
    %v3570 = vsub.f32 %v3562, %v3568
    %v3571 = vmul.f32 %v3569, 1.442695
    %v3572 = vpow.pop %v3571
    %v3573 = vmul.f32 %v3570, 1.442695
    %v3574 = vpow.pop %v3573
    %v3575 = vsel %vm1398, %v3572, 0.0
    %3576 = vadd.xlane.f32.xlu0 %v3575
    %v3577 = vpop.xlane.xlu0 %3576
    %v3578 = vsel %vm1398, %v3574, 0.0
    %3579 = vadd.xlane.f32.xlu0 %v3578
    %v3580 = vpop.xlane.xlu0 %3579
    %v3581 = vrcp.pop %v3577
    %v3582 = vrcp.pop %v3580
    %v3583 = vmul.f32 %v3572, %v3581
    %v3584 = vmul.f32 %v3574, %v3582
    %v3586 = vsel %vm1398, %v3583, 0
    %3588 = vmatpush.msra.mxu0 0.0
    %3589 = vmatpush.msra.mxu0 0.0
    %3590 = vmatpush.msra.mxu0 0.0
    %3591 = vmatpush.msra.mxu0 0.0
    %3592 = vmatpush.msra.mxu0 0.0
    %3593 = vmatpush.msra.mxu0 0.0
    %3594 = vmatpush.msra.mxu0 0.0
    %3595 = vmatpush.msra.mxu0 0.0
    %3596 = vmatpush.msra.mxu0 0.0
    %3597 = vmatpush.msra.mxu0 0.0
    %3598 = vmatpush.msra.mxu0 0.0
    %3599 = vmatpush.msra.mxu0 0.0
    %3600 = vmatpush.msra.mxu0 0.0
    %3601 = vmatpush.msra.mxu0 0.0
    %3602 = vmatpush.msra.mxu0 0.0
    %3603 = vmatpush.msra.mxu0 %v319
    %3604 = vmatmul.f32.gmra.mxu0 %v3586
    %v3605 = vpop.f32.mrf.mxu0
    %v3606 = vadd.f32 0.0, %v3605
    %3607 = vdwg.mxu0
    %v3609 = vsel %vm1398, %v3584, 0
    %3611 = vmatpush.msra.mxu0 0.0
    %3612 = vmatpush.msra.mxu0 0.0
    %3613 = vmatpush.msra.mxu0 0.0
    %3614 = vmatpush.msra.mxu0 0.0
    %3615 = vmatpush.msra.mxu0 0.0
    %3616 = vmatpush.msra.mxu0 0.0
    %3617 = vmatpush.msra.mxu0 0.0
    %3618 = vmatpush.msra.mxu0 0.0
    %3619 = vmatpush.msra.mxu0 0.0
    %3620 = vmatpush.msra.mxu0 0.0
    %3621 = vmatpush.msra.mxu0 0.0
    %3622 = vmatpush.msra.mxu0 0.0
    %3623 = vmatpush.msra.mxu0 0.0
    %3624 = vmatpush.msra.mxu0 0.0
    %3625 = vmatpush.msra.mxu0 0.0
    %3626 = vmatpush.msra.mxu0 %v320
    %3627 = vmatmul.f32.gmra.mxu0 %v3609
    %v3628 = vpop.f32.mrf.mxu0
    %v3629 = vadd.f32 0.0, %v3628
    %3630 = vdwg.mxu0
    %v3633 = vrot.slane %v3629, 7
    %v3634 = vsel %vm1470, %v3633, %v3606
    %v3636 = vrot.slane %v3606, 1
    %v3637 = vsel %vm1470, %v3629, %v3636
    %3638 = vrot.lane.b32.xlu0 %v3637, 32
    %v3639 = vpop.permute.xlu0 %3638
    %v3641 = vrot.slane %v3606, 2
    %v3642 = vrot.slane %v3629, 1
    %v3643 = vsel %vm1470, %v3642, %v3641
    %3644 = vrot.lane.b32.xlu0 %v3643, 64
    %v3645 = vpop.permute.xlu0 %3644
    %v3647 = vrot.slane %v3606, 3
    %v3648 = vrot.slane %v3629, 2
    %v3649 = vsel %vm1470, %v3648, %v3647
    %3650 = vrot.lane.b32.xlu0 %v3649, 96
    %v3651 = vpop.permute.xlu0 %3650
    %v3653 = vrot.slane %v3606, 4
    %v3654 = vrot.slane %v3629, 3
    %v3655 = vsel %vm1470, %v3654, %v3653
    %v3657 = vrot.slane %v3606, 5
    %v3658 = vrot.slane %v3629, 4
    %v3659 = vsel %vm1470, %v3658, %v3657
    %3660 = vrot.lane.b32.xlu0 %v3659, 32
    %v3661 = vpop.permute.xlu0 %3660
    %v3663 = vrot.slane %v3606, 6
    %v3664 = vrot.slane %v3629, 5
    %v3665 = vsel %vm1470, %v3664, %v3663
    %3666 = vrot.lane.b32.xlu0 %v3665, 64
    %v3667 = vpop.permute.xlu0 %3666
    %v3669 = vrot.slane %v3606, 7
    %v3670 = vrot.slane %v3629, 6
    %v3671 = vsel %vm1470, %v3670, %v3669
    %3672 = vrot.lane.b32.xlu0 %v3671, 96
    %v3673 = vpop.permute.xlu0 %3672
    %v3675 = vsel %vm1343, %v3634, %v3639
    %v3676 = vsel %vm1513, %v3675, %v3645
    %v3677 = vsel %vm1515, %v3676, %v3651
    %v3678 = vsel %vm1343, %v3655, %v3661
    %v3679 = vsel %vm1513, %v3678, %v3667
    %v3680 = vsel %vm1515, %v3679, %v3673
    %v3681 = vadd.f32 %v3677, %v1218
    %v3682 = vadd.f32 %v3680, %v1219
    %v3683 = vpack.c.bf16 %v3681, %v3681
    %v3684 = vpack.c.bf16 %v3682, %v3682
    %3685 = vmatpush.bf16.msra.mxu0 %v1981
    %3686 = vmatpush.bf16.msra.mxu0 %v1973
    %3687 = vmatpush.bf16.msra.mxu0 %v1965
    %3688 = vmatpush.bf16.msra.mxu0 %v1957
    %3689 = vmatpush.bf16.msra.mxu0 %v1949
    %3690 = vmatpush.bf16.msra.mxu0 %v1941
    %3691 = vmatpush.bf16.msra.mxu0 %v1933
    %3692 = vmatpush.bf16.msra.mxu0 %v1925
    %3693 = vmatmul.bf16.gmra.mxu0 %v3683
    %v3694 = vpop.f32.mrf.mxu0
    %v3695 = vadd.f32 %v1525, %v3694
    %v3696 = vpop.f32.mrf.mxu0
    %3697 = vdwg.mxu0
    %3698 = vmatpush.bf16.msra.mxu0 %v2045
    %3699 = vmatpush.bf16.msra.mxu0 %v2037
    %3700 = vmatpush.bf16.msra.mxu0 %v2029
    %3701 = vmatpush.bf16.msra.mxu0 %v2021
    %3702 = vmatpush.bf16.msra.mxu0 %v2013
    %3703 = vmatpush.bf16.msra.mxu0 %v2005
    %3704 = vmatpush.bf16.msra.mxu0 %v1997
    %3705 = vmatpush.bf16.msra.mxu0 %v1989
    %3706 = vmatmul.bf16.gmra.mxu0 %v3684
    %v3707 = vpop.f32.mrf.mxu0
    %v3708 = vadd.f32 %v3695, %v3707
    %v3709 = vpop.f32.mrf.mxu0
    %3710 = vdwg.mxu0
    %3711 = vmatpush.bf16.msra.mxu0 %v1982
    %3712 = vmatpush.bf16.msra.mxu0 %v1974
    %3713 = vmatpush.bf16.msra.mxu0 %v1966
    %3714 = vmatpush.bf16.msra.mxu0 %v1958
    %3715 = vmatpush.bf16.msra.mxu0 %v1950
    %3716 = vmatpush.bf16.msra.mxu0 %v1942
    %3717 = vmatpush.bf16.msra.mxu0 %v1934
    %3718 = vmatpush.bf16.msra.mxu0 %v1926
    %3719 = vmatmul.bf16.gmra.mxu0 %v3683
    %v3720 = vpop.f32.mrf.mxu0
    %v3721 = vadd.f32 %v1526, %v3720
    %v3722 = vpop.f32.mrf.mxu0
    %3723 = vdwg.mxu0
    %3724 = vmatpush.bf16.msra.mxu0 %v2046
    %3725 = vmatpush.bf16.msra.mxu0 %v2038
    %3726 = vmatpush.bf16.msra.mxu0 %v2030
    %3727 = vmatpush.bf16.msra.mxu0 %v2022
    %3728 = vmatpush.bf16.msra.mxu0 %v2014
    %3729 = vmatpush.bf16.msra.mxu0 %v2006
    %3730 = vmatpush.bf16.msra.mxu0 %v1998
    %3731 = vmatpush.bf16.msra.mxu0 %v1990
    %3732 = vmatmul.bf16.gmra.mxu0 %v3684
    %v3733 = vpop.f32.mrf.mxu0
    %v3734 = vadd.f32 %v3721, %v3733
    %v3735 = vpop.f32.mrf.mxu0
    %3736 = vdwg.mxu0
    %3737 = vmatpush.bf16.msra.mxu0 %v1983
    %3738 = vmatpush.bf16.msra.mxu0 %v1975
    %3739 = vmatpush.bf16.msra.mxu0 %v1967
    %3740 = vmatpush.bf16.msra.mxu0 %v1959
    %3741 = vmatpush.bf16.msra.mxu0 %v1951
    %3742 = vmatpush.bf16.msra.mxu0 %v1943
    %3743 = vmatpush.bf16.msra.mxu0 %v1935
    %3744 = vmatpush.bf16.msra.mxu0 %v1927
    %3745 = vmatmul.bf16.gmra.mxu0 %v3683
    %v3746 = vpop.f32.mrf.mxu0
    %v3747 = vadd.f32 %v1527, %v3746
    %v3748 = vpop.f32.mrf.mxu0
    %3749 = vdwg.mxu0
    %3750 = vmatpush.bf16.msra.mxu0 %v2047
    %3751 = vmatpush.bf16.msra.mxu0 %v2039
    %3752 = vmatpush.bf16.msra.mxu0 %v2031
    %3753 = vmatpush.bf16.msra.mxu0 %v2023
    %3754 = vmatpush.bf16.msra.mxu0 %v2015
    %3755 = vmatpush.bf16.msra.mxu0 %v2007
    %3756 = vmatpush.bf16.msra.mxu0 %v1999
    %3757 = vmatpush.bf16.msra.mxu0 %v1991
    %3758 = vmatmul.bf16.gmra.mxu0 %v3684
    %v3759 = vpop.f32.mrf.mxu0
    %v3760 = vadd.f32 %v3747, %v3759
    %v3761 = vpop.f32.mrf.mxu0
    %3762 = vdwg.mxu0
    %3763 = vmatpush.bf16.msra.mxu0 %v1984
    %3764 = vmatpush.bf16.msra.mxu0 %v1976
    %3765 = vmatpush.bf16.msra.mxu0 %v1968
    %3766 = vmatpush.bf16.msra.mxu0 %v1960
    %3767 = vmatpush.bf16.msra.mxu0 %v1952
    %3768 = vmatpush.bf16.msra.mxu0 %v1944
    %3769 = vmatpush.bf16.msra.mxu0 %v1936
    %3770 = vmatpush.bf16.msra.mxu0 %v1928
    %3771 = vmatmul.bf16.gmra.mxu0 %v3683
    %v3772 = vpop.f32.mrf.mxu0
    %v3773 = vadd.f32 %v1528, %v3772
    %v3774 = vpop.f32.mrf.mxu0
    %3775 = vdwg.mxu0
    %3776 = vmatpush.bf16.msra.mxu0 %v2048
    %3777 = vmatpush.bf16.msra.mxu0 %v2040
    %3778 = vmatpush.bf16.msra.mxu0 %v2032
    %3779 = vmatpush.bf16.msra.mxu0 %v2024
    %3780 = vmatpush.bf16.msra.mxu0 %v2016
    %3781 = vmatpush.bf16.msra.mxu0 %v2008
    %3782 = vmatpush.bf16.msra.mxu0 %v2000
    %3783 = vmatpush.bf16.msra.mxu0 %v1992
    %3784 = vmatmul.bf16.gmra.mxu0 %v3684
    %v3785 = vpop.f32.mrf.mxu0
    %v3786 = vadd.f32 %v3773, %v3785
    %v3787 = vpop.f32.mrf.mxu0
    %3788 = vdwg.mxu0
    %3789 = vmatpush.bf16.msra.mxu0 %v1985
    %3790 = vmatpush.bf16.msra.mxu0 %v1977
    %3791 = vmatpush.bf16.msra.mxu0 %v1969
    %3792 = vmatpush.bf16.msra.mxu0 %v1961
    %3793 = vmatpush.bf16.msra.mxu0 %v1953
    %3794 = vmatpush.bf16.msra.mxu0 %v1945
    %3795 = vmatpush.bf16.msra.mxu0 %v1937
    %3796 = vmatpush.bf16.msra.mxu0 %v1929
    %3797 = vmatmul.bf16.gmra.mxu0 %v3683
    %v3798 = vpop.f32.mrf.mxu0
    %v3799 = vadd.f32 %v1529, %v3798
    %v3800 = vpop.f32.mrf.mxu0
    %3801 = vdwg.mxu0
    %3802 = vmatpush.bf16.msra.mxu0 %v2049
    %3803 = vmatpush.bf16.msra.mxu0 %v2041
    %3804 = vmatpush.bf16.msra.mxu0 %v2033
    %3805 = vmatpush.bf16.msra.mxu0 %v2025
    %3806 = vmatpush.bf16.msra.mxu0 %v2017
    %3807 = vmatpush.bf16.msra.mxu0 %v2009
    %3808 = vmatpush.bf16.msra.mxu0 %v2001
    %3809 = vmatpush.bf16.msra.mxu0 %v1993
    %3810 = vmatmul.bf16.gmra.mxu0 %v3684
    %v3811 = vpop.f32.mrf.mxu0
    %v3812 = vadd.f32 %v3799, %v3811
    %v3813 = vpop.f32.mrf.mxu0
    %3814 = vdwg.mxu0
    %3815 = vmatpush.bf16.msra.mxu0 %v1986
    %3816 = vmatpush.bf16.msra.mxu0 %v1978
    %3817 = vmatpush.bf16.msra.mxu0 %v1970
    %3818 = vmatpush.bf16.msra.mxu0 %v1962
    %3819 = vmatpush.bf16.msra.mxu0 %v1954
    %3820 = vmatpush.bf16.msra.mxu0 %v1946
    %3821 = vmatpush.bf16.msra.mxu0 %v1938
    %3822 = vmatpush.bf16.msra.mxu0 %v1930
    %3823 = vmatmul.bf16.gmra.mxu0 %v3683
    %v3824 = vpop.f32.mrf.mxu0
    %v3825 = vadd.f32 %v1530, %v3824
    %v3826 = vpop.f32.mrf.mxu0
    %3827 = vdwg.mxu0
    %3828 = vmatpush.bf16.msra.mxu0 %v2050
    %3829 = vmatpush.bf16.msra.mxu0 %v2042
    %3830 = vmatpush.bf16.msra.mxu0 %v2034
    %3831 = vmatpush.bf16.msra.mxu0 %v2026
    %3832 = vmatpush.bf16.msra.mxu0 %v2018
    %3833 = vmatpush.bf16.msra.mxu0 %v2010
    %3834 = vmatpush.bf16.msra.mxu0 %v2002
    %3835 = vmatpush.bf16.msra.mxu0 %v1994
    %3836 = vmatmul.bf16.gmra.mxu0 %v3684
    %v3837 = vpop.f32.mrf.mxu0
    %v3838 = vadd.f32 %v3825, %v3837
    %v3839 = vpop.f32.mrf.mxu0
    %3840 = vdwg.mxu0
    %3841 = vmatpush.bf16.msra.mxu0 %v1987
    %3842 = vmatpush.bf16.msra.mxu0 %v1979
    %3843 = vmatpush.bf16.msra.mxu0 %v1971
    %3844 = vmatpush.bf16.msra.mxu0 %v1963
    %3845 = vmatpush.bf16.msra.mxu0 %v1955
    %3846 = vmatpush.bf16.msra.mxu0 %v1947
    %3847 = vmatpush.bf16.msra.mxu0 %v1939
    %3848 = vmatpush.bf16.msra.mxu0 %v1931
    %3849 = vmatmul.bf16.gmra.mxu0 %v3683
    %v3850 = vpop.f32.mrf.mxu0
    %v3851 = vadd.f32 %v1531, %v3850
    %v3852 = vpop.f32.mrf.mxu0
    %3853 = vdwg.mxu0
    %3854 = vmatpush.bf16.msra.mxu0 %v2051
    %3855 = vmatpush.bf16.msra.mxu0 %v2043
    %3856 = vmatpush.bf16.msra.mxu0 %v2035
    %3857 = vmatpush.bf16.msra.mxu0 %v2027
    %3858 = vmatpush.bf16.msra.mxu0 %v2019
    %3859 = vmatpush.bf16.msra.mxu0 %v2011
    %3860 = vmatpush.bf16.msra.mxu0 %v2003
    %3861 = vmatpush.bf16.msra.mxu0 %v1995
    %3862 = vmatmul.bf16.gmra.mxu0 %v3684
    %v3863 = vpop.f32.mrf.mxu0
    %v3864 = vadd.f32 %v3851, %v3863
    %v3865 = vpop.f32.mrf.mxu0
    %3866 = vdwg.mxu0
    %3867 = vmatpush.bf16.msra.mxu0 %v1988
    %3868 = vmatpush.bf16.msra.mxu0 %v1980
    %3869 = vmatpush.bf16.msra.mxu0 %v1972
    %3870 = vmatpush.bf16.msra.mxu0 %v1964
    %3871 = vmatpush.bf16.msra.mxu0 %v1956
    %3872 = vmatpush.bf16.msra.mxu0 %v1948
    %3873 = vmatpush.bf16.msra.mxu0 %v1940
    %3874 = vmatpush.bf16.msra.mxu0 %v1932
    %3875 = vmatmul.bf16.gmra.mxu0 %v3683
    %v3876 = vpop.f32.mrf.mxu0
    %v3877 = vadd.f32 %v1532, %v3876
    %v3878 = vpop.f32.mrf.mxu0
    %3879 = vdwg.mxu0
    %3880 = vmatpush.bf16.msra.mxu0 %v2052
    %3881 = vmatpush.bf16.msra.mxu0 %v2044
    %3882 = vmatpush.bf16.msra.mxu0 %v2036
    %3883 = vmatpush.bf16.msra.mxu0 %v2028
    %3884 = vmatpush.bf16.msra.mxu0 %v2020
    %3885 = vmatpush.bf16.msra.mxu0 %v2012
    %3886 = vmatpush.bf16.msra.mxu0 %v2004
    %3887 = vmatpush.bf16.msra.mxu0 %v1996
    %3888 = vmatmul.bf16.gmra.mxu0 %v3684
    %v3889 = vpop.f32.mrf.mxu0
    %v3890 = vadd.f32 %v3877, %v3889
    %v3891 = vpop.f32.mrf.mxu0
    %3892 = vdwg.mxu0
    %v3893 = vtanh.pop %v3708
    %v3894 = vtanh.pop %v3734
    %v3895 = vtanh.pop %v3760
    %v3896 = vtanh.pop %v3786
    %v3897 = vtanh.pop %v3812
    %v3898 = vtanh.pop %v3838
    %v3899 = vtanh.pop %v3864
    %v3900 = vtanh.pop %v3890
    %v3909 = vrot.slane %v3894, 6
    %v3910 = vrot.slane %v3895, 4
    %v3911 = vrot.slane %v3896, 2
    %v3912 = vrot.slane %v3898, 6
    %v3913 = vrot.slane %v3899, 4
    %v3914 = vrot.slane %v3900, 2
    %v3915 = vsel %vm1325, %v3893, %v3909
    %v3916 = vsel %vm2412, %v3910, %v3911
    %v3917 = vsel %vm1331, %v3915, %v3916
    %v3918 = vsel %vm1325, %v3897, %v3912
    %v3919 = vsel %vm2412, %v3913, %v3914
    %v3920 = vsel %vm1331, %v3918, %v3919
    %s3923 = scalar_lea.vmem %s7, 32
    %3924 = vst [vmem:[%s3923] sm:$0xff] %v3917
    %3925 = vst [vmem:[%s3923 + $0x8] sm:$0xff] %v3920
    // Predicated region
    $region38: #{resetgan_forward.1} parent=1 // pred_check
      _
    $region39: #{resetgan_forward.1} parent=1 // pred_check_branch
      %3927 = sbr.rel (0) target = $region41
    $region40: #{resetgan_forward.1} parent=1 // pred_region
      _
    $region41: #{resetgan_forward.1} parent=1 // pred_fallthru
      _
    // Predicated region
    $region42: #{resetgan_forward.1} parent=1 // pred_check
      _
    $region43: #{resetgan_forward.1} parent=1 // pred_check_branch
      %3929 = sbr.rel (0) target = $region45
    $region44: #{resetgan_forward.1} parent=1 // pred_region
      _
    $region45: #{resetgan_forward.1} parent=1 // pred_fallthru
      _
    // Predicated region
    $region46: #{resetgan_forward.1} parent=1 // pred_check
      _
    $region47: #{resetgan_forward.1} parent=1 // pred_check_branch
      %3931 = sbr.rel (0) target = $region49
    $region48: #{resetgan_forward.1} parent=1 // pred_region
      _
    $region49: #{resetgan_forward.1} parent=1 // pred_fallthru
      _
    // Predicated region
    $region50: #{resetgan_forward.1} parent=1 // pred_check
      _
    $region51: #{resetgan_forward.1} parent=1 // pred_check_branch
      %3933 = sbr.rel (0) target = $region53
    $region52: #{resetgan_forward.1} parent=1 // pred_region
      _
    $region53: #{resetgan_forward.1} parent=1 // pred_fallthru
      _
    %3934 = vsyncpa [#allocation3], 1
    %3935 = vsyncpa [#allocation5], 1

</llo_original>
